<compile_context>
chip_gen: v7x
topology: tpu7x:2x2x1
jax: 0.10.0
libtpu: 0.0.40
codegen_flags: <defaults>
</compile_context>

<pallas_src>
import functools

import jax
import jax.numpy as jnp
from jax.experimental import pallas as pl
from jax.experimental.pallas import tpu as pltpu


def _embedding_kernel(w_ref, l_ref, r_ref, a_ref, o_ref, mflat_ref, *, feat, mxu_dtype):
    """One grid step = Bt batch elements.

    w_ref    : (F*F, Cp)  pre-normalized, flattened, zero-padded weights (constant block)
    l_ref    : (Bt, T, F) left representations
    r_ref    : (Bt, T, F) right representations
    a_ref    : (Bt, T, T) attention scores
    o_ref    : (Bt, Cp)   output scores
    mflat_ref: (Bt, F*F)  VMEM scratch holding M[b] = Ln[b]^T A[b] Rn[b], flattened
    """
    F = feat
    l = l_ref[...].astype(jnp.float32)
    r = r_ref[...].astype(jnp.float32)
    a = a_ref[...].astype(jnp.float32)

    # F.normalize(x, dim=-1, eps=1e-12) == x * rsqrt(max(sum(x*x), eps^2))
    # rsqrt runs in the (otherwise idle) EUP slot; clamp the sum-of-squares.
    ln = l * jax.lax.rsqrt(jnp.maximum(jnp.sum(l * l, axis=-1, keepdims=True), 1e-24))
    rn = r * jax.lax.rsqrt(jnp.maximum(jnp.sum(r * r, axis=-1, keepdims=True), 1e-24))

    # AR[b] = A[b] @ Rn[b]     -> (Bt, T, F)   (batched MXU matmul)
    ar = jnp.einsum(
        "btu,buf->btf",
        a.astype(mxu_dtype), rn.astype(mxu_dtype),
        preferred_element_type=jnp.float32,
    )
    # M[b] = Ln[b]^T @ AR[b]   -> (Bt, F, F)   (batched MXU matmul, contracts t)
    m = jnp.einsum(
        "btf,btg->bfg",
        ln.astype(mxu_dtype), ar.astype(mxu_dtype),
        preferred_element_type=jnp.float32,
    )

    # Flatten (Bt, F, F) -> (Bt, F*F) via static strip stores into VMEM scratch
    # (explicit, guaranteed-lowerable version of the lane-merging reshape).
    for f in range(F):
        mflat_ref[:, f * F:(f + 1) * F] = m[:, f, :].astype(mflat_ref.dtype)

    # scores = M_flat @ Wn_flat -> (Bt, Cp): one MXU matmul with K = F*F replaces a
    # VALU multiply + XLU cross-lane Frobenius reduction per channel.
    o_ref[...] = jnp.dot(
        mflat_ref[...], w_ref[...], preferred_element_type=jnp.float32
    ).astype(o_ref.dtype)


def custom_embedding_layer(weights, left, right, alpha, *, block_b=8,
                           mxu_dtype=jnp.float32):
    """weights: (C, F, F); left/right: (B, T, F); alpha: (B, T, T) -> (B, C).

    block_b should be a multiple of 8 (sublane-dense batch tile).
    mxu_dtype=jnp.bfloat16 enables the fast MXU path on v6e/v7x.
    """
    C, F, F2 = weights.shape
    assert F == F2
    B, T, _ = left.shape

    # ---- wrapper-side preprocessing (runs once, not per grid step) ----------
    # Normalize the weights once, flatten to (F*F, C) so the score reduction is a
    # single MXU matmul, and zero-pad C to a lane-dense width so the output store
    # is unmasked. For very large C*F*F (v7x: 64 MiB VMEM) use mxu_dtype=bfloat16
    # to halve the resident weight block.
    w = weights.astype(jnp.float32)
    wn = w * jax.lax.rsqrt(jnp.maximum(jnp.sum(w * w, axis=-1, keepdims=True), 1e-24))
    cp = max(128, ((C + 127) // 128) * 128)
    w_flat = jnp.pad(wn.reshape(C, F * F).T, ((0, 0), (0, cp - C))).astype(mxu_dtype)

    # Zero-pad the batch so every grid step handles a full sublane-dense block of
    # `block_b` elements (padded rows normalize to 0 and contribute 0 to scores).
    bt = block_b
    b_pad = ((B + bt - 1) // bt) * bt
    if b_pad != B:
        pad = ((0, b_pad - B), (0, 0), (0, 0))
        left = jnp.pad(left, pad)
        right = jnp.pad(right, pad)
        alpha = jnp.pad(alpha, pad)

    kernel = functools.partial(_embedding_kernel, feat=F, mxu_dtype=mxu_dtype)

    # Advisory hint so XLA schedules sensibly around the custom call.
    flops = 2 * b_pad * (T * T * F + T * F * F + F * F * cp)
    bytes_accessed = 4 * (F * F * cp + b_pad * (2 * T * F + T * T + cp))

    out = pl.pallas_call(
        kernel,
        out_shape=jax.ShapeDtypeStruct((b_pad, cp), jnp.float32),
        grid_spec=pltpu.PrefetchScalarGridSpec(
            num_scalar_prefetch=0,
            grid=(b_pad // bt,),
            in_specs=[
                pl.BlockSpec((F * F, cp), lambda i: (0, 0)),    # weights (shared block)
                pl.BlockSpec((bt, T, F), lambda i: (i, 0, 0)),  # left
                pl.BlockSpec((bt, T, F), lambda i: (i, 0, 0)),  # right
                pl.BlockSpec((bt, T, T), lambda i: (i, 0, 0)),  # alpha
            ],
            out_specs=pl.BlockSpec((bt, cp), lambda i: (i, 0)),
            scratch_shapes=[pltpu.VMEM((bt, F * F), mxu_dtype)],
        ),
        compiler_params=pltpu.CompilerParams(
            # Batch-block axis is independent -> lets v7x's 2 TensorCores split it.
            dimension_semantics=("parallel",),
        ),
        cost_estimate=pl.CostEstimate(
            flops=flops, transcendentals=0, bytes_accessed=bytes_accessed),
    )(w_flat, left, right, alpha)

    return out[:B, :C]


def _reference(weights, left, right, alpha):
    # pure-JAX reference mirroring the PyTorch forward literally
    def l2n(x):
        return x / jnp.maximum(jnp.linalg.norm(x, axis=-1, keepdims=True), 1e-12)

    wn = l2n(weights)                       # (C,F,F)
    ln = l2n(left)[:, None, :, :]           # (B,1,T,F)
    rn = l2n(right)[:, None, :, :]          # (B,1,T,F)
    rn_t = jnp.swapaxes(rn, -2, -1)         # (B,1,F,T)
    s = alpha[:, None, :, :] * jnp.matmul(jnp.matmul(ln, wn[None]), rn_t)
    return jnp.sum(s, axis=(-2, -1))        # (B,C)


if __name__ == "__main__":
    B, T, F, C = 2, 8, 32, 4

    key = jax.random.PRNGKey(0)
    kw, kl, kr, ka = jax.random.split(key, 4)

    # xavier_uniform_ for a (C, F, F) tensor: fan_in = F*F, fan_out = C*F
    fan_in, fan_out = F * F, C * F
    bound = (6.0 / (fan_in + fan_out)) ** 0.5
    weights = jax.random.uniform(kw, (C, F, F), jnp.float32, -bound, bound)

    left = jax.random.normal(kl, (B, T, F), jnp.float32)
    right = jax.random.normal(kr, (B, T, F), jnp.float32)
    alpha = jax.random.uniform(ka, (B, T, T), jnp.float32)

    ref = _reference(weights, left, right, alpha)

    # f32 MXU path (works on all generations)
    out = jax.block_until_ready(custom_embedding_layer(weights, left, right, alpha))
    assert out.shape == (B, C)
    assert jnp.allclose(out, ref, atol=1e-3, rtol=1e-3)

    # bf16 MXU feed (v6e/v7x fast path) — normalization stays f32, looser tolerance
    out_bf16 = jax.block_until_ready(
        custom_embedding_layer(weights, left, right, alpha, mxu_dtype=jnp.bfloat16)
    )
    assert out_bf16.shape == (B, C)
    assert jnp.allclose(out_bf16, ref, atol=3e-2, rtol=5e-2)

    print("KERNEL_OK")
</pallas_src>

<mosaic_0001>
module attributes {stable_mosaic.version = 11 : i64} {
  func.func @_embedding_kernel(%arg0: i32, %arg1: memref<1024x128xf32, #tpu.memory_space<vmem>>, %arg2: memref<8x8x32xf32, #tpu.memory_space<vmem>>, %arg3: memref<8x8x32xf32, #tpu.memory_space<vmem>>, %arg4: memref<8x8x8xf32, #tpu.memory_space<vmem>>, %arg5: memref<8x128xf32, #tpu.memory_space<vmem>>, %arg6: memref<8x1024xf32, #tpu.memory_space<vmem>>) attributes {dimension_semantics = [#tpu.dimension_semantics<parallel>], iteration_bounds = array<i64: 1>, scalar_prefetch = 0 : i64, scratch_operands = 1 : i64, tpu.core_type = #tpu.core_type<tc>, window_params = [{pipeline_mode = #tpu.pipeline_mode<synchronous>, transform_indices = @transform_0, window_bounds = array<i64: 1024, 128>}, {transform_indices = @transform_1, window_bounds = array<i64: 8, 8, 32>}, {transform_indices = @transform_2, window_bounds = array<i64: 8, 8, 32>}, {transform_indices = @transform_3, window_bounds = array<i64: 8, 8, 8>}, {transform_indices = @transform_4, window_bounds = array<i64: 8, 128>}]} {
    %c0 = arith.constant 0 : index
    %c0_0 = arith.constant 0 : index
    %c0_1 = arith.constant 0 : index
    %0 = vector.load %arg2[%c0, %c0_0, %c0_1] : memref<8x8x32xf32, #tpu.memory_space<vmem>>, vector<8x8x32xf32>
    %c0_2 = arith.constant 0 : index
    %c0_3 = arith.constant 0 : index
    %c0_4 = arith.constant 0 : index
    %1 = vector.load %arg3[%c0_2, %c0_3, %c0_4] : memref<8x8x32xf32, #tpu.memory_space<vmem>>, vector<8x8x32xf32>
    %c0_5 = arith.constant 0 : index
    %c0_6 = arith.constant 0 : index
    %c0_7 = arith.constant 0 : index
    %2 = vector.load %arg4[%c0_5, %c0_6, %c0_7] : memref<8x8x8xf32, #tpu.memory_space<vmem>>, vector<8x8x8xf32>
    %3 = arith.mulf %0, %0 : vector<8x8x32xf32>
    %cst = arith.constant dense<0.000000e+00> : vector<8x8xf32>
    %4 = vector.multi_reduction <add>, %3, %cst [2] : vector<8x8x32xf32> to vector<8x8xf32>
    %5 = vector.shape_cast %4 : vector<8x8xf32> to vector<8x8x1xf32>
    %cst_8 = arith.constant 1.000000e-24 : f32
    %6 = vector.broadcast %cst_8 : f32 to vector<8x8x1xf32>
    %7 = arith.maximumf %5, %6 : vector<8x8x1xf32>
    %8 = math.rsqrt %7 : vector<8x8x1xf32>
    %9 = vector.broadcast %8 : vector<8x8x1xf32> to vector<8x8x32xf32>
    %10 = arith.mulf %0, %9 : vector<8x8x32xf32>
    %11 = arith.mulf %1, %1 : vector<8x8x32xf32>
    %cst_9 = arith.constant dense<0.000000e+00> : vector<8x8xf32>
    %12 = vector.multi_reduction <add>, %11, %cst_9 [2] : vector<8x8x32xf32> to vector<8x8xf32>
    %13 = vector.shape_cast %12 : vector<8x8xf32> to vector<8x8x1xf32>
    %cst_10 = arith.constant 1.000000e-24 : f32
    %14 = vector.broadcast %cst_10 : f32 to vector<8x8x1xf32>
    %15 = arith.maximumf %13, %14 : vector<8x8x1xf32>
    %16 = math.rsqrt %15 : vector<8x8x1xf32>
    %17 = vector.broadcast %16 : vector<8x8x1xf32> to vector<8x8x32xf32>
    %18 = arith.mulf %1, %17 : vector<8x8x32xf32>
    "tpu.trace_start"() <{level = 10 : i32, message = "btu,buf->btf"}> : () -> ()
    %cst_11 = arith.constant dense<0.000000e+00> : vector<8x8x32xf32>
    %19 = tpu.matmul %2, %18, %cst_11 {dimension_numbers = #tpu.dot_dimension_numbers<[2], [1], [1], [2], [0, 0, 0, 1, 1, 2], [0], [0]>} : vector<8x8x8xf32>, vector<8x8x32xf32>, vector<8x8x32xf32> -> vector<8x8x32xf32>
    "tpu.trace_stop"() : () -> ()
    "tpu.trace_start"() <{level = 10 : i32, message = "btf,btg->bfg"}> : () -> ()
    %cst_12 = arith.constant dense<0.000000e+00> : vector<8x32x32xf32>
    %20 = tpu.matmul %10, %19, %cst_12 {dimension_numbers = #tpu.dot_dimension_numbers<[1], [1], [2], [2], [0, 0, 0, 2, 1, 2], [0], [0]>} : vector<8x8x32xf32>, vector<8x8x32xf32>, vector<8x32x32xf32> -> vector<8x32x32xf32>
    "tpu.trace_stop"() : () -> ()
    %21 = vector.extract_strided_slice %20 {offsets = [0, 0, 0], sizes = [8, 1, 32], strides = [1, 1, 1]} : vector<8x32x32xf32> to vector<8x1x32xf32>
    %22 = vector.shape_cast %21 : vector<8x1x32xf32> to vector<8x32xf32>
    %c0_13 = arith.constant 0 : index
    %c0_14 = arith.constant 0 : index
    %23 = vector.load %arg6[%c0_13, %c0_14] : memref<8x1024xf32, #tpu.memory_space<vmem>>, vector<8x32xf32>
    tpu.vector_store %arg6[%c0_13, %c0_14], %22 {strides = array<i32>} : memref<8x1024xf32, #tpu.memory_space<vmem>>, vector<8x32xf32>,
    %24 = vector.extract_strided_slice %20 {offsets = [0, 1, 0], sizes = [8, 1, 32], strides = [1, 1, 1]} : vector<8x32x32xf32> to vector<8x1x32xf32>
    %25 = vector.shape_cast %24 : vector<8x1x32xf32> to vector<8x32xf32>
    %c0_15 = arith.constant 0 : index
    %c32 = arith.constant 32 : index
    %26 = vector.load %arg6[%c0_15, %c32] : memref<8x1024xf32, #tpu.memory_space<vmem>>, vector<8x32xf32>
    tpu.vector_store %arg6[%c0_15, %c32], %25 {strides = array<i32>} : memref<8x1024xf32, #tpu.memory_space<vmem>>, vector<8x32xf32>,
    %27 = vector.extract_strided_slice %20 {offsets = [0, 2, 0], sizes = [8, 1, 32], strides = [1, 1, 1]} : vector<8x32x32xf32> to vector<8x1x32xf32>
    %28 = vector.shape_cast %27 : vector<8x1x32xf32> to vector<8x32xf32>
    %c0_16 = arith.constant 0 : index
    %c64 = arith.constant 64 : index
    %29 = vector.load %arg6[%c0_16, %c64] : memref<8x1024xf32, #tpu.memory_space<vmem>>, vector<8x32xf32>
    tpu.vector_store %arg6[%c0_16, %c64], %28 {strides = array<i32>} : memref<8x1024xf32, #tpu.memory_space<vmem>>, vector<8x32xf32>,
    %30 = vector.extract_strided_slice %20 {offsets = [0, 3, 0], sizes = [8, 1, 32], strides = [1, 1, 1]} : vector<8x32x32xf32> to vector<8x1x32xf32>
    %31 = vector.shape_cast %30 : vector<8x1x32xf32> to vector<8x32xf32>
    %c0_17 = arith.constant 0 : index
    %c96 = arith.constant 96 : index
    %32 = vector.load %arg6[%c0_17, %c96] : memref<8x1024xf32, #tpu.memory_space<vmem>>, vector<8x32xf32>
    tpu.vector_store %arg6[%c0_17, %c96], %31 {strides = array<i32>} : memref<8x1024xf32, #tpu.memory_space<vmem>>, vector<8x32xf32>,
    %33 = vector.extract_strided_slice %20 {offsets = [0, 4, 0], sizes = [8, 1, 32], strides = [1, 1, 1]} : vector<8x32x32xf32> to vector<8x1x32xf32>
    %34 = vector.shape_cast %33 : vector<8x1x32xf32> to vector<8x32xf32>
    %c0_18 = arith.constant 0 : index
    %c128 = arith.constant 128 : index
    %35 = vector.load %arg6[%c0_18, %c128] : memref<8x1024xf32, #tpu.memory_space<vmem>>, vector<8x32xf32>
    tpu.vector_store %arg6[%c0_18, %c128], %34 {strides = array<i32>} : memref<8x1024xf32, #tpu.memory_space<vmem>>, vector<8x32xf32>,
    %36 = vector.extract_strided_slice %20 {offsets = [0, 5, 0], sizes = [8, 1, 32], strides = [1, 1, 1]} : vector<8x32x32xf32> to vector<8x1x32xf32>
    %37 = vector.shape_cast %36 : vector<8x1x32xf32> to vector<8x32xf32>
    %c0_19 = arith.constant 0 : index
    %c160 = arith.constant 160 : index
    %38 = vector.load %arg6[%c0_19, %c160] : memref<8x1024xf32, #tpu.memory_space<vmem>>, vector<8x32xf32>
    tpu.vector_store %arg6[%c0_19, %c160], %37 {strides = array<i32>} : memref<8x1024xf32, #tpu.memory_space<vmem>>, vector<8x32xf32>,
    %39 = vector.extract_strided_slice %20 {offsets = [0, 6, 0], sizes = [8, 1, 32], strides = [1, 1, 1]} : vector<8x32x32xf32> to vector<8x1x32xf32>
    %40 = vector.shape_cast %39 : vector<8x1x32xf32> to vector<8x32xf32>
    %c0_20 = arith.constant 0 : index
    %c192 = arith.constant 192 : index
    %41 = vector.load %arg6[%c0_20, %c192] : memref<8x1024xf32, #tpu.memory_space<vmem>>, vector<8x32xf32>
    tpu.vector_store %arg6[%c0_20, %c192], %40 {strides = array<i32>} : memref<8x1024xf32, #tpu.memory_space<vmem>>, vector<8x32xf32>,
    %42 = vector.extract_strided_slice %20 {offsets = [0, 7, 0], sizes = [8, 1, 32], strides = [1, 1, 1]} : vector<8x32x32xf32> to vector<8x1x32xf32>
    %43 = vector.shape_cast %42 : vector<8x1x32xf32> to vector<8x32xf32>
    %c0_21 = arith.constant 0 : index
    %c224 = arith.constant 224 : index
    %44 = vector.load %arg6[%c0_21, %c224] : memref<8x1024xf32, #tpu.memory_space<vmem>>, vector<8x32xf32>
    tpu.vector_store %arg6[%c0_21, %c224], %43 {strides = array<i32>} : memref<8x1024xf32, #tpu.memory_space<vmem>>, vector<8x32xf32>,
    %45 = vector.extract_strided_slice %20 {offsets = [0, 8, 0], sizes = [8, 1, 32], strides = [1, 1, 1]} : vector<8x32x32xf32> to vector<8x1x32xf32>
    %46 = vector.shape_cast %45 : vector<8x1x32xf32> to vector<8x32xf32>
    %c0_22 = arith.constant 0 : index
    %c256 = arith.constant 256 : index
    %47 = vector.load %arg6[%c0_22, %c256] : memref<8x1024xf32, #tpu.memory_space<vmem>>, vector<8x32xf32>
    tpu.vector_store %arg6[%c0_22, %c256], %46 {strides = array<i32>} : memref<8x1024xf32, #tpu.memory_space<vmem>>, vector<8x32xf32>,
    %48 = vector.extract_strided_slice %20 {offsets = [0, 9, 0], sizes = [8, 1, 32], strides = [1, 1, 1]} : vector<8x32x32xf32> to vector<8x1x32xf32>
    %49 = vector.shape_cast %48 : vector<8x1x32xf32> to vector<8x32xf32>
    %c0_23 = arith.constant 0 : index
    %c288 = arith.constant 288 : index
    %50 = vector.load %arg6[%c0_23, %c288] : memref<8x1024xf32, #tpu.memory_space<vmem>>, vector<8x32xf32>
    tpu.vector_store %arg6[%c0_23, %c288], %49 {strides = array<i32>} : memref<8x1024xf32, #tpu.memory_space<vmem>>, vector<8x32xf32>,
    %51 = vector.extract_strided_slice %20 {offsets = [0, 10, 0], sizes = [8, 1, 32], strides = [1, 1, 1]} : vector<8x32x32xf32> to vector<8x1x32xf32>
    %52 = vector.shape_cast %51 : vector<8x1x32xf32> to vector<8x32xf32>
    %c0_24 = arith.constant 0 : index
    %c320 = arith.constant 320 : index
    %53 = vector.load %arg6[%c0_24, %c320] : memref<8x1024xf32, #tpu.memory_space<vmem>>, vector<8x32xf32>
    tpu.vector_store %arg6[%c0_24, %c320], %52 {strides = array<i32>} : memref<8x1024xf32, #tpu.memory_space<vmem>>, vector<8x32xf32>,
    %54 = vector.extract_strided_slice %20 {offsets = [0, 11, 0], sizes = [8, 1, 32], strides = [1, 1, 1]} : vector<8x32x32xf32> to vector<8x1x32xf32>
    %55 = vector.shape_cast %54 : vector<8x1x32xf32> to vector<8x32xf32>
    %c0_25 = arith.constant 0 : index
    %c352 = arith.constant 352 : index
    %56 = vector.load %arg6[%c0_25, %c352] : memref<8x1024xf32, #tpu.memory_space<vmem>>, vector<8x32xf32>
    tpu.vector_store %arg6[%c0_25, %c352], %55 {strides = array<i32>} : memref<8x1024xf32, #tpu.memory_space<vmem>>, vector<8x32xf32>,
    %57 = vector.extract_strided_slice %20 {offsets = [0, 12, 0], sizes = [8, 1, 32], strides = [1, 1, 1]} : vector<8x32x32xf32> to vector<8x1x32xf32>
    %58 = vector.shape_cast %57 : vector<8x1x32xf32> to vector<8x32xf32>
    %c0_26 = arith.constant 0 : index
    %c384 = arith.constant 384 : index
    %59 = vector.load %arg6[%c0_26, %c384] : memref<8x1024xf32, #tpu.memory_space<vmem>>, vector<8x32xf32>
    tpu.vector_store %arg6[%c0_26, %c384], %58 {strides = array<i32>} : memref<8x1024xf32, #tpu.memory_space<vmem>>, vector<8x32xf32>,
    %60 = vector.extract_strided_slice %20 {offsets = [0, 13, 0], sizes = [8, 1, 32], strides = [1, 1, 1]} : vector<8x32x32xf32> to vector<8x1x32xf32>
    %61 = vector.shape_cast %60 : vector<8x1x32xf32> to vector<8x32xf32>
    %c0_27 = arith.constant 0 : index
    %c416 = arith.constant 416 : index
    %62 = vector.load %arg6[%c0_27, %c416] : memref<8x1024xf32, #tpu.memory_space<vmem>>, vector<8x32xf32>
    tpu.vector_store %arg6[%c0_27, %c416], %61 {strides = array<i32>} : memref<8x1024xf32, #tpu.memory_space<vmem>>, vector<8x32xf32>,
    %63 = vector.extract_strided_slice %20 {offsets = [0, 14, 0], sizes = [8, 1, 32], strides = [1, 1, 1]} : vector<8x32x32xf32> to vector<8x1x32xf32>
    %64 = vector.shape_cast %63 : vector<8x1x32xf32> to vector<8x32xf32>
    %c0_28 = arith.constant 0 : index
    %c448 = arith.constant 448 : index
    %65 = vector.load %arg6[%c0_28, %c448] : memref<8x1024xf32, #tpu.memory_space<vmem>>, vector<8x32xf32>
    tpu.vector_store %arg6[%c0_28, %c448], %64 {strides = array<i32>} : memref<8x1024xf32, #tpu.memory_space<vmem>>, vector<8x32xf32>,
    %66 = vector.extract_strided_slice %20 {offsets = [0, 15, 0], sizes = [8, 1, 32], strides = [1, 1, 1]} : vector<8x32x32xf32> to vector<8x1x32xf32>
    %67 = vector.shape_cast %66 : vector<8x1x32xf32> to vector<8x32xf32>
    %c0_29 = arith.constant 0 : index
    %c480 = arith.constant 480 : index
    %68 = vector.load %arg6[%c0_29, %c480] : memref<8x1024xf32, #tpu.memory_space<vmem>>, vector<8x32xf32>
    tpu.vector_store %arg6[%c0_29, %c480], %67 {strides = array<i32>} : memref<8x1024xf32, #tpu.memory_space<vmem>>, vector<8x32xf32>,
    %69 = vector.extract_strided_slice %20 {offsets = [0, 16, 0], sizes = [8, 1, 32], strides = [1, 1, 1]} : vector<8x32x32xf32> to vector<8x1x32xf32>
    %70 = vector.shape_cast %69 : vector<8x1x32xf32> to vector<8x32xf32>
    %c0_30 = arith.constant 0 : index
    %c512 = arith.constant 512 : index
    %71 = vector.load %arg6[%c0_30, %c512] : memref<8x1024xf32, #tpu.memory_space<vmem>>, vector<8x32xf32>
    tpu.vector_store %arg6[%c0_30, %c512], %70 {strides = array<i32>} : memref<8x1024xf32, #tpu.memory_space<vmem>>, vector<8x32xf32>,
    %72 = vector.extract_strided_slice %20 {offsets = [0, 17, 0], sizes = [8, 1, 32], strides = [1, 1, 1]} : vector<8x32x32xf32> to vector<8x1x32xf32>
    %73 = vector.shape_cast %72 : vector<8x1x32xf32> to vector<8x32xf32>
    %c0_31 = arith.constant 0 : index
    %c544 = arith.constant 544 : index
    %74 = vector.load %arg6[%c0_31, %c544] : memref<8x1024xf32, #tpu.memory_space<vmem>>, vector<8x32xf32>
    tpu.vector_store %arg6[%c0_31, %c544], %73 {strides = array<i32>} : memref<8x1024xf32, #tpu.memory_space<vmem>>, vector<8x32xf32>,
    %75 = vector.extract_strided_slice %20 {offsets = [0, 18, 0], sizes = [8, 1, 32], strides = [1, 1, 1]} : vector<8x32x32xf32> to vector<8x1x32xf32>
    %76 = vector.shape_cast %75 : vector<8x1x32xf32> to vector<8x32xf32>
    %c0_32 = arith.constant 0 : index
    %c576 = arith.constant 576 : index
    %77 = vector.load %arg6[%c0_32, %c576] : memref<8x1024xf32, #tpu.memory_space<vmem>>, vector<8x32xf32>
    tpu.vector_store %arg6[%c0_32, %c576], %76 {strides = array<i32>} : memref<8x1024xf32, #tpu.memory_space<vmem>>, vector<8x32xf32>,
    %78 = vector.extract_strided_slice %20 {offsets = [0, 19, 0], sizes = [8, 1, 32], strides = [1, 1, 1]} : vector<8x32x32xf32> to vector<8x1x32xf32>
    %79 = vector.shape_cast %78 : vector<8x1x32xf32> to vector<8x32xf32>
    %c0_33 = arith.constant 0 : index
    %c608 = arith.constant 608 : index
    %80 = vector.load %arg6[%c0_33, %c608] : memref<8x1024xf32, #tpu.memory_space<vmem>>, vector<8x32xf32>
    tpu.vector_store %arg6[%c0_33, %c608], %79 {strides = array<i32>} : memref<8x1024xf32, #tpu.memory_space<vmem>>, vector<8x32xf32>,
    %81 = vector.extract_strided_slice %20 {offsets = [0, 20, 0], sizes = [8, 1, 32], strides = [1, 1, 1]} : vector<8x32x32xf32> to vector<8x1x32xf32>
    %82 = vector.shape_cast %81 : vector<8x1x32xf32> to vector<8x32xf32>
    %c0_34 = arith.constant 0 : index
    %c640 = arith.constant 640 : index
    %83 = vector.load %arg6[%c0_34, %c640] : memref<8x1024xf32, #tpu.memory_space<vmem>>, vector<8x32xf32>
    tpu.vector_store %arg6[%c0_34, %c640], %82 {strides = array<i32>} : memref<8x1024xf32, #tpu.memory_space<vmem>>, vector<8x32xf32>,
    %84 = vector.extract_strided_slice %20 {offsets = [0, 21, 0], sizes = [8, 1, 32], strides = [1, 1, 1]} : vector<8x32x32xf32> to vector<8x1x32xf32>
    %85 = vector.shape_cast %84 : vector<8x1x32xf32> to vector<8x32xf32>
    %c0_35 = arith.constant 0 : index
    %c672 = arith.constant 672 : index
    %86 = vector.load %arg6[%c0_35, %c672] : memref<8x1024xf32, #tpu.memory_space<vmem>>, vector<8x32xf32>
    tpu.vector_store %arg6[%c0_35, %c672], %85 {strides = array<i32>} : memref<8x1024xf32, #tpu.memory_space<vmem>>, vector<8x32xf32>,
    %87 = vector.extract_strided_slice %20 {offsets = [0, 22, 0], sizes = [8, 1, 32], strides = [1, 1, 1]} : vector<8x32x32xf32> to vector<8x1x32xf32>
    %88 = vector.shape_cast %87 : vector<8x1x32xf32> to vector<8x32xf32>
    %c0_36 = arith.constant 0 : index
    %c704 = arith.constant 704 : index
    %89 = vector.load %arg6[%c0_36, %c704] : memref<8x1024xf32, #tpu.memory_space<vmem>>, vector<8x32xf32>
    tpu.vector_store %arg6[%c0_36, %c704], %88 {strides = array<i32>} : memref<8x1024xf32, #tpu.memory_space<vmem>>, vector<8x32xf32>,
    %90 = vector.extract_strided_slice %20 {offsets = [0, 23, 0], sizes = [8, 1, 32], strides = [1, 1, 1]} : vector<8x32x32xf32> to vector<8x1x32xf32>
    %91 = vector.shape_cast %90 : vector<8x1x32xf32> to vector<8x32xf32>
    %c0_37 = arith.constant 0 : index
    %c736 = arith.constant 736 : index
    %92 = vector.load %arg6[%c0_37, %c736] : memref<8x1024xf32, #tpu.memory_space<vmem>>, vector<8x32xf32>
    tpu.vector_store %arg6[%c0_37, %c736], %91 {strides = array<i32>} : memref<8x1024xf32, #tpu.memory_space<vmem>>, vector<8x32xf32>,
    %93 = vector.extract_strided_slice %20 {offsets = [0, 24, 0], sizes = [8, 1, 32], strides = [1, 1, 1]} : vector<8x32x32xf32> to vector<8x1x32xf32>
    %94 = vector.shape_cast %93 : vector<8x1x32xf32> to vector<8x32xf32>
    %c0_38 = arith.constant 0 : index
    %c768 = arith.constant 768 : index
    %95 = vector.load %arg6[%c0_38, %c768] : memref<8x1024xf32, #tpu.memory_space<vmem>>, vector<8x32xf32>
    tpu.vector_store %arg6[%c0_38, %c768], %94 {strides = array<i32>} : memref<8x1024xf32, #tpu.memory_space<vmem>>, vector<8x32xf32>,
    %96 = vector.extract_strided_slice %20 {offsets = [0, 25, 0], sizes = [8, 1, 32], strides = [1, 1, 1]} : vector<8x32x32xf32> to vector<8x1x32xf32>
    %97 = vector.shape_cast %96 : vector<8x1x32xf32> to vector<8x32xf32>
    %c0_39 = arith.constant 0 : index
    %c800 = arith.constant 800 : index
    %98 = vector.load %arg6[%c0_39, %c800] : memref<8x1024xf32, #tpu.memory_space<vmem>>, vector<8x32xf32>
    tpu.vector_store %arg6[%c0_39, %c800], %97 {strides = array<i32>} : memref<8x1024xf32, #tpu.memory_space<vmem>>, vector<8x32xf32>,
    %99 = vector.extract_strided_slice %20 {offsets = [0, 26, 0], sizes = [8, 1, 32], strides = [1, 1, 1]} : vector<8x32x32xf32> to vector<8x1x32xf32>
    %100 = vector.shape_cast %99 : vector<8x1x32xf32> to vector<8x32xf32>
    %c0_40 = arith.constant 0 : index
    %c832 = arith.constant 832 : index
    %101 = vector.load %arg6[%c0_40, %c832] : memref<8x1024xf32, #tpu.memory_space<vmem>>, vector<8x32xf32>
    tpu.vector_store %arg6[%c0_40, %c832], %100 {strides = array<i32>} : memref<8x1024xf32, #tpu.memory_space<vmem>>, vector<8x32xf32>,
    %102 = vector.extract_strided_slice %20 {offsets = [0, 27, 0], sizes = [8, 1, 32], strides = [1, 1, 1]} : vector<8x32x32xf32> to vector<8x1x32xf32>
    %103 = vector.shape_cast %102 : vector<8x1x32xf32> to vector<8x32xf32>
    %c0_41 = arith.constant 0 : index
    %c864 = arith.constant 864 : index
    %104 = vector.load %arg6[%c0_41, %c864] : memref<8x1024xf32, #tpu.memory_space<vmem>>, vector<8x32xf32>
    tpu.vector_store %arg6[%c0_41, %c864], %103 {strides = array<i32>} : memref<8x1024xf32, #tpu.memory_space<vmem>>, vector<8x32xf32>,
    %105 = vector.extract_strided_slice %20 {offsets = [0, 28, 0], sizes = [8, 1, 32], strides = [1, 1, 1]} : vector<8x32x32xf32> to vector<8x1x32xf32>
    %106 = vector.shape_cast %105 : vector<8x1x32xf32> to vector<8x32xf32>
    %c0_42 = arith.constant 0 : index
    %c896 = arith.constant 896 : index
    %107 = vector.load %arg6[%c0_42, %c896] : memref<8x1024xf32, #tpu.memory_space<vmem>>, vector<8x32xf32>
    tpu.vector_store %arg6[%c0_42, %c896], %106 {strides = array<i32>} : memref<8x1024xf32, #tpu.memory_space<vmem>>, vector<8x32xf32>,
    %108 = vector.extract_strided_slice %20 {offsets = [0, 29, 0], sizes = [8, 1, 32], strides = [1, 1, 1]} : vector<8x32x32xf32> to vector<8x1x32xf32>
    %109 = vector.shape_cast %108 : vector<8x1x32xf32> to vector<8x32xf32>
    %c0_43 = arith.constant 0 : index
    %c928 = arith.constant 928 : index
    %110 = vector.load %arg6[%c0_43, %c928] : memref<8x1024xf32, #tpu.memory_space<vmem>>, vector<8x32xf32>
    tpu.vector_store %arg6[%c0_43, %c928], %109 {strides = array<i32>} : memref<8x1024xf32, #tpu.memory_space<vmem>>, vector<8x32xf32>,
    %111 = vector.extract_strided_slice %20 {offsets = [0, 30, 0], sizes = [8, 1, 32], strides = [1, 1, 1]} : vector<8x32x32xf32> to vector<8x1x32xf32>
    %112 = vector.shape_cast %111 : vector<8x1x32xf32> to vector<8x32xf32>
    %c0_44 = arith.constant 0 : index
    %c960 = arith.constant 960 : index
    %113 = vector.load %arg6[%c0_44, %c960] : memref<8x1024xf32, #tpu.memory_space<vmem>>, vector<8x32xf32>
    tpu.vector_store %arg6[%c0_44, %c960], %112 {strides = array<i32>} : memref<8x1024xf32, #tpu.memory_space<vmem>>, vector<8x32xf32>,
    %114 = vector.extract_strided_slice %20 {offsets = [0, 31, 0], sizes = [8, 1, 32], strides = [1, 1, 1]} : vector<8x32x32xf32> to vector<8x1x32xf32>
    %115 = vector.shape_cast %114 : vector<8x1x32xf32> to vector<8x32xf32>
    %c0_45 = arith.constant 0 : index
    %c992 = arith.constant 992 : index
    %116 = vector.load %arg6[%c0_45, %c992] : memref<8x1024xf32, #tpu.memory_space<vmem>>, vector<8x32xf32>
    tpu.vector_store %arg6[%c0_45, %c992], %115 {strides = array<i32>} : memref<8x1024xf32, #tpu.memory_space<vmem>>, vector<8x32xf32>,
    %c0_46 = arith.constant 0 : index
    %c0_47 = arith.constant 0 : index
    %117 = vector.load %arg6[%c0_46, %c0_47] : memref<8x1024xf32, #tpu.memory_space<vmem>>, vector<8x1024xf32>
    %c0_48 = arith.constant 0 : index
    %c0_49 = arith.constant 0 : index
    %118 = vector.load %arg1[%c0_48, %c0_49] : memref<1024x128xf32, #tpu.memory_space<vmem>>, vector<1024x128xf32>
    %cst_50 = arith.constant dense<0.000000e+00> : vector<8x128xf32>
    %119 = tpu.matmul %117, %118, %cst_50 {dimension_numbers = #tpu.dot_dimension_numbers<[1], [0], [0], [1], [0, 0, 1, 1], [], []>} : vector<8x1024xf32>, vector<1024x128xf32>, vector<8x128xf32> -> vector<8x128xf32>
    %c0_51 = arith.constant 0 : index
    %c0_52 = arith.constant 0 : index
    %120 = vector.load %arg5[%c0_51, %c0_52] : memref<8x128xf32, #tpu.memory_space<vmem>>, vector<8x128xf32>
    tpu.vector_store %arg5[%c0_51, %c0_52], %119 {strides = array<i32>} : memref<8x128xf32, #tpu.memory_space<vmem>>, vector<8x128xf32>,
    return
  }
  func.func @transform_0(%arg0: i32) -> (i32, i32) {
    %c0_i32 = arith.constant 0 : i32
    %c0_i32_0 = arith.constant 0 : i32
    %c0_i32_1 = arith.constant 0 : i32
    return %c0_i32, %c0_i32_0 : i32, i32
  }
  func.func @transform_1(%arg0: i32) -> (i32, i32, i32) {
    %c0_i32 = arith.constant 0 : i32
    %c0_i32_0 = arith.constant 0 : i32
    %c0_i32_1 = arith.constant 0 : i32
    return %arg0, %c0_i32, %c0_i32_0 : i32, i32, i32
  }
  func.func @transform_2(%arg0: i32) -> (i32, i32, i32) {
    %c0_i32 = arith.constant 0 : i32
    %c0_i32_0 = arith.constant 0 : i32
    %c0_i32_1 = arith.constant 0 : i32
    return %arg0, %c0_i32, %c0_i32_0 : i32, i32, i32
  }
  func.func @transform_3(%arg0: i32) -> (i32, i32, i32) {
    %c0_i32 = arith.constant 0 : i32
    %c0_i32_0 = arith.constant 0 : i32
    %c0_i32_1 = arith.constant 0 : i32
    return %arg0, %c0_i32, %c0_i32_0 : i32, i32, i32
  }
  func.func @transform_4(%arg0: i32) -> (i32, i32) {
    %c0_i32 = arith.constant 0 : i32
    %c0_i32_0 = arith.constant 0 : i32
    return %arg0, %c0_i32 : i32, i32
  }
}

</mosaic_0001>

<llo_original>
// kernel: tpu_custom_call.1
$region0: #{tpu_custom_call.1}
  #allocation0 [shape = 'u32[]', space=smem, size = 0x4, offset = 0x4, fixed_abs, tag = 'smem constant byte address 0x4 - core index']
  #allocation1 [shape = 'u32[144,128]{1,0:T(1,128)}', space=vmem, size = 0x12000, scoped, tag = 'internal scratch']
  #allocation2 [shape = 'f32[8,1024]{1,0:T(8,128)}', space=vmem, size = 0x8000, scoped, tag = 'scratch operand']
  %s0 = inlined_call_operand.hbm [shape: f32[1024,128], index: 0, kind: input, shape index: {}]
  %s1 = inlined_call_operand.hbm [shape: f32[8,8,32], index: 1, kind: input, shape index: {}]
  %s2 = inlined_call_operand.hbm [shape: f32[8,8,32], index: 2, kind: input, shape index: {}]
  %s3 = inlined_call_operand.hbm [shape: f32[8,8,8], index: 3, kind: input, shape index: {}]
  %s4 = inlined_call_operand.hbm [shape: f32[8,128], index: 4, kind: output, shape index: {}]
  %s5 = sld [smem:[#allocation0]]
  $region42: #{tpu_custom_call.1} parent=0
    _
  %s7 = ssub.s32 1, %s5
  %s8 = scalar_select 0, %s7, %s5
  $region1: #{tpu_custom_call.1} parent=0
    #allocation3 [shape = 'u8[524288]{0}', space=vmem, size = 0x80000, scoped, tag = 'input window, operand 0, single buffered']
    #allocation4 [shape = 's32[1]{0}', space=sflag, size = 0x4, scoped, tag = 'scoped memory for tpu_custom_call.1']
    #allocation5 [shape = 's32[1]{0}', space=sflag, size = 0x4, scoped, tag = 'scoped memory for tpu_custom_call.1']
    #allocation6 [shape = 'u8[32768]{0}', space=vmem, size = 0x8000, scoped, tag = 'input window, operand 1, single buffered']
    #allocation7 [shape = 's32[1]{0}', space=sflag, size = 0x4, scoped, tag = 'scoped memory for tpu_custom_call.1']
    #allocation8 [shape = 'u8[32768]{0}', space=vmem, size = 0x8000, scoped, tag = 'input window, operand 2, single buffered']
    #allocation9 [shape = 'u8[32768]{0}', space=vmem, size = 0x8000, scoped, tag = 'input window, operand 3, single buffered']
    #allocation10 [shape = 's32[1]{0}', space=sflag, size = 0x4, scoped, tag = 'scoped memory for tpu_custom_call.1']
    #allocation11 [shape = 'u8[4096]{0}', space=vmem, size = 0x1000, scoped, tag = 'output window, operand 0, single buffered']
    %9 = vsyncpa [#allocation4], 0
    %10 = vsyncpa [#allocation7], 0
    %11 = vsyncpa [#allocation10], 0
    %12 = vsyncpa [#allocation5], 0
    // Predicated region
    $region2: #{tpu_custom_call.1} parent=1 // pred_check
      _
    $region3: #{tpu_custom_call.1} parent=1 // pred_check_branch
      %14 = sbr.rel (0) target = $region5
    $region4: #{tpu_custom_call.1} parent=1 // pred_region
      %s16 = ssub.s32 16384, 16384
      %17 = vsyncadd [#allocation4], %s16
      %s18 = sshll.u32 [#allocation3], 4
      %s19 = int_to_ptr.vmem [resolvable:$true] %s18
      %24 = dma.hbm_to_vmem [thread:$0]  %s0, 16384, %s19, [#allocation4], 128, 128, 8
    $region5: #{tpu_custom_call.1} parent=1 // pred_fallthru
      _
    // Predicated region
    $region6: #{tpu_custom_call.1} parent=1 // pred_check
      _
    $region7: #{tpu_custom_call.1} parent=1 // pred_check_branch
      %26 = sbr.rel (0) target = $region9
    $region8: #{tpu_custom_call.1} parent=1 // pred_region
      %s28 = ssub.s32 1024, 1024
      %29 = vsyncadd [#allocation7], %s28
      %s30 = sshll.u32 [#allocation6], 4
      %s31 = int_to_ptr.vmem [resolvable:$true] %s30
      %36 = dma.hbm_to_vmem [thread:$0]  %s1, 1024, %s31, [#allocation7], 128, 128, 8
    $region9: #{tpu_custom_call.1} parent=1 // pred_fallthru
      _
    // Predicated region
    $region10: #{tpu_custom_call.1} parent=1 // pred_check
      _
    $region11: #{tpu_custom_call.1} parent=1 // pred_check_branch
      %38 = sbr.rel (0) target = $region13
    $region12: #{tpu_custom_call.1} parent=1 // pred_region
      %s40 = ssub.s32 1024, 1024
      %41 = vsyncadd [#allocation7], %s40
      %s42 = sshll.u32 [#allocation8], 4
      %s43 = int_to_ptr.vmem [resolvable:$true] %s42
      %48 = dma.hbm_to_vmem [thread:$0]  %s2, 1024, %s43, [#allocation7], 128, 128, 8
    $region13: #{tpu_custom_call.1} parent=1 // pred_fallthru
      _
    // Predicated region
    $region14: #{tpu_custom_call.1} parent=1 // pred_check
      _
    $region15: #{tpu_custom_call.1} parent=1 // pred_check_branch
      %50 = sbr.rel (0) target = $region17
    $region16: #{tpu_custom_call.1} parent=1 // pred_region
      %s52 = ssub.s32 1024, 1024
      %53 = vsyncadd [#allocation10], %s52
      %s54 = sshll.u32 [#allocation9], 4
      %s55 = int_to_ptr.vmem [resolvable:$true] %s54
      %60 = dma.hbm_to_vmem [thread:$0]  %s3, 1024, %s55, [#allocation10], 128, 128, 8
    $region17: #{tpu_custom_call.1} parent=1 // pred_fallthru
      _
    // Predicated region
    $region18: #{tpu_custom_call.1} parent=1 // pred_check
      _
    $region19: #{tpu_custom_call.1} parent=1 // pred_check_branch
      %62 = sbr.rel (0) target = $region21
    $region20: #{tpu_custom_call.1} parent=1 // pred_region
      %63 = dma.done [#allocation4], 16384
    $region21: #{tpu_custom_call.1} parent=1 // pred_fallthru
      _
    // Predicated region
    $region22: #{tpu_custom_call.1} parent=1 // pred_check
      _
    $region23: #{tpu_custom_call.1} parent=1 // pred_check_branch
      %65 = sbr.rel (0) target = $region25
    $region24: #{tpu_custom_call.1} parent=1 // pred_region
      %66 = dma.done [#allocation7], 1024
    $region25: #{tpu_custom_call.1} parent=1 // pred_fallthru
      _
    // Predicated region
    $region26: #{tpu_custom_call.1} parent=1 // pred_check
      _
    $region27: #{tpu_custom_call.1} parent=1 // pred_check_branch
      %68 = sbr.rel (0) target = $region29
    $region28: #{tpu_custom_call.1} parent=1 // pred_region
      %69 = dma.done [#allocation7], 1024
    $region29: #{tpu_custom_call.1} parent=1 // pred_fallthru
      _
    // Predicated region
    $region30: #{tpu_custom_call.1} parent=1 // pred_check
      _
    $region31: #{tpu_custom_call.1} parent=1 // pred_check_branch
      %71 = sbr.rel (0) target = $region33
    $region32: #{tpu_custom_call.1} parent=1 // pred_region
      %72 = dma.done [#allocation10], 1024
    $region33: #{tpu_custom_call.1} parent=1 // pred_fallthru
      _
    %v73 = vld [vmem:[#allocation6] sm:$0xff]
    %v74 = vld [vmem:[#allocation6 + $0x8] sm:$0xff]
    %v75 = vld [vmem:[#allocation6 + $0x10] sm:$0xff]
    %v76 = vld [vmem:[#allocation6 + $0x18] sm:$0xff]
    %v77 = vld [vmem:[#allocation6 + $0x20] sm:$0xff]
    %v78 = vld [vmem:[#allocation6 + $0x28] sm:$0xff]
    %v79 = vld [vmem:[#allocation6 + $0x30] sm:$0xff]
    %v80 = vld [vmem:[#allocation6 + $0x38] sm:$0xff]
    %v81 = vld [vmem:[#allocation8] sm:$0xff]
    %v82 = vld [vmem:[#allocation8 + $0x8] sm:$0xff]
    %v83 = vld [vmem:[#allocation8 + $0x10] sm:$0xff]
    %v84 = vld [vmem:[#allocation8 + $0x18] sm:$0xff]
    %v85 = vld [vmem:[#allocation8 + $0x20] sm:$0xff]
    %v86 = vld [vmem:[#allocation8 + $0x28] sm:$0xff]
    %v87 = vld [vmem:[#allocation8 + $0x30] sm:$0xff]
    %v88 = vld [vmem:[#allocation8 + $0x38] sm:$0xff]
    %v89 = vld [vmem:[#allocation9] sm:$0xff]
    %v90 = vld [vmem:[#allocation9 + $0x8] sm:$0xff]
    %v91 = vld [vmem:[#allocation9 + $0x10] sm:$0xff]
    %v92 = vld [vmem:[#allocation9 + $0x18] sm:$0xff]
    %v93 = vld [vmem:[#allocation9 + $0x20] sm:$0xff]
    %v94 = vld [vmem:[#allocation9 + $0x28] sm:$0xff]
    %v95 = vld [vmem:[#allocation9 + $0x30] sm:$0xff]
    %v96 = vld [vmem:[#allocation9 + $0x38] sm:$0xff]
    %v97 = vmul.f32 %v73, %v73
    %v98 = vmul.f32 %v74, %v74
    %v99 = vmul.f32 %v75, %v75
    %v100 = vmul.f32 %v76, %v76
    %v101 = vmul.f32 %v77, %v77
    %v102 = vmul.f32 %v78, %v78
    %v103 = vmul.f32 %v79, %v79
    %v104 = vmul.f32 %v80, %v80
    %vm105 = vcmask 261120
    %v106 = vsel %vm105, %v97, 0.0
    %107 = vadd.xlane.f32.xlu0 %v106
    %v108 = vpop.xlane.xlu0 %107
    %v109 = vsel %vm105, %v98, 0.0
    %110 = vadd.xlane.f32.xlu0 %v109
    %v111 = vpop.xlane.xlu0 %110
    %v112 = vsel %vm105, %v99, 0.0
    %113 = vadd.xlane.f32.xlu0 %v112
    %v114 = vpop.xlane.xlu0 %113
    %v115 = vsel %vm105, %v100, 0.0
    %116 = vadd.xlane.f32.xlu0 %v115
    %v117 = vpop.xlane.xlu0 %116
    %v118 = vsel %vm105, %v101, 0.0
    %119 = vadd.xlane.f32.xlu0 %v118
    %v120 = vpop.xlane.xlu0 %119
    %v121 = vsel %vm105, %v102, 0.0
    %122 = vadd.xlane.f32.xlu0 %v121
    %v123 = vpop.xlane.xlu0 %122
    %v124 = vsel %vm105, %v103, 0.0
    %125 = vadd.xlane.f32.xlu0 %v124
    %v126 = vpop.xlane.xlu0 %125
    %v127 = vsel %vm105, %v104, 0.0
    %128 = vadd.xlane.f32.xlu0 %v127
    %v129 = vpop.xlane.xlu0 %128
    %v130 = vmax.f32 %v108, 1e-24
    %v131 = vmax.f32 %v111, 1e-24
    %v132 = vmax.f32 %v114, 1e-24
    %v133 = vmax.f32 %v117, 1e-24
    %v134 = vmax.f32 %v120, 1e-24
    %v135 = vmax.f32 %v123, 1e-24
    %v136 = vmax.f32 %v126, 1e-24
    %v137 = vmax.f32 %v129, 1e-24
    %v138 = vrsqrt.pop %v130
    %v139 = vrsqrt.pop %v131
    %v140 = vrsqrt.pop %v132
    %v141 = vrsqrt.pop %v133
    %v142 = vrsqrt.pop %v134
    %v143 = vrsqrt.pop %v135
    %v144 = vrsqrt.pop %v136
    %v145 = vrsqrt.pop %v137
    %v146 = vmul.f32 %v73, %v138
    %v147 = vmul.f32 %v74, %v139
    %v148 = vmul.f32 %v75, %v140
    %v149 = vmul.f32 %v76, %v141
    %v150 = vmul.f32 %v77, %v142
    %v151 = vmul.f32 %v78, %v143
    %v152 = vmul.f32 %v79, %v144
    %v153 = vmul.f32 %v80, %v145
    %v154 = vmul.f32 %v81, %v81
    %v155 = vmul.f32 %v82, %v82
    %v156 = vmul.f32 %v83, %v83
    %v157 = vmul.f32 %v84, %v84
    %v158 = vmul.f32 %v85, %v85
    %v159 = vmul.f32 %v86, %v86
    %v160 = vmul.f32 %v87, %v87
    %v161 = vmul.f32 %v88, %v88
    %v162 = vsel %vm105, %v154, 0.0
    %163 = vadd.xlane.f32.xlu0 %v162
    %v164 = vpop.xlane.xlu0 %163
    %v165 = vsel %vm105, %v155, 0.0
    %166 = vadd.xlane.f32.xlu0 %v165
    %v167 = vpop.xlane.xlu0 %166
    %v168 = vsel %vm105, %v156, 0.0
    %169 = vadd.xlane.f32.xlu0 %v168
    %v170 = vpop.xlane.xlu0 %169
    %v171 = vsel %vm105, %v157, 0.0
    %172 = vadd.xlane.f32.xlu0 %v171
    %v173 = vpop.xlane.xlu0 %172
    %v174 = vsel %vm105, %v158, 0.0
    %175 = vadd.xlane.f32.xlu0 %v174
    %v176 = vpop.xlane.xlu0 %175
    %v177 = vsel %vm105, %v159, 0.0
    %178 = vadd.xlane.f32.xlu0 %v177
    %v179 = vpop.xlane.xlu0 %178
    %v180 = vsel %vm105, %v160, 0.0
    %181 = vadd.xlane.f32.xlu0 %v180
    %v182 = vpop.xlane.xlu0 %181
    %v183 = vsel %vm105, %v161, 0.0
    %184 = vadd.xlane.f32.xlu0 %v183
    %v185 = vpop.xlane.xlu0 %184
    %v186 = vmax.f32 %v164, 1e-24
    %v187 = vmax.f32 %v167, 1e-24
    %v188 = vmax.f32 %v170, 1e-24
    %v189 = vmax.f32 %v173, 1e-24
    %v190 = vmax.f32 %v176, 1e-24
    %v191 = vmax.f32 %v179, 1e-24
    %v192 = vmax.f32 %v182, 1e-24
    %v193 = vmax.f32 %v185, 1e-24
    %v194 = vrsqrt.pop %v186
    %v195 = vrsqrt.pop %v187
    %v196 = vrsqrt.pop %v188
    %v197 = vrsqrt.pop %v189
    %v198 = vrsqrt.pop %v190
    %v199 = vrsqrt.pop %v191
    %v200 = vrsqrt.pop %v192
    %v201 = vrsqrt.pop %v193
    %v202 = vmul.f32 %v81, %v194
    %v203 = vmul.f32 %v82, %v195
    %v204 = vmul.f32 %v83, %v196
    %v205 = vmul.f32 %v84, %v197
    %v206 = vmul.f32 %v85, %v198
    %v207 = vmul.f32 %v86, %v199
    %v208 = vmul.f32 %v87, %v200
    %v209 = vmul.f32 %v88, %v201
    %vm210 = vcmask 64512
    %v212 = vsel %vm210, %v89, 0
    %214 = vmatprep.subr.mxu0 0.0
    %215 = vmatpush1.msra.mxu0 %v202
    %216 = vmatprep.subr.mxu0 0.0
    %217 = vmatpush1.msra.mxu0 0.0
    %218 = vmatprep.subr.mxu0 0.0
    %219 = vmatpush1.msra.mxu0 0.0
    %220 = vmatprep.subr.mxu0 0.0
    %221 = vmatpush1.msra.mxu0 0.0
    %222 = vmatprep.subr.mxu0 0.0
    %223 = vmatpush1.msra.mxu0 0.0
    %224 = vmatprep.subr.mxu0 0.0
    %225 = vmatpush1.msra.mxu0 0.0
    %226 = vmatprep.subr.mxu0 0.0
    %227 = vmatpush1.msra.mxu0 0.0
    %228 = vmatprep.subr.mxu0 0.0
    %229 = vmatpush1.msra.mxu0 0.0
    %230 = vmatprep.subr.mxu0 0.0
    %231 = vmatpush1.msra.mxu0 0.0
    %232 = vmatprep.subr.mxu0 0.0
    %233 = vmatpush1.msra.mxu0 0.0
    %234 = vmatprep.subr.mxu0 0.0
    %235 = vmatpush1.msra.mxu0 0.0
    %236 = vmatprep.subr.mxu0 0.0
    %237 = vmatpush1.msra.mxu0 0.0
    %238 = vmatprep.subr.mxu0 0.0
    %239 = vmatpush1.msra.mxu0 0.0
    %240 = vmatprep.subr.mxu0 0.0
    %241 = vmatpush1.msra.mxu0 0.0
    %242 = vmatprep.subr.mxu0 0.0
    %243 = vmatpush1.msra.mxu0 0.0
    %244 = vmatprep.subr.mxu0 0.0
    %245 = vmatpush1.msra.mxu0 0.0
    %246 = vmatprep.subr.mxu0 0.0
    %247 = vmatpush1.msra.mxu0 0.0
    %248 = vmatprep.subr.mxu0 0.0
    %249 = vmatpush1.msra.mxu0 0.0
    %250 = vmatprep.subr.mxu0 0.0
    %251 = vmatpush1.msra.mxu0 0.0
    %252 = vmatprep.subr.mxu0 0.0
    %253 = vmatpush1.msra.mxu0 0.0
    %254 = vmatprep.subr.mxu0 0.0
    %255 = vmatpush1.msra.mxu0 0.0
    %256 = vmatprep.subr.mxu0 0.0
    %257 = vmatpush1.msra.mxu0 0.0
    %258 = vmatprep.subr.mxu0 0.0
    %259 = vmatpush1.msra.mxu0 0.0
    %260 = vmatprep.subr.mxu0 0.0
    %261 = vmatpush1.msra.mxu0 0.0
    %262 = vmatprep.subr.mxu0 0.0
    %263 = vmatpush1.msra.mxu0 0.0
    %264 = vmatprep.subr.mxu0 0.0
    %265 = vmatpush1.msra.mxu0 0.0
    %266 = vmatprep.subr.mxu0 0.0
    %267 = vmatpush1.msra.mxu0 0.0
    %268 = vmatprep.subr.mxu0 0.0
    %269 = vmatpush1.msra.mxu0 0.0
    %270 = vmatprep.subr.mxu0 0.0
    %271 = vmatpush1.msra.mxu0 0.0
    %272 = vmatprep.subr.mxu0 0.0
    %273 = vmatpush1.msra.mxu0 0.0
    %274 = vmatprep.subr.mxu0 0.0
    %275 = vmatpush1.msra.mxu0 0.0
    %276 = vmatprep.subr.mxu0 0.0
    %277 = vmatpush1.msra.mxu0 0.0
    %278 = vmatprep.mubr.f32.mxu0 0.0
    %279 = vmatmul.mubr.f32.gmra.mrb[0].mxu0 %v212
    %v280 = vpop.f32.mrb[0].mxu0
    %v281 = vadd.f32 0.0, %v280
    %v282 = vpop.f32.mrb[0].mxu0
    %283 = vdwg.mxu0
    %v285 = vsel %vm210, %v90, 0
    %287 = vmatprep.subr.mxu0 0.0
    %288 = vmatpush1.msra.mxu0 %v203
    %289 = vmatprep.subr.mxu0 0.0
    %290 = vmatpush1.msra.mxu0 0.0
    %291 = vmatprep.subr.mxu0 0.0
    %292 = vmatpush1.msra.mxu0 0.0
    %293 = vmatprep.subr.mxu0 0.0
    %294 = vmatpush1.msra.mxu0 0.0
    %295 = vmatprep.subr.mxu0 0.0
    %296 = vmatpush1.msra.mxu0 0.0
    %297 = vmatprep.subr.mxu0 0.0
    %298 = vmatpush1.msra.mxu0 0.0
    %299 = vmatprep.subr.mxu0 0.0
    %300 = vmatpush1.msra.mxu0 0.0
    %301 = vmatprep.subr.mxu0 0.0
    %302 = vmatpush1.msra.mxu0 0.0
    %303 = vmatprep.subr.mxu0 0.0
    %304 = vmatpush1.msra.mxu0 0.0
    %305 = vmatprep.subr.mxu0 0.0
    %306 = vmatpush1.msra.mxu0 0.0
    %307 = vmatprep.subr.mxu0 0.0
    %308 = vmatpush1.msra.mxu0 0.0
    %309 = vmatprep.subr.mxu0 0.0
    %310 = vmatpush1.msra.mxu0 0.0
    %311 = vmatprep.subr.mxu0 0.0
    %312 = vmatpush1.msra.mxu0 0.0
    %313 = vmatprep.subr.mxu0 0.0
    %314 = vmatpush1.msra.mxu0 0.0
    %315 = vmatprep.subr.mxu0 0.0
    %316 = vmatpush1.msra.mxu0 0.0
    %317 = vmatprep.subr.mxu0 0.0
    %318 = vmatpush1.msra.mxu0 0.0
    %319 = vmatprep.subr.mxu0 0.0
    %320 = vmatpush1.msra.mxu0 0.0
    %321 = vmatprep.subr.mxu0 0.0
    %322 = vmatpush1.msra.mxu0 0.0
    %323 = vmatprep.subr.mxu0 0.0
    %324 = vmatpush1.msra.mxu0 0.0
    %325 = vmatprep.subr.mxu0 0.0
    %326 = vmatpush1.msra.mxu0 0.0
    %327 = vmatprep.subr.mxu0 0.0
    %328 = vmatpush1.msra.mxu0 0.0
    %329 = vmatprep.subr.mxu0 0.0
    %330 = vmatpush1.msra.mxu0 0.0
    %331 = vmatprep.subr.mxu0 0.0
    %332 = vmatpush1.msra.mxu0 0.0
    %333 = vmatprep.subr.mxu0 0.0
    %334 = vmatpush1.msra.mxu0 0.0
    %335 = vmatprep.subr.mxu0 0.0
    %336 = vmatpush1.msra.mxu0 0.0
    %337 = vmatprep.subr.mxu0 0.0
    %338 = vmatpush1.msra.mxu0 0.0
    %339 = vmatprep.subr.mxu0 0.0
    %340 = vmatpush1.msra.mxu0 0.0
    %341 = vmatprep.subr.mxu0 0.0
    %342 = vmatpush1.msra.mxu0 0.0
    %343 = vmatprep.subr.mxu0 0.0
    %344 = vmatpush1.msra.mxu0 0.0
    %345 = vmatprep.subr.mxu0 0.0
    %346 = vmatpush1.msra.mxu0 0.0
    %347 = vmatprep.subr.mxu0 0.0
    %348 = vmatpush1.msra.mxu0 0.0
    %349 = vmatprep.subr.mxu0 0.0
    %350 = vmatpush1.msra.mxu0 0.0
    %351 = vmatprep.mubr.f32.mxu0 0.0
    %352 = vmatmul.mubr.f32.gmra.mrb[0].mxu0 %v285
    %v353 = vpop.f32.mrb[0].mxu0
    %v354 = vadd.f32 0.0, %v353
    %v355 = vpop.f32.mrb[0].mxu0
    %356 = vdwg.mxu0
    %v358 = vsel %vm210, %v91, 0
    %360 = vmatprep.subr.mxu0 0.0
    %361 = vmatpush1.msra.mxu0 %v204
    %362 = vmatprep.subr.mxu0 0.0
    %363 = vmatpush1.msra.mxu0 0.0
    %364 = vmatprep.subr.mxu0 0.0
    %365 = vmatpush1.msra.mxu0 0.0
    %366 = vmatprep.subr.mxu0 0.0
    %367 = vmatpush1.msra.mxu0 0.0
    %368 = vmatprep.subr.mxu0 0.0
    %369 = vmatpush1.msra.mxu0 0.0
    %370 = vmatprep.subr.mxu0 0.0
    %371 = vmatpush1.msra.mxu0 0.0
    %372 = vmatprep.subr.mxu0 0.0
    %373 = vmatpush1.msra.mxu0 0.0
    %374 = vmatprep.subr.mxu0 0.0
    %375 = vmatpush1.msra.mxu0 0.0
    %376 = vmatprep.subr.mxu0 0.0
    %377 = vmatpush1.msra.mxu0 0.0
    %378 = vmatprep.subr.mxu0 0.0
    %379 = vmatpush1.msra.mxu0 0.0
    %380 = vmatprep.subr.mxu0 0.0
    %381 = vmatpush1.msra.mxu0 0.0
    %382 = vmatprep.subr.mxu0 0.0
    %383 = vmatpush1.msra.mxu0 0.0
    %384 = vmatprep.subr.mxu0 0.0
    %385 = vmatpush1.msra.mxu0 0.0
    %386 = vmatprep.subr.mxu0 0.0
    %387 = vmatpush1.msra.mxu0 0.0
    %388 = vmatprep.subr.mxu0 0.0
    %389 = vmatpush1.msra.mxu0 0.0
    %390 = vmatprep.subr.mxu0 0.0
    %391 = vmatpush1.msra.mxu0 0.0
    %392 = vmatprep.subr.mxu0 0.0
    %393 = vmatpush1.msra.mxu0 0.0
    %394 = vmatprep.subr.mxu0 0.0
    %395 = vmatpush1.msra.mxu0 0.0
    %396 = vmatprep.subr.mxu0 0.0
    %397 = vmatpush1.msra.mxu0 0.0
    %398 = vmatprep.subr.mxu0 0.0
    %399 = vmatpush1.msra.mxu0 0.0
    %400 = vmatprep.subr.mxu0 0.0
    %401 = vmatpush1.msra.mxu0 0.0
    %402 = vmatprep.subr.mxu0 0.0
    %403 = vmatpush1.msra.mxu0 0.0
    %404 = vmatprep.subr.mxu0 0.0
    %405 = vmatpush1.msra.mxu0 0.0
    %406 = vmatprep.subr.mxu0 0.0
    %407 = vmatpush1.msra.mxu0 0.0
    %408 = vmatprep.subr.mxu0 0.0
    %409 = vmatpush1.msra.mxu0 0.0
    %410 = vmatprep.subr.mxu0 0.0
    %411 = vmatpush1.msra.mxu0 0.0
    %412 = vmatprep.subr.mxu0 0.0
    %413 = vmatpush1.msra.mxu0 0.0
    %414 = vmatprep.subr.mxu0 0.0
    %415 = vmatpush1.msra.mxu0 0.0
    %416 = vmatprep.subr.mxu0 0.0
    %417 = vmatpush1.msra.mxu0 0.0
    %418 = vmatprep.subr.mxu0 0.0
    %419 = vmatpush1.msra.mxu0 0.0
    %420 = vmatprep.subr.mxu0 0.0
    %421 = vmatpush1.msra.mxu0 0.0
    %422 = vmatprep.subr.mxu0 0.0
    %423 = vmatpush1.msra.mxu0 0.0
    %424 = vmatprep.mubr.f32.mxu0 0.0
    %425 = vmatmul.mubr.f32.gmra.mrb[0].mxu0 %v358
    %v426 = vpop.f32.mrb[0].mxu0
    %v427 = vadd.f32 0.0, %v426
    %v428 = vpop.f32.mrb[0].mxu0
    %429 = vdwg.mxu0
    %v431 = vsel %vm210, %v92, 0
    %433 = vmatprep.subr.mxu0 0.0
    %434 = vmatpush1.msra.mxu0 %v205
    %435 = vmatprep.subr.mxu0 0.0
    %436 = vmatpush1.msra.mxu0 0.0
    %437 = vmatprep.subr.mxu0 0.0
    %438 = vmatpush1.msra.mxu0 0.0
    %439 = vmatprep.subr.mxu0 0.0
    %440 = vmatpush1.msra.mxu0 0.0
    %441 = vmatprep.subr.mxu0 0.0
    %442 = vmatpush1.msra.mxu0 0.0
    %443 = vmatprep.subr.mxu0 0.0
    %444 = vmatpush1.msra.mxu0 0.0
    %445 = vmatprep.subr.mxu0 0.0
    %446 = vmatpush1.msra.mxu0 0.0
    %447 = vmatprep.subr.mxu0 0.0
    %448 = vmatpush1.msra.mxu0 0.0
    %449 = vmatprep.subr.mxu0 0.0
    %450 = vmatpush1.msra.mxu0 0.0
    %451 = vmatprep.subr.mxu0 0.0
    %452 = vmatpush1.msra.mxu0 0.0
    %453 = vmatprep.subr.mxu0 0.0
    %454 = vmatpush1.msra.mxu0 0.0
    %455 = vmatprep.subr.mxu0 0.0
    %456 = vmatpush1.msra.mxu0 0.0
    %457 = vmatprep.subr.mxu0 0.0
    %458 = vmatpush1.msra.mxu0 0.0
    %459 = vmatprep.subr.mxu0 0.0
    %460 = vmatpush1.msra.mxu0 0.0
    %461 = vmatprep.subr.mxu0 0.0
    %462 = vmatpush1.msra.mxu0 0.0
    %463 = vmatprep.subr.mxu0 0.0
    %464 = vmatpush1.msra.mxu0 0.0
    %465 = vmatprep.subr.mxu0 0.0
    %466 = vmatpush1.msra.mxu0 0.0
    %467 = vmatprep.subr.mxu0 0.0
    %468 = vmatpush1.msra.mxu0 0.0
    %469 = vmatprep.subr.mxu0 0.0
    %470 = vmatpush1.msra.mxu0 0.0
    %471 = vmatprep.subr.mxu0 0.0
    %472 = vmatpush1.msra.mxu0 0.0
    %473 = vmatprep.subr.mxu0 0.0
    %474 = vmatpush1.msra.mxu0 0.0
    %475 = vmatprep.subr.mxu0 0.0
    %476 = vmatpush1.msra.mxu0 0.0
    %477 = vmatprep.subr.mxu0 0.0
    %478 = vmatpush1.msra.mxu0 0.0
    %479 = vmatprep.subr.mxu0 0.0
    %480 = vmatpush1.msra.mxu0 0.0
    %481 = vmatprep.subr.mxu0 0.0
    %482 = vmatpush1.msra.mxu0 0.0
    %483 = vmatprep.subr.mxu0 0.0
    %484 = vmatpush1.msra.mxu0 0.0
    %485 = vmatprep.subr.mxu0 0.0
    %486 = vmatpush1.msra.mxu0 0.0
    %487 = vmatprep.subr.mxu0 0.0
    %488 = vmatpush1.msra.mxu0 0.0
    %489 = vmatprep.subr.mxu0 0.0
    %490 = vmatpush1.msra.mxu0 0.0
    %491 = vmatprep.subr.mxu0 0.0
    %492 = vmatpush1.msra.mxu0 0.0
    %493 = vmatprep.subr.mxu0 0.0
    %494 = vmatpush1.msra.mxu0 0.0
    %495 = vmatprep.subr.mxu0 0.0
    %496 = vmatpush1.msra.mxu0 0.0
    %497 = vmatprep.mubr.f32.mxu0 0.0
    %498 = vmatmul.mubr.f32.gmra.mrb[0].mxu0 %v431
    %v499 = vpop.f32.mrb[0].mxu0
    %v500 = vadd.f32 0.0, %v499
    %v501 = vpop.f32.mrb[0].mxu0
    %502 = vdwg.mxu0
    %v504 = vsel %vm210, %v93, 0
    %506 = vmatprep.subr.mxu0 0.0
    %507 = vmatpush1.msra.mxu0 %v206
    %508 = vmatprep.subr.mxu0 0.0
    %509 = vmatpush1.msra.mxu0 0.0
    %510 = vmatprep.subr.mxu0 0.0
    %511 = vmatpush1.msra.mxu0 0.0
    %512 = vmatprep.subr.mxu0 0.0
    %513 = vmatpush1.msra.mxu0 0.0
    %514 = vmatprep.subr.mxu0 0.0
    %515 = vmatpush1.msra.mxu0 0.0
    %516 = vmatprep.subr.mxu0 0.0
    %517 = vmatpush1.msra.mxu0 0.0
    %518 = vmatprep.subr.mxu0 0.0
    %519 = vmatpush1.msra.mxu0 0.0
    %520 = vmatprep.subr.mxu0 0.0
    %521 = vmatpush1.msra.mxu0 0.0
    %522 = vmatprep.subr.mxu0 0.0
    %523 = vmatpush1.msra.mxu0 0.0
    %524 = vmatprep.subr.mxu0 0.0
    %525 = vmatpush1.msra.mxu0 0.0
    %526 = vmatprep.subr.mxu0 0.0
    %527 = vmatpush1.msra.mxu0 0.0
    %528 = vmatprep.subr.mxu0 0.0
    %529 = vmatpush1.msra.mxu0 0.0
    %530 = vmatprep.subr.mxu0 0.0
    %531 = vmatpush1.msra.mxu0 0.0
    %532 = vmatprep.subr.mxu0 0.0
    %533 = vmatpush1.msra.mxu0 0.0
    %534 = vmatprep.subr.mxu0 0.0
    %535 = vmatpush1.msra.mxu0 0.0
    %536 = vmatprep.subr.mxu0 0.0
    %537 = vmatpush1.msra.mxu0 0.0
    %538 = vmatprep.subr.mxu0 0.0
    %539 = vmatpush1.msra.mxu0 0.0
    %540 = vmatprep.subr.mxu0 0.0
    %541 = vmatpush1.msra.mxu0 0.0
    %542 = vmatprep.subr.mxu0 0.0
    %543 = vmatpush1.msra.mxu0 0.0
    %544 = vmatprep.subr.mxu0 0.0
    %545 = vmatpush1.msra.mxu0 0.0
    %546 = vmatprep.subr.mxu0 0.0
    %547 = vmatpush1.msra.mxu0 0.0
    %548 = vmatprep.subr.mxu0 0.0
    %549 = vmatpush1.msra.mxu0 0.0
    %550 = vmatprep.subr.mxu0 0.0
    %551 = vmatpush1.msra.mxu0 0.0
    %552 = vmatprep.subr.mxu0 0.0
    %553 = vmatpush1.msra.mxu0 0.0
    %554 = vmatprep.subr.mxu0 0.0
    %555 = vmatpush1.msra.mxu0 0.0
    %556 = vmatprep.subr.mxu0 0.0
    %557 = vmatpush1.msra.mxu0 0.0
    %558 = vmatprep.subr.mxu0 0.0
    %559 = vmatpush1.msra.mxu0 0.0
    %560 = vmatprep.subr.mxu0 0.0
    %561 = vmatpush1.msra.mxu0 0.0
    %562 = vmatprep.subr.mxu0 0.0
    %563 = vmatpush1.msra.mxu0 0.0
    %564 = vmatprep.subr.mxu0 0.0
    %565 = vmatpush1.msra.mxu0 0.0
    %566 = vmatprep.subr.mxu0 0.0
    %567 = vmatpush1.msra.mxu0 0.0
    %568 = vmatprep.subr.mxu0 0.0
    %569 = vmatpush1.msra.mxu0 0.0
    %570 = vmatprep.mubr.f32.mxu0 0.0
    %571 = vmatmul.mubr.f32.gmra.mrb[0].mxu0 %v504
    %v572 = vpop.f32.mrb[0].mxu0
    %v573 = vadd.f32 0.0, %v572
    %v574 = vpop.f32.mrb[0].mxu0
    %575 = vdwg.mxu0
    %v577 = vsel %vm210, %v94, 0
    %579 = vmatprep.subr.mxu0 0.0
    %580 = vmatpush1.msra.mxu0 %v207
    %581 = vmatprep.subr.mxu0 0.0
    %582 = vmatpush1.msra.mxu0 0.0
    %583 = vmatprep.subr.mxu0 0.0
    %584 = vmatpush1.msra.mxu0 0.0
    %585 = vmatprep.subr.mxu0 0.0
    %586 = vmatpush1.msra.mxu0 0.0
    %587 = vmatprep.subr.mxu0 0.0
    %588 = vmatpush1.msra.mxu0 0.0
    %589 = vmatprep.subr.mxu0 0.0
    %590 = vmatpush1.msra.mxu0 0.0
    %591 = vmatprep.subr.mxu0 0.0
    %592 = vmatpush1.msra.mxu0 0.0
    %593 = vmatprep.subr.mxu0 0.0
    %594 = vmatpush1.msra.mxu0 0.0
    %595 = vmatprep.subr.mxu0 0.0
    %596 = vmatpush1.msra.mxu0 0.0
    %597 = vmatprep.subr.mxu0 0.0
    %598 = vmatpush1.msra.mxu0 0.0
    %599 = vmatprep.subr.mxu0 0.0
    %600 = vmatpush1.msra.mxu0 0.0
    %601 = vmatprep.subr.mxu0 0.0
    %602 = vmatpush1.msra.mxu0 0.0
    %603 = vmatprep.subr.mxu0 0.0
    %604 = vmatpush1.msra.mxu0 0.0
    %605 = vmatprep.subr.mxu0 0.0
    %606 = vmatpush1.msra.mxu0 0.0
    %607 = vmatprep.subr.mxu0 0.0
    %608 = vmatpush1.msra.mxu0 0.0
    %609 = vmatprep.subr.mxu0 0.0
    %610 = vmatpush1.msra.mxu0 0.0
    %611 = vmatprep.subr.mxu0 0.0
    %612 = vmatpush1.msra.mxu0 0.0
    %613 = vmatprep.subr.mxu0 0.0
    %614 = vmatpush1.msra.mxu0 0.0
    %615 = vmatprep.subr.mxu0 0.0
    %616 = vmatpush1.msra.mxu0 0.0
    %617 = vmatprep.subr.mxu0 0.0
    %618 = vmatpush1.msra.mxu0 0.0
    %619 = vmatprep.subr.mxu0 0.0
    %620 = vmatpush1.msra.mxu0 0.0
    %621 = vmatprep.subr.mxu0 0.0
    %622 = vmatpush1.msra.mxu0 0.0
    %623 = vmatprep.subr.mxu0 0.0
    %624 = vmatpush1.msra.mxu0 0.0
    %625 = vmatprep.subr.mxu0 0.0
    %626 = vmatpush1.msra.mxu0 0.0
    %627 = vmatprep.subr.mxu0 0.0
    %628 = vmatpush1.msra.mxu0 0.0
    %629 = vmatprep.subr.mxu0 0.0
    %630 = vmatpush1.msra.mxu0 0.0
    %631 = vmatprep.subr.mxu0 0.0
    %632 = vmatpush1.msra.mxu0 0.0
    %633 = vmatprep.subr.mxu0 0.0
    %634 = vmatpush1.msra.mxu0 0.0
    %635 = vmatprep.subr.mxu0 0.0
    %636 = vmatpush1.msra.mxu0 0.0
    %637 = vmatprep.subr.mxu0 0.0
    %638 = vmatpush1.msra.mxu0 0.0
    %639 = vmatprep.subr.mxu0 0.0
    %640 = vmatpush1.msra.mxu0 0.0
    %641 = vmatprep.subr.mxu0 0.0
    %642 = vmatpush1.msra.mxu0 0.0
    %643 = vmatprep.mubr.f32.mxu0 0.0
    %644 = vmatmul.mubr.f32.gmra.mrb[0].mxu0 %v577
    %v645 = vpop.f32.mrb[0].mxu0
    %v646 = vadd.f32 0.0, %v645
    %v647 = vpop.f32.mrb[0].mxu0
    %648 = vdwg.mxu0
    %v650 = vsel %vm210, %v95, 0
    %652 = vmatprep.subr.mxu0 0.0
    %653 = vmatpush1.msra.mxu0 %v208
    %654 = vmatprep.subr.mxu0 0.0
    %655 = vmatpush1.msra.mxu0 0.0
    %656 = vmatprep.subr.mxu0 0.0
    %657 = vmatpush1.msra.mxu0 0.0
    %658 = vmatprep.subr.mxu0 0.0
    %659 = vmatpush1.msra.mxu0 0.0
    %660 = vmatprep.subr.mxu0 0.0
    %661 = vmatpush1.msra.mxu0 0.0
    %662 = vmatprep.subr.mxu0 0.0
    %663 = vmatpush1.msra.mxu0 0.0
    %664 = vmatprep.subr.mxu0 0.0
    %665 = vmatpush1.msra.mxu0 0.0
    %666 = vmatprep.subr.mxu0 0.0
    %667 = vmatpush1.msra.mxu0 0.0
    %668 = vmatprep.subr.mxu0 0.0
    %669 = vmatpush1.msra.mxu0 0.0
    %670 = vmatprep.subr.mxu0 0.0
    %671 = vmatpush1.msra.mxu0 0.0
    %672 = vmatprep.subr.mxu0 0.0
    %673 = vmatpush1.msra.mxu0 0.0
    %674 = vmatprep.subr.mxu0 0.0
    %675 = vmatpush1.msra.mxu0 0.0
    %676 = vmatprep.subr.mxu0 0.0
    %677 = vmatpush1.msra.mxu0 0.0
    %678 = vmatprep.subr.mxu0 0.0
    %679 = vmatpush1.msra.mxu0 0.0
    %680 = vmatprep.subr.mxu0 0.0
    %681 = vmatpush1.msra.mxu0 0.0
    %682 = vmatprep.subr.mxu0 0.0
    %683 = vmatpush1.msra.mxu0 0.0
    %684 = vmatprep.subr.mxu0 0.0
    %685 = vmatpush1.msra.mxu0 0.0
    %686 = vmatprep.subr.mxu0 0.0
    %687 = vmatpush1.msra.mxu0 0.0
    %688 = vmatprep.subr.mxu0 0.0
    %689 = vmatpush1.msra.mxu0 0.0
    %690 = vmatprep.subr.mxu0 0.0
    %691 = vmatpush1.msra.mxu0 0.0
    %692 = vmatprep.subr.mxu0 0.0
    %693 = vmatpush1.msra.mxu0 0.0
    %694 = vmatprep.subr.mxu0 0.0
    %695 = vmatpush1.msra.mxu0 0.0
    %696 = vmatprep.subr.mxu0 0.0
    %697 = vmatpush1.msra.mxu0 0.0
    %698 = vmatprep.subr.mxu0 0.0
    %699 = vmatpush1.msra.mxu0 0.0
    %700 = vmatprep.subr.mxu0 0.0
    %701 = vmatpush1.msra.mxu0 0.0
    %702 = vmatprep.subr.mxu0 0.0
    %703 = vmatpush1.msra.mxu0 0.0
    %704 = vmatprep.subr.mxu0 0.0
    %705 = vmatpush1.msra.mxu0 0.0
    %706 = vmatprep.subr.mxu0 0.0
    %707 = vmatpush1.msra.mxu0 0.0
    %708 = vmatprep.subr.mxu0 0.0
    %709 = vmatpush1.msra.mxu0 0.0
    %710 = vmatprep.subr.mxu0 0.0
    %711 = vmatpush1.msra.mxu0 0.0
    %712 = vmatprep.subr.mxu0 0.0
    %713 = vmatpush1.msra.mxu0 0.0
    %714 = vmatprep.subr.mxu0 0.0
    %715 = vmatpush1.msra.mxu0 0.0
    %716 = vmatprep.mubr.f32.mxu0 0.0
    %717 = vmatmul.mubr.f32.gmra.mrb[0].mxu0 %v650
    %v718 = vpop.f32.mrb[0].mxu0
    %v719 = vadd.f32 0.0, %v718
    %v720 = vpop.f32.mrb[0].mxu0
    %721 = vdwg.mxu0
    %v723 = vsel %vm210, %v96, 0
    %725 = vmatprep.subr.mxu0 0.0
    %726 = vmatpush1.msra.mxu0 %v209
    %727 = vmatprep.subr.mxu0 0.0
    %728 = vmatpush1.msra.mxu0 0.0
    %729 = vmatprep.subr.mxu0 0.0
    %730 = vmatpush1.msra.mxu0 0.0
    %731 = vmatprep.subr.mxu0 0.0
    %732 = vmatpush1.msra.mxu0 0.0
    %733 = vmatprep.subr.mxu0 0.0
    %734 = vmatpush1.msra.mxu0 0.0
    %735 = vmatprep.subr.mxu0 0.0
    %736 = vmatpush1.msra.mxu0 0.0
    %737 = vmatprep.subr.mxu0 0.0
    %738 = vmatpush1.msra.mxu0 0.0
    %739 = vmatprep.subr.mxu0 0.0
    %740 = vmatpush1.msra.mxu0 0.0
    %741 = vmatprep.subr.mxu0 0.0
    %742 = vmatpush1.msra.mxu0 0.0
    %743 = vmatprep.subr.mxu0 0.0
    %744 = vmatpush1.msra.mxu0 0.0
    %745 = vmatprep.subr.mxu0 0.0
    %746 = vmatpush1.msra.mxu0 0.0
    %747 = vmatprep.subr.mxu0 0.0
    %748 = vmatpush1.msra.mxu0 0.0
    %749 = vmatprep.subr.mxu0 0.0
    %750 = vmatpush1.msra.mxu0 0.0
    %751 = vmatprep.subr.mxu0 0.0
    %752 = vmatpush1.msra.mxu0 0.0
    %753 = vmatprep.subr.mxu0 0.0
    %754 = vmatpush1.msra.mxu0 0.0
    %755 = vmatprep.subr.mxu0 0.0
    %756 = vmatpush1.msra.mxu0 0.0
    %757 = vmatprep.subr.mxu0 0.0
    %758 = vmatpush1.msra.mxu0 0.0
    %759 = vmatprep.subr.mxu0 0.0
    %760 = vmatpush1.msra.mxu0 0.0
    %761 = vmatprep.subr.mxu0 0.0
    %762 = vmatpush1.msra.mxu0 0.0
    %763 = vmatprep.subr.mxu0 0.0
    %764 = vmatpush1.msra.mxu0 0.0
    %765 = vmatprep.subr.mxu0 0.0
    %766 = vmatpush1.msra.mxu0 0.0
    %767 = vmatprep.subr.mxu0 0.0
    %768 = vmatpush1.msra.mxu0 0.0
    %769 = vmatprep.subr.mxu0 0.0
    %770 = vmatpush1.msra.mxu0 0.0
    %771 = vmatprep.subr.mxu0 0.0
    %772 = vmatpush1.msra.mxu0 0.0
    %773 = vmatprep.subr.mxu0 0.0
    %774 = vmatpush1.msra.mxu0 0.0
    %775 = vmatprep.subr.mxu0 0.0
    %776 = vmatpush1.msra.mxu0 0.0
    %777 = vmatprep.subr.mxu0 0.0
    %778 = vmatpush1.msra.mxu0 0.0
    %779 = vmatprep.subr.mxu0 0.0
    %780 = vmatpush1.msra.mxu0 0.0
    %781 = vmatprep.subr.mxu0 0.0
    %782 = vmatpush1.msra.mxu0 0.0
    %783 = vmatprep.subr.mxu0 0.0
    %784 = vmatpush1.msra.mxu0 0.0
    %785 = vmatprep.subr.mxu0 0.0
    %786 = vmatpush1.msra.mxu0 0.0
    %787 = vmatprep.subr.mxu0 0.0
    %788 = vmatpush1.msra.mxu0 0.0
    %789 = vmatprep.mubr.f32.mxu0 0.0
    %790 = vmatmul.mubr.f32.gmra.mrb[0].mxu0 %v723
    %v791 = vpop.f32.mrb[0].mxu0
    %v792 = vadd.f32 0.0, %v791
    %v793 = vpop.f32.mrb[0].mxu0
    %794 = vdwg.mxu0
    %795 = vxpose.xlu0.b32.start [1/16] %v146, 128
    %796 = vxpose.xlu0.b32.cont [2/16] 0.0, 128
    %797 = vxpose.xlu0.b32.cont [3/16] 0.0, 128
    %798 = vxpose.xlu0.b32.cont [4/16] 0.0, 128
    %799 = vxpose.xlu0.b32.cont [5/16] 0.0, 128
    %800 = vxpose.xlu0.b32.cont [6/16] 0.0, 128
    %801 = vxpose.xlu0.b32.cont [7/16] 0.0, 128
    %802 = vxpose.xlu0.b32.cont [8/16] 0.0, 128
    %803 = vxpose.xlu0.b32.cont [9/16] 0.0, 128
    %804 = vxpose.xlu0.b32.cont [10/16] 0.0, 128
    %805 = vxpose.xlu0.b32.cont [11/16] 0.0, 128
    %806 = vxpose.xlu0.b32.cont [12/16] 0.0, 128
    %807 = vxpose.xlu0.b32.cont [13/16] 0.0, 128
    %808 = vxpose.xlu0.b32.cont [14/16] 0.0, 128
    %809 = vxpose.xlu0.b32.cont [15/16] 0.0, 128
    %810 = vxpose.xlu0.b32.end [16/16] 0.0, 128
    %v811 = vpop.trf.xlu0
    %v812 = vpop.trf.xlu0
    %v813 = vpop.trf.xlu0
    %v814 = vpop.trf.xlu0
    %v815 = vpop.trf.xlu0
    %v816 = vpop.trf.xlu0
    %v817 = vpop.trf.xlu0
    %v818 = vpop.trf.xlu0
    %v819 = vpop.trf.xlu0
    %v820 = vpop.trf.xlu0
    %v821 = vpop.trf.xlu0
    %v822 = vpop.trf.xlu0
    %v823 = vpop.trf.xlu0
    %v824 = vpop.trf.xlu0
    %v825 = vpop.trf.xlu0
    %v826 = vpop.trf.xlu0
    %v828 = vsel %vm210, %v811, 0
    %v831 = vsel %vm210, %v812, 0
    %v834 = vsel %vm210, %v813, 0
    %v837 = vsel %vm210, %v814, 0
    %839 = vmatprep.subr.mxu0 0.0
    %840 = vmatpush1.msra.mxu0 %v281
    %841 = vmatprep.subr.mxu0 0.0
    %842 = vmatpush1.msra.mxu0 0.0
    %843 = vmatprep.subr.mxu0 0.0
    %844 = vmatpush1.msra.mxu0 0.0
    %845 = vmatprep.subr.mxu0 0.0
    %846 = vmatpush1.msra.mxu0 0.0
    %847 = vmatprep.subr.mxu0 0.0
    %848 = vmatpush1.msra.mxu0 0.0
    %849 = vmatprep.subr.mxu0 0.0
    %850 = vmatpush1.msra.mxu0 0.0
    %851 = vmatprep.subr.mxu0 0.0
    %852 = vmatpush1.msra.mxu0 0.0
    %853 = vmatprep.subr.mxu0 0.0
    %854 = vmatpush1.msra.mxu0 0.0
    %855 = vmatprep.subr.mxu0 0.0
    %856 = vmatpush1.msra.mxu0 0.0
    %857 = vmatprep.subr.mxu0 0.0
    %858 = vmatpush1.msra.mxu0 0.0
    %859 = vmatprep.subr.mxu0 0.0
    %860 = vmatpush1.msra.mxu0 0.0
    %861 = vmatprep.subr.mxu0 0.0
    %862 = vmatpush1.msra.mxu0 0.0
    %863 = vmatprep.subr.mxu0 0.0
    %864 = vmatpush1.msra.mxu0 0.0
    %865 = vmatprep.subr.mxu0 0.0
    %866 = vmatpush1.msra.mxu0 0.0
    %867 = vmatprep.subr.mxu0 0.0
    %868 = vmatpush1.msra.mxu0 0.0
    %869 = vmatprep.subr.mxu0 0.0
    %870 = vmatpush1.msra.mxu0 0.0
    %871 = vmatprep.subr.mxu0 0.0
    %872 = vmatpush1.msra.mxu0 0.0
    %873 = vmatprep.subr.mxu0 0.0
    %874 = vmatpush1.msra.mxu0 0.0
    %875 = vmatprep.subr.mxu0 0.0
    %876 = vmatpush1.msra.mxu0 0.0
    %877 = vmatprep.subr.mxu0 0.0
    %878 = vmatpush1.msra.mxu0 0.0
    %879 = vmatprep.subr.mxu0 0.0
    %880 = vmatpush1.msra.mxu0 0.0
    %881 = vmatprep.subr.mxu0 0.0
    %882 = vmatpush1.msra.mxu0 0.0
    %883 = vmatprep.subr.mxu0 0.0
    %884 = vmatpush1.msra.mxu0 0.0
    %885 = vmatprep.subr.mxu0 0.0
    %886 = vmatpush1.msra.mxu0 0.0
    %887 = vmatprep.subr.mxu0 0.0
    %888 = vmatpush1.msra.mxu0 0.0
    %889 = vmatprep.subr.mxu0 0.0
    %890 = vmatpush1.msra.mxu0 0.0
    %891 = vmatprep.subr.mxu0 0.0
    %892 = vmatpush1.msra.mxu0 0.0
    %893 = vmatprep.subr.mxu0 0.0
    %894 = vmatpush1.msra.mxu0 0.0
    %895 = vmatprep.subr.mxu0 0.0
    %896 = vmatpush1.msra.mxu0 0.0
    %897 = vmatprep.subr.mxu0 0.0
    %898 = vmatpush1.msra.mxu0 0.0
    %899 = vmatprep.subr.mxu0 0.0
    %900 = vmatpush1.msra.mxu0 0.0
    %901 = vmatprep.subr.mxu0 0.0
    %902 = vmatpush1.msra.mxu0 0.0
    %903 = vmatprep.mubr.f32.mxu0 0.0
    %904 = vmatmul.mubr.f32.gmra.mrb[0].mxu0 %v828
    %v905 = vpop.f32.mrb[0].mxu0
    %v906 = vadd.f32 0.0, %v905
    %v907 = vpop.f32.mrb[0].mxu0
    %908 = vmatprep.mubr.f32.mxu0 0.0
    %909 = vmatmul.mubr.f32.gmra.mrb[0].mxu0 %v831
    %v910 = vpop.f32.mrb[0].mxu0
    %v911 = vadd.f32 0.0, %v910
    %v912 = vpop.f32.mrb[0].mxu0
    %913 = vmatprep.mubr.f32.mxu0 0.0
    %914 = vmatmul.mubr.f32.gmra.mrb[0].mxu0 %v834
    %v915 = vpop.f32.mrb[0].mxu0
    %v916 = vadd.f32 0.0, %v915
    %v917 = vpop.f32.mrb[0].mxu0
    %918 = vmatprep.mubr.f32.mxu0 0.0
    %919 = vmatmul.mubr.f32.gmra.mrb[0].mxu0 %v837
    %v920 = vpop.f32.mrb[0].mxu0
    %v921 = vadd.f32 0.0, %v920
    %v922 = vpop.f32.mrb[0].mxu0
    %923 = vdwg.mxu0
    %924 = vxpose.xlu0.b32.start [1/16] %v147, 128
    %925 = vxpose.xlu0.b32.cont [2/16] 0.0, 128
    %926 = vxpose.xlu0.b32.cont [3/16] 0.0, 128
    %927 = vxpose.xlu0.b32.cont [4/16] 0.0, 128
    %928 = vxpose.xlu0.b32.cont [5/16] 0.0, 128
    %929 = vxpose.xlu0.b32.cont [6/16] 0.0, 128
    %930 = vxpose.xlu0.b32.cont [7/16] 0.0, 128
    %931 = vxpose.xlu0.b32.cont [8/16] 0.0, 128
    %932 = vxpose.xlu0.b32.cont [9/16] 0.0, 128
    %933 = vxpose.xlu0.b32.cont [10/16] 0.0, 128
    %934 = vxpose.xlu0.b32.cont [11/16] 0.0, 128
    %935 = vxpose.xlu0.b32.cont [12/16] 0.0, 128
    %936 = vxpose.xlu0.b32.cont [13/16] 0.0, 128
    %937 = vxpose.xlu0.b32.cont [14/16] 0.0, 128
    %938 = vxpose.xlu0.b32.cont [15/16] 0.0, 128
    %939 = vxpose.xlu0.b32.end [16/16] 0.0, 128
    %v940 = vpop.trf.xlu0
    %v941 = vpop.trf.xlu0
    %v942 = vpop.trf.xlu0
    %v943 = vpop.trf.xlu0
    %v944 = vpop.trf.xlu0
    %v945 = vpop.trf.xlu0
    %v946 = vpop.trf.xlu0
    %v947 = vpop.trf.xlu0
    %v948 = vpop.trf.xlu0
    %v949 = vpop.trf.xlu0
    %v950 = vpop.trf.xlu0
    %v951 = vpop.trf.xlu0
    %v952 = vpop.trf.xlu0
    %v953 = vpop.trf.xlu0
    %v954 = vpop.trf.xlu0
    %v955 = vpop.trf.xlu0
    %v957 = vsel %vm210, %v940, 0
    %v960 = vsel %vm210, %v941, 0
    %v963 = vsel %vm210, %v942, 0
    %v966 = vsel %vm210, %v943, 0
    %968 = vmatprep.subr.mxu0 0.0
    %969 = vmatpush1.msra.mxu0 %v354
    %970 = vmatprep.subr.mxu0 0.0
    %971 = vmatpush1.msra.mxu0 0.0
    %972 = vmatprep.subr.mxu0 0.0
    %973 = vmatpush1.msra.mxu0 0.0
    %974 = vmatprep.subr.mxu0 0.0
    %975 = vmatpush1.msra.mxu0 0.0
    %976 = vmatprep.subr.mxu0 0.0
    %977 = vmatpush1.msra.mxu0 0.0
    %978 = vmatprep.subr.mxu0 0.0
    %979 = vmatpush1.msra.mxu0 0.0
    %980 = vmatprep.subr.mxu0 0.0
    %981 = vmatpush1.msra.mxu0 0.0
    %982 = vmatprep.subr.mxu0 0.0
    %983 = vmatpush1.msra.mxu0 0.0
    %984 = vmatprep.subr.mxu0 0.0
    %985 = vmatpush1.msra.mxu0 0.0
    %986 = vmatprep.subr.mxu0 0.0
    %987 = vmatpush1.msra.mxu0 0.0
    %988 = vmatprep.subr.mxu0 0.0
    %989 = vmatpush1.msra.mxu0 0.0
    %990 = vmatprep.subr.mxu0 0.0
    %991 = vmatpush1.msra.mxu0 0.0
    %992 = vmatprep.subr.mxu0 0.0
    %993 = vmatpush1.msra.mxu0 0.0
    %994 = vmatprep.subr.mxu0 0.0
    %995 = vmatpush1.msra.mxu0 0.0
    %996 = vmatprep.subr.mxu0 0.0
    %997 = vmatpush1.msra.mxu0 0.0
    %998 = vmatprep.subr.mxu0 0.0
    %999 = vmatpush1.msra.mxu0 0.0
    %1000 = vmatprep.subr.mxu0 0.0
    %1001 = vmatpush1.msra.mxu0 0.0
    %1002 = vmatprep.subr.mxu0 0.0
    %1003 = vmatpush1.msra.mxu0 0.0
    %1004 = vmatprep.subr.mxu0 0.0
    %1005 = vmatpush1.msra.mxu0 0.0
    %1006 = vmatprep.subr.mxu0 0.0
    %1007 = vmatpush1.msra.mxu0 0.0
    %1008 = vmatprep.subr.mxu0 0.0
    %1009 = vmatpush1.msra.mxu0 0.0
    %1010 = vmatprep.subr.mxu0 0.0
    %1011 = vmatpush1.msra.mxu0 0.0
    %1012 = vmatprep.subr.mxu0 0.0
    %1013 = vmatpush1.msra.mxu0 0.0
    %1014 = vmatprep.subr.mxu0 0.0
    %1015 = vmatpush1.msra.mxu0 0.0
    %1016 = vmatprep.subr.mxu0 0.0
    %1017 = vmatpush1.msra.mxu0 0.0
    %1018 = vmatprep.subr.mxu0 0.0
    %1019 = vmatpush1.msra.mxu0 0.0
    %1020 = vmatprep.subr.mxu0 0.0
    %1021 = vmatpush1.msra.mxu0 0.0
    %1022 = vmatprep.subr.mxu0 0.0
    %1023 = vmatpush1.msra.mxu0 0.0
    %1024 = vmatprep.subr.mxu0 0.0
    %1025 = vmatpush1.msra.mxu0 0.0
    %1026 = vmatprep.subr.mxu0 0.0
    %1027 = vmatpush1.msra.mxu0 0.0
    %1028 = vmatprep.subr.mxu0 0.0
    %1029 = vmatpush1.msra.mxu0 0.0
    %1030 = vmatprep.subr.mxu0 0.0
    %1031 = vmatpush1.msra.mxu0 0.0
    %1032 = vmatprep.mubr.f32.mxu0 0.0
    %1033 = vmatmul.mubr.f32.gmra.mrb[0].mxu0 %v957
    %v1034 = vpop.f32.mrb[0].mxu0
    %v1035 = vadd.f32 0.0, %v1034
    %v1036 = vpop.f32.mrb[0].mxu0
    %1037 = vmatprep.mubr.f32.mxu0 0.0
    %1038 = vmatmul.mubr.f32.gmra.mrb[0].mxu0 %v960
    %v1039 = vpop.f32.mrb[0].mxu0
    %v1040 = vadd.f32 0.0, %v1039
    %v1041 = vpop.f32.mrb[0].mxu0
    %1042 = vmatprep.mubr.f32.mxu0 0.0
    %1043 = vmatmul.mubr.f32.gmra.mrb[0].mxu0 %v963
    %v1044 = vpop.f32.mrb[0].mxu0
    %v1045 = vadd.f32 0.0, %v1044
    %v1046 = vpop.f32.mrb[0].mxu0
    %1047 = vmatprep.mubr.f32.mxu0 0.0
    %1048 = vmatmul.mubr.f32.gmra.mrb[0].mxu0 %v966
    %v1049 = vpop.f32.mrb[0].mxu0
    %v1050 = vadd.f32 0.0, %v1049
    %v1051 = vpop.f32.mrb[0].mxu0
    %1052 = vdwg.mxu0
    %1053 = vxpose.xlu0.b32.start [1/16] %v148, 128
    %1054 = vxpose.xlu0.b32.cont [2/16] 0.0, 128
    %1055 = vxpose.xlu0.b32.cont [3/16] 0.0, 128
    %1056 = vxpose.xlu0.b32.cont [4/16] 0.0, 128
    %1057 = vxpose.xlu0.b32.cont [5/16] 0.0, 128
    %1058 = vxpose.xlu0.b32.cont [6/16] 0.0, 128
    %1059 = vxpose.xlu0.b32.cont [7/16] 0.0, 128
    %1060 = vxpose.xlu0.b32.cont [8/16] 0.0, 128
    %1061 = vxpose.xlu0.b32.cont [9/16] 0.0, 128
    %1062 = vxpose.xlu0.b32.cont [10/16] 0.0, 128
    %1063 = vxpose.xlu0.b32.cont [11/16] 0.0, 128
    %1064 = vxpose.xlu0.b32.cont [12/16] 0.0, 128
    %1065 = vxpose.xlu0.b32.cont [13/16] 0.0, 128
    %1066 = vxpose.xlu0.b32.cont [14/16] 0.0, 128
    %1067 = vxpose.xlu0.b32.cont [15/16] 0.0, 128
    %1068 = vxpose.xlu0.b32.end [16/16] 0.0, 128
    %v1069 = vpop.trf.xlu0
    %v1070 = vpop.trf.xlu0
    %v1071 = vpop.trf.xlu0
    %v1072 = vpop.trf.xlu0
    %v1073 = vpop.trf.xlu0
    %v1074 = vpop.trf.xlu0
    %v1075 = vpop.trf.xlu0
    %v1076 = vpop.trf.xlu0
    %v1077 = vpop.trf.xlu0
    %v1078 = vpop.trf.xlu0
    %v1079 = vpop.trf.xlu0
    %v1080 = vpop.trf.xlu0
    %v1081 = vpop.trf.xlu0
    %v1082 = vpop.trf.xlu0
    %v1083 = vpop.trf.xlu0
    %v1084 = vpop.trf.xlu0
    %v1086 = vsel %vm210, %v1069, 0
    %v1089 = vsel %vm210, %v1070, 0
    %v1092 = vsel %vm210, %v1071, 0
    %v1095 = vsel %vm210, %v1072, 0
    %1097 = vmatprep.subr.mxu0 0.0
    %1098 = vmatpush1.msra.mxu0 %v427
    %1099 = vmatprep.subr.mxu0 0.0
    %1100 = vmatpush1.msra.mxu0 0.0
    %1101 = vmatprep.subr.mxu0 0.0
    %1102 = vmatpush1.msra.mxu0 0.0
    %1103 = vmatprep.subr.mxu0 0.0
    %1104 = vmatpush1.msra.mxu0 0.0
    %1105 = vmatprep.subr.mxu0 0.0
    %1106 = vmatpush1.msra.mxu0 0.0
    %1107 = vmatprep.subr.mxu0 0.0
    %1108 = vmatpush1.msra.mxu0 0.0
    %1109 = vmatprep.subr.mxu0 0.0
    %1110 = vmatpush1.msra.mxu0 0.0
    %1111 = vmatprep.subr.mxu0 0.0
    %1112 = vmatpush1.msra.mxu0 0.0
    %1113 = vmatprep.subr.mxu0 0.0
    %1114 = vmatpush1.msra.mxu0 0.0
    %1115 = vmatprep.subr.mxu0 0.0
    %1116 = vmatpush1.msra.mxu0 0.0
    %1117 = vmatprep.subr.mxu0 0.0
    %1118 = vmatpush1.msra.mxu0 0.0
    %1119 = vmatprep.subr.mxu0 0.0
    %1120 = vmatpush1.msra.mxu0 0.0
    %1121 = vmatprep.subr.mxu0 0.0
    %1122 = vmatpush1.msra.mxu0 0.0
    %1123 = vmatprep.subr.mxu0 0.0
    %1124 = vmatpush1.msra.mxu0 0.0
    %1125 = vmatprep.subr.mxu0 0.0
    %1126 = vmatpush1.msra.mxu0 0.0
    %1127 = vmatprep.subr.mxu0 0.0
    %1128 = vmatpush1.msra.mxu0 0.0
    %1129 = vmatprep.subr.mxu0 0.0
    %1130 = vmatpush1.msra.mxu0 0.0
    %1131 = vmatprep.subr.mxu0 0.0
    %1132 = vmatpush1.msra.mxu0 0.0
    %1133 = vmatprep.subr.mxu0 0.0
    %1134 = vmatpush1.msra.mxu0 0.0
    %1135 = vmatprep.subr.mxu0 0.0
    %1136 = vmatpush1.msra.mxu0 0.0
    %1137 = vmatprep.subr.mxu0 0.0
    %1138 = vmatpush1.msra.mxu0 0.0
    %1139 = vmatprep.subr.mxu0 0.0
    %1140 = vmatpush1.msra.mxu0 0.0
    %1141 = vmatprep.subr.mxu0 0.0
    %1142 = vmatpush1.msra.mxu0 0.0
    %1143 = vmatprep.subr.mxu0 0.0
    %1144 = vmatpush1.msra.mxu0 0.0
    %1145 = vmatprep.subr.mxu0 0.0
    %1146 = vmatpush1.msra.mxu0 0.0
    %1147 = vmatprep.subr.mxu0 0.0
    %1148 = vmatpush1.msra.mxu0 0.0
    %1149 = vmatprep.subr.mxu0 0.0
    %1150 = vmatpush1.msra.mxu0 0.0
    %1151 = vmatprep.subr.mxu0 0.0
    %1152 = vmatpush1.msra.mxu0 0.0
    %1153 = vmatprep.subr.mxu0 0.0
    %1154 = vmatpush1.msra.mxu0 0.0
    %1155 = vmatprep.subr.mxu0 0.0
    %1156 = vmatpush1.msra.mxu0 0.0
    %1157 = vmatprep.subr.mxu0 0.0
    %1158 = vmatpush1.msra.mxu0 0.0
    %1159 = vmatprep.subr.mxu0 0.0
    %1160 = vmatpush1.msra.mxu0 0.0
    %1161 = vmatprep.mubr.f32.mxu0 0.0
    %1162 = vmatmul.mubr.f32.gmra.mrb[0].mxu0 %v1086
    %v1163 = vpop.f32.mrb[0].mxu0
    %v1164 = vadd.f32 0.0, %v1163
    %v1165 = vpop.f32.mrb[0].mxu0
    %1166 = vmatprep.mubr.f32.mxu0 0.0
    %1167 = vmatmul.mubr.f32.gmra.mrb[0].mxu0 %v1089
    %v1168 = vpop.f32.mrb[0].mxu0
    %v1169 = vadd.f32 0.0, %v1168
    %v1170 = vpop.f32.mrb[0].mxu0
    %1171 = vmatprep.mubr.f32.mxu0 0.0
    %1172 = vmatmul.mubr.f32.gmra.mrb[0].mxu0 %v1092
    %v1173 = vpop.f32.mrb[0].mxu0
    %v1174 = vadd.f32 0.0, %v1173
    %v1175 = vpop.f32.mrb[0].mxu0
    %1176 = vmatprep.mubr.f32.mxu0 0.0
    %1177 = vmatmul.mubr.f32.gmra.mrb[0].mxu0 %v1095
    %v1178 = vpop.f32.mrb[0].mxu0
    %v1179 = vadd.f32 0.0, %v1178
    %v1180 = vpop.f32.mrb[0].mxu0
    %1181 = vdwg.mxu0
    %1182 = vxpose.xlu0.b32.start [1/16] %v149, 128
    %1183 = vxpose.xlu0.b32.cont [2/16] 0.0, 128
    %1184 = vxpose.xlu0.b32.cont [3/16] 0.0, 128
    %1185 = vxpose.xlu0.b32.cont [4/16] 0.0, 128
    %1186 = vxpose.xlu0.b32.cont [5/16] 0.0, 128
    %1187 = vxpose.xlu0.b32.cont [6/16] 0.0, 128
    %1188 = vxpose.xlu0.b32.cont [7/16] 0.0, 128
    %1189 = vxpose.xlu0.b32.cont [8/16] 0.0, 128
    %1190 = vxpose.xlu0.b32.cont [9/16] 0.0, 128
    %1191 = vxpose.xlu0.b32.cont [10/16] 0.0, 128
    %1192 = vxpose.xlu0.b32.cont [11/16] 0.0, 128
    %1193 = vxpose.xlu0.b32.cont [12/16] 0.0, 128
    %1194 = vxpose.xlu0.b32.cont [13/16] 0.0, 128
    %1195 = vxpose.xlu0.b32.cont [14/16] 0.0, 128
    %1196 = vxpose.xlu0.b32.cont [15/16] 0.0, 128
    %1197 = vxpose.xlu0.b32.end [16/16] 0.0, 128
    %v1198 = vpop.trf.xlu0
    %v1199 = vpop.trf.xlu0
    %v1200 = vpop.trf.xlu0
    %v1201 = vpop.trf.xlu0
    %v1202 = vpop.trf.xlu0
    %v1203 = vpop.trf.xlu0
    %v1204 = vpop.trf.xlu0
    %v1205 = vpop.trf.xlu0
    %v1206 = vpop.trf.xlu0
    %v1207 = vpop.trf.xlu0
    %v1208 = vpop.trf.xlu0
    %v1209 = vpop.trf.xlu0
    %v1210 = vpop.trf.xlu0
    %v1211 = vpop.trf.xlu0
    %v1212 = vpop.trf.xlu0
    %v1213 = vpop.trf.xlu0
    %v1215 = vsel %vm210, %v1198, 0
    %v1218 = vsel %vm210, %v1199, 0
    %v1221 = vsel %vm210, %v1200, 0
    %v1224 = vsel %vm210, %v1201, 0
    %1226 = vmatprep.subr.mxu0 0.0
    %1227 = vmatpush1.msra.mxu0 %v500
    %1228 = vmatprep.subr.mxu0 0.0
    %1229 = vmatpush1.msra.mxu0 0.0
    %1230 = vmatprep.subr.mxu0 0.0
    %1231 = vmatpush1.msra.mxu0 0.0
    %1232 = vmatprep.subr.mxu0 0.0
    %1233 = vmatpush1.msra.mxu0 0.0
    %1234 = vmatprep.subr.mxu0 0.0
    %1235 = vmatpush1.msra.mxu0 0.0
    %1236 = vmatprep.subr.mxu0 0.0
    %1237 = vmatpush1.msra.mxu0 0.0
    %1238 = vmatprep.subr.mxu0 0.0
    %1239 = vmatpush1.msra.mxu0 0.0
    %1240 = vmatprep.subr.mxu0 0.0
    %1241 = vmatpush1.msra.mxu0 0.0
    %1242 = vmatprep.subr.mxu0 0.0
    %1243 = vmatpush1.msra.mxu0 0.0
    %1244 = vmatprep.subr.mxu0 0.0
    %1245 = vmatpush1.msra.mxu0 0.0
    %1246 = vmatprep.subr.mxu0 0.0
    %1247 = vmatpush1.msra.mxu0 0.0
    %1248 = vmatprep.subr.mxu0 0.0
    %1249 = vmatpush1.msra.mxu0 0.0
    %1250 = vmatprep.subr.mxu0 0.0
    %1251 = vmatpush1.msra.mxu0 0.0
    %1252 = vmatprep.subr.mxu0 0.0
    %1253 = vmatpush1.msra.mxu0 0.0
    %1254 = vmatprep.subr.mxu0 0.0
    %1255 = vmatpush1.msra.mxu0 0.0
    %1256 = vmatprep.subr.mxu0 0.0
    %1257 = vmatpush1.msra.mxu0 0.0
    %1258 = vmatprep.subr.mxu0 0.0
    %1259 = vmatpush1.msra.mxu0 0.0
    %1260 = vmatprep.subr.mxu0 0.0
    %1261 = vmatpush1.msra.mxu0 0.0
    %1262 = vmatprep.subr.mxu0 0.0
    %1263 = vmatpush1.msra.mxu0 0.0
    %1264 = vmatprep.subr.mxu0 0.0
    %1265 = vmatpush1.msra.mxu0 0.0
    %1266 = vmatprep.subr.mxu0 0.0
    %1267 = vmatpush1.msra.mxu0 0.0
    %1268 = vmatprep.subr.mxu0 0.0
    %1269 = vmatpush1.msra.mxu0 0.0
    %1270 = vmatprep.subr.mxu0 0.0
    %1271 = vmatpush1.msra.mxu0 0.0
    %1272 = vmatprep.subr.mxu0 0.0
    %1273 = vmatpush1.msra.mxu0 0.0
    %1274 = vmatprep.subr.mxu0 0.0
    %1275 = vmatpush1.msra.mxu0 0.0
    %1276 = vmatprep.subr.mxu0 0.0
    %1277 = vmatpush1.msra.mxu0 0.0
    %1278 = vmatprep.subr.mxu0 0.0
    %1279 = vmatpush1.msra.mxu0 0.0
    %1280 = vmatprep.subr.mxu0 0.0
    %1281 = vmatpush1.msra.mxu0 0.0
    %1282 = vmatprep.subr.mxu0 0.0
    %1283 = vmatpush1.msra.mxu0 0.0
    %1284 = vmatprep.subr.mxu0 0.0
    %1285 = vmatpush1.msra.mxu0 0.0
    %1286 = vmatprep.subr.mxu0 0.0
    %1287 = vmatpush1.msra.mxu0 0.0
    %1288 = vmatprep.subr.mxu0 0.0
    %1289 = vmatpush1.msra.mxu0 0.0
    %1290 = vmatprep.mubr.f32.mxu0 0.0
    %1291 = vmatmul.mubr.f32.gmra.mrb[0].mxu0 %v1215
    %v1292 = vpop.f32.mrb[0].mxu0
    %v1293 = vadd.f32 0.0, %v1292
    %v1294 = vpop.f32.mrb[0].mxu0
    %1295 = vmatprep.mubr.f32.mxu0 0.0
    %1296 = vmatmul.mubr.f32.gmra.mrb[0].mxu0 %v1218
    %v1297 = vpop.f32.mrb[0].mxu0
    %v1298 = vadd.f32 0.0, %v1297
    %v1299 = vpop.f32.mrb[0].mxu0
    %1300 = vmatprep.mubr.f32.mxu0 0.0
    %1301 = vmatmul.mubr.f32.gmra.mrb[0].mxu0 %v1221
    %v1302 = vpop.f32.mrb[0].mxu0
    %v1303 = vadd.f32 0.0, %v1302
    %v1304 = vpop.f32.mrb[0].mxu0
    %1305 = vmatprep.mubr.f32.mxu0 0.0
    %1306 = vmatmul.mubr.f32.gmra.mrb[0].mxu0 %v1224
    %v1307 = vpop.f32.mrb[0].mxu0
    %v1308 = vadd.f32 0.0, %v1307
    %v1309 = vpop.f32.mrb[0].mxu0
    %1310 = vdwg.mxu0
    %1311 = vxpose.xlu0.b32.start [1/16] %v150, 128
    %1312 = vxpose.xlu0.b32.cont [2/16] 0.0, 128
    %1313 = vxpose.xlu0.b32.cont [3/16] 0.0, 128
    %1314 = vxpose.xlu0.b32.cont [4/16] 0.0, 128
    %1315 = vxpose.xlu0.b32.cont [5/16] 0.0, 128
    %1316 = vxpose.xlu0.b32.cont [6/16] 0.0, 128
    %1317 = vxpose.xlu0.b32.cont [7/16] 0.0, 128
    %1318 = vxpose.xlu0.b32.cont [8/16] 0.0, 128
    %1319 = vxpose.xlu0.b32.cont [9/16] 0.0, 128
    %1320 = vxpose.xlu0.b32.cont [10/16] 0.0, 128
    %1321 = vxpose.xlu0.b32.cont [11/16] 0.0, 128
    %1322 = vxpose.xlu0.b32.cont [12/16] 0.0, 128
    %1323 = vxpose.xlu0.b32.cont [13/16] 0.0, 128
    %1324 = vxpose.xlu0.b32.cont [14/16] 0.0, 128
    %1325 = vxpose.xlu0.b32.cont [15/16] 0.0, 128
    %1326 = vxpose.xlu0.b32.end [16/16] 0.0, 128
    %v1327 = vpop.trf.xlu0
    %v1328 = vpop.trf.xlu0
    %v1329 = vpop.trf.xlu0
    %v1330 = vpop.trf.xlu0
    %v1331 = vpop.trf.xlu0
    %v1332 = vpop.trf.xlu0
    %v1333 = vpop.trf.xlu0
    %v1334 = vpop.trf.xlu0
    %v1335 = vpop.trf.xlu0
    %v1336 = vpop.trf.xlu0
    %v1337 = vpop.trf.xlu0
    %v1338 = vpop.trf.xlu0
    %v1339 = vpop.trf.xlu0
    %v1340 = vpop.trf.xlu0
    %v1341 = vpop.trf.xlu0
    %v1342 = vpop.trf.xlu0
    %v1344 = vsel %vm210, %v1327, 0
    %v1347 = vsel %vm210, %v1328, 0
    %v1350 = vsel %vm210, %v1329, 0
    %v1353 = vsel %vm210, %v1330, 0
    %1355 = vmatprep.subr.mxu0 0.0
    %1356 = vmatpush1.msra.mxu0 %v573
    %1357 = vmatprep.subr.mxu0 0.0
    %1358 = vmatpush1.msra.mxu0 0.0
    %1359 = vmatprep.subr.mxu0 0.0
    %1360 = vmatpush1.msra.mxu0 0.0
    %1361 = vmatprep.subr.mxu0 0.0
    %1362 = vmatpush1.msra.mxu0 0.0
    %1363 = vmatprep.subr.mxu0 0.0
    %1364 = vmatpush1.msra.mxu0 0.0
    %1365 = vmatprep.subr.mxu0 0.0
    %1366 = vmatpush1.msra.mxu0 0.0
    %1367 = vmatprep.subr.mxu0 0.0
    %1368 = vmatpush1.msra.mxu0 0.0
    %1369 = vmatprep.subr.mxu0 0.0
    %1370 = vmatpush1.msra.mxu0 0.0
    %1371 = vmatprep.subr.mxu0 0.0
    %1372 = vmatpush1.msra.mxu0 0.0
    %1373 = vmatprep.subr.mxu0 0.0
    %1374 = vmatpush1.msra.mxu0 0.0
    %1375 = vmatprep.subr.mxu0 0.0
    %1376 = vmatpush1.msra.mxu0 0.0
    %1377 = vmatprep.subr.mxu0 0.0
    %1378 = vmatpush1.msra.mxu0 0.0
    %1379 = vmatprep.subr.mxu0 0.0
    %1380 = vmatpush1.msra.mxu0 0.0
    %1381 = vmatprep.subr.mxu0 0.0
    %1382 = vmatpush1.msra.mxu0 0.0
    %1383 = vmatprep.subr.mxu0 0.0
    %1384 = vmatpush1.msra.mxu0 0.0
    %1385 = vmatprep.subr.mxu0 0.0
    %1386 = vmatpush1.msra.mxu0 0.0
    %1387 = vmatprep.subr.mxu0 0.0
    %1388 = vmatpush1.msra.mxu0 0.0
    %1389 = vmatprep.subr.mxu0 0.0
    %1390 = vmatpush1.msra.mxu0 0.0
    %1391 = vmatprep.subr.mxu0 0.0
    %1392 = vmatpush1.msra.mxu0 0.0
    %1393 = vmatprep.subr.mxu0 0.0
    %1394 = vmatpush1.msra.mxu0 0.0
    %1395 = vmatprep.subr.mxu0 0.0
    %1396 = vmatpush1.msra.mxu0 0.0
    %1397 = vmatprep.subr.mxu0 0.0
    %1398 = vmatpush1.msra.mxu0 0.0
    %1399 = vmatprep.subr.mxu0 0.0
    %1400 = vmatpush1.msra.mxu0 0.0
    %1401 = vmatprep.subr.mxu0 0.0
    %1402 = vmatpush1.msra.mxu0 0.0
    %1403 = vmatprep.subr.mxu0 0.0
    %1404 = vmatpush1.msra.mxu0 0.0
    %1405 = vmatprep.subr.mxu0 0.0
    %1406 = vmatpush1.msra.mxu0 0.0
    %1407 = vmatprep.subr.mxu0 0.0
    %1408 = vmatpush1.msra.mxu0 0.0
    %1409 = vmatprep.subr.mxu0 0.0
    %1410 = vmatpush1.msra.mxu0 0.0
    %1411 = vmatprep.subr.mxu0 0.0
    %1412 = vmatpush1.msra.mxu0 0.0
    %1413 = vmatprep.subr.mxu0 0.0
    %1414 = vmatpush1.msra.mxu0 0.0
    %1415 = vmatprep.subr.mxu0 0.0
    %1416 = vmatpush1.msra.mxu0 0.0
    %1417 = vmatprep.subr.mxu0 0.0
    %1418 = vmatpush1.msra.mxu0 0.0
    %1419 = vmatprep.mubr.f32.mxu0 0.0
    %1420 = vmatmul.mubr.f32.gmra.mrb[0].mxu0 %v1344
    %v1421 = vpop.f32.mrb[0].mxu0
    %v1422 = vadd.f32 0.0, %v1421
    %v1423 = vpop.f32.mrb[0].mxu0
    %1424 = vmatprep.mubr.f32.mxu0 0.0
    %1425 = vmatmul.mubr.f32.gmra.mrb[0].mxu0 %v1347
    %v1426 = vpop.f32.mrb[0].mxu0
    %v1427 = vadd.f32 0.0, %v1426
    %v1428 = vpop.f32.mrb[0].mxu0
    %1429 = vmatprep.mubr.f32.mxu0 0.0
    %1430 = vmatmul.mubr.f32.gmra.mrb[0].mxu0 %v1350
    %v1431 = vpop.f32.mrb[0].mxu0
    %v1432 = vadd.f32 0.0, %v1431
    %v1433 = vpop.f32.mrb[0].mxu0
    %1434 = vmatprep.mubr.f32.mxu0 0.0
    %1435 = vmatmul.mubr.f32.gmra.mrb[0].mxu0 %v1353
    %v1436 = vpop.f32.mrb[0].mxu0
    %v1437 = vadd.f32 0.0, %v1436
    %v1438 = vpop.f32.mrb[0].mxu0
    %1439 = vdwg.mxu0
    %1440 = vxpose.xlu0.b32.start [1/16] %v151, 128
    %1441 = vxpose.xlu0.b32.cont [2/16] 0.0, 128
    %1442 = vxpose.xlu0.b32.cont [3/16] 0.0, 128
    %1443 = vxpose.xlu0.b32.cont [4/16] 0.0, 128
    %1444 = vxpose.xlu0.b32.cont [5/16] 0.0, 128
    %1445 = vxpose.xlu0.b32.cont [6/16] 0.0, 128
    %1446 = vxpose.xlu0.b32.cont [7/16] 0.0, 128
    %1447 = vxpose.xlu0.b32.cont [8/16] 0.0, 128
    %1448 = vxpose.xlu0.b32.cont [9/16] 0.0, 128
    %1449 = vxpose.xlu0.b32.cont [10/16] 0.0, 128
    %1450 = vxpose.xlu0.b32.cont [11/16] 0.0, 128
    %1451 = vxpose.xlu0.b32.cont [12/16] 0.0, 128
    %1452 = vxpose.xlu0.b32.cont [13/16] 0.0, 128
    %1453 = vxpose.xlu0.b32.cont [14/16] 0.0, 128
    %1454 = vxpose.xlu0.b32.cont [15/16] 0.0, 128
    %1455 = vxpose.xlu0.b32.end [16/16] 0.0, 128
    %v1456 = vpop.trf.xlu0
    %v1457 = vpop.trf.xlu0
    %v1458 = vpop.trf.xlu0
    %v1459 = vpop.trf.xlu0
    %v1460 = vpop.trf.xlu0
    %v1461 = vpop.trf.xlu0
    %v1462 = vpop.trf.xlu0
    %v1463 = vpop.trf.xlu0
    %v1464 = vpop.trf.xlu0
    %v1465 = vpop.trf.xlu0
    %v1466 = vpop.trf.xlu0
    %v1467 = vpop.trf.xlu0
    %v1468 = vpop.trf.xlu0
    %v1469 = vpop.trf.xlu0
    %v1470 = vpop.trf.xlu0
    %v1471 = vpop.trf.xlu0
    %v1473 = vsel %vm210, %v1456, 0
    %v1476 = vsel %vm210, %v1457, 0
    %v1479 = vsel %vm210, %v1458, 0
    %v1482 = vsel %vm210, %v1459, 0
    %1484 = vmatprep.subr.mxu0 0.0
    %1485 = vmatpush1.msra.mxu0 %v646
    %1486 = vmatprep.subr.mxu0 0.0
    %1487 = vmatpush1.msra.mxu0 0.0
    %1488 = vmatprep.subr.mxu0 0.0
    %1489 = vmatpush1.msra.mxu0 0.0
    %1490 = vmatprep.subr.mxu0 0.0
    %1491 = vmatpush1.msra.mxu0 0.0
    %1492 = vmatprep.subr.mxu0 0.0
    %1493 = vmatpush1.msra.mxu0 0.0
    %1494 = vmatprep.subr.mxu0 0.0
    %1495 = vmatpush1.msra.mxu0 0.0
    %1496 = vmatprep.subr.mxu0 0.0
    %1497 = vmatpush1.msra.mxu0 0.0
    %1498 = vmatprep.subr.mxu0 0.0
    %1499 = vmatpush1.msra.mxu0 0.0
    %1500 = vmatprep.subr.mxu0 0.0
    %1501 = vmatpush1.msra.mxu0 0.0
    %1502 = vmatprep.subr.mxu0 0.0
    %1503 = vmatpush1.msra.mxu0 0.0
    %1504 = vmatprep.subr.mxu0 0.0
    %1505 = vmatpush1.msra.mxu0 0.0
    %1506 = vmatprep.subr.mxu0 0.0
    %1507 = vmatpush1.msra.mxu0 0.0
    %1508 = vmatprep.subr.mxu0 0.0
    %1509 = vmatpush1.msra.mxu0 0.0
    %1510 = vmatprep.subr.mxu0 0.0
    %1511 = vmatpush1.msra.mxu0 0.0
    %1512 = vmatprep.subr.mxu0 0.0
    %1513 = vmatpush1.msra.mxu0 0.0
    %1514 = vmatprep.subr.mxu0 0.0
    %1515 = vmatpush1.msra.mxu0 0.0
    %1516 = vmatprep.subr.mxu0 0.0
    %1517 = vmatpush1.msra.mxu0 0.0
    %1518 = vmatprep.subr.mxu0 0.0
    %1519 = vmatpush1.msra.mxu0 0.0
    %1520 = vmatprep.subr.mxu0 0.0
    %1521 = vmatpush1.msra.mxu0 0.0
    %1522 = vmatprep.subr.mxu0 0.0
    %1523 = vmatpush1.msra.mxu0 0.0
    %1524 = vmatprep.subr.mxu0 0.0
    %1525 = vmatpush1.msra.mxu0 0.0
    %1526 = vmatprep.subr.mxu0 0.0
    %1527 = vmatpush1.msra.mxu0 0.0
    %1528 = vmatprep.subr.mxu0 0.0
    %1529 = vmatpush1.msra.mxu0 0.0
    %1530 = vmatprep.subr.mxu0 0.0
    %1531 = vmatpush1.msra.mxu0 0.0
    %1532 = vmatprep.subr.mxu0 0.0
    %1533 = vmatpush1.msra.mxu0 0.0
    %1534 = vmatprep.subr.mxu0 0.0
    %1535 = vmatpush1.msra.mxu0 0.0
    %1536 = vmatprep.subr.mxu0 0.0
    %1537 = vmatpush1.msra.mxu0 0.0
    %1538 = vmatprep.subr.mxu0 0.0
    %1539 = vmatpush1.msra.mxu0 0.0
    %1540 = vmatprep.subr.mxu0 0.0
    %1541 = vmatpush1.msra.mxu0 0.0
    %1542 = vmatprep.subr.mxu0 0.0
    %1543 = vmatpush1.msra.mxu0 0.0
    %1544 = vmatprep.subr.mxu0 0.0
    %1545 = vmatpush1.msra.mxu0 0.0
    %1546 = vmatprep.subr.mxu0 0.0
    %1547 = vmatpush1.msra.mxu0 0.0
    %1548 = vmatprep.mubr.f32.mxu0 0.0
    %1549 = vmatmul.mubr.f32.gmra.mrb[0].mxu0 %v1473
    %v1550 = vpop.f32.mrb[0].mxu0
    %v1551 = vadd.f32 0.0, %v1550
    %v1552 = vpop.f32.mrb[0].mxu0
    %1553 = vmatprep.mubr.f32.mxu0 0.0
    %1554 = vmatmul.mubr.f32.gmra.mrb[0].mxu0 %v1476
    %v1555 = vpop.f32.mrb[0].mxu0
    %v1556 = vadd.f32 0.0, %v1555
    %v1557 = vpop.f32.mrb[0].mxu0
    %1558 = vmatprep.mubr.f32.mxu0 0.0
    %1559 = vmatmul.mubr.f32.gmra.mrb[0].mxu0 %v1479
    %v1560 = vpop.f32.mrb[0].mxu0
    %v1561 = vadd.f32 0.0, %v1560
    %v1562 = vpop.f32.mrb[0].mxu0
    %1563 = vmatprep.mubr.f32.mxu0 0.0
    %1564 = vmatmul.mubr.f32.gmra.mrb[0].mxu0 %v1482
    %v1565 = vpop.f32.mrb[0].mxu0
    %v1566 = vadd.f32 0.0, %v1565
    %v1567 = vpop.f32.mrb[0].mxu0
    %1568 = vdwg.mxu0
    %1569 = vxpose.xlu0.b32.start [1/16] %v152, 128
    %1570 = vxpose.xlu0.b32.cont [2/16] 0.0, 128
    %1571 = vxpose.xlu0.b32.cont [3/16] 0.0, 128
    %1572 = vxpose.xlu0.b32.cont [4/16] 0.0, 128
    %1573 = vxpose.xlu0.b32.cont [5/16] 0.0, 128
    %1574 = vxpose.xlu0.b32.cont [6/16] 0.0, 128
    %1575 = vxpose.xlu0.b32.cont [7/16] 0.0, 128
    %1576 = vxpose.xlu0.b32.cont [8/16] 0.0, 128
    %1577 = vxpose.xlu0.b32.cont [9/16] 0.0, 128
    %1578 = vxpose.xlu0.b32.cont [10/16] 0.0, 128
    %1579 = vxpose.xlu0.b32.cont [11/16] 0.0, 128
    %1580 = vxpose.xlu0.b32.cont [12/16] 0.0, 128
    %1581 = vxpose.xlu0.b32.cont [13/16] 0.0, 128
    %1582 = vxpose.xlu0.b32.cont [14/16] 0.0, 128
    %1583 = vxpose.xlu0.b32.cont [15/16] 0.0, 128
    %1584 = vxpose.xlu0.b32.end [16/16] 0.0, 128
    %v1585 = vpop.trf.xlu0
    %v1586 = vpop.trf.xlu0
    %v1587 = vpop.trf.xlu0
    %v1588 = vpop.trf.xlu0
    %v1589 = vpop.trf.xlu0
    %v1590 = vpop.trf.xlu0
    %v1591 = vpop.trf.xlu0
    %v1592 = vpop.trf.xlu0
    %v1593 = vpop.trf.xlu0
    %v1594 = vpop.trf.xlu0
    %v1595 = vpop.trf.xlu0
    %v1596 = vpop.trf.xlu0
    %v1597 = vpop.trf.xlu0
    %v1598 = vpop.trf.xlu0
    %v1599 = vpop.trf.xlu0
    %v1600 = vpop.trf.xlu0
    %v1602 = vsel %vm210, %v1585, 0
    %v1605 = vsel %vm210, %v1586, 0
    %v1608 = vsel %vm210, %v1587, 0
    %v1611 = vsel %vm210, %v1588, 0
    %1613 = vmatprep.subr.mxu0 0.0
    %1614 = vmatpush1.msra.mxu0 %v719
    %1615 = vmatprep.subr.mxu0 0.0
    %1616 = vmatpush1.msra.mxu0 0.0
    %1617 = vmatprep.subr.mxu0 0.0
    %1618 = vmatpush1.msra.mxu0 0.0
    %1619 = vmatprep.subr.mxu0 0.0
    %1620 = vmatpush1.msra.mxu0 0.0
    %1621 = vmatprep.subr.mxu0 0.0
    %1622 = vmatpush1.msra.mxu0 0.0
    %1623 = vmatprep.subr.mxu0 0.0
    %1624 = vmatpush1.msra.mxu0 0.0
    %1625 = vmatprep.subr.mxu0 0.0
    %1626 = vmatpush1.msra.mxu0 0.0
    %1627 = vmatprep.subr.mxu0 0.0
    %1628 = vmatpush1.msra.mxu0 0.0
    %1629 = vmatprep.subr.mxu0 0.0
    %1630 = vmatpush1.msra.mxu0 0.0
    %1631 = vmatprep.subr.mxu0 0.0
    %1632 = vmatpush1.msra.mxu0 0.0
    %1633 = vmatprep.subr.mxu0 0.0
    %1634 = vmatpush1.msra.mxu0 0.0
    %1635 = vmatprep.subr.mxu0 0.0
    %1636 = vmatpush1.msra.mxu0 0.0
    %1637 = vmatprep.subr.mxu0 0.0
    %1638 = vmatpush1.msra.mxu0 0.0
    %1639 = vmatprep.subr.mxu0 0.0
    %1640 = vmatpush1.msra.mxu0 0.0
    %1641 = vmatprep.subr.mxu0 0.0
    %1642 = vmatpush1.msra.mxu0 0.0
    %1643 = vmatprep.subr.mxu0 0.0
    %1644 = vmatpush1.msra.mxu0 0.0
    %1645 = vmatprep.subr.mxu0 0.0
    %1646 = vmatpush1.msra.mxu0 0.0
    %1647 = vmatprep.subr.mxu0 0.0
    %1648 = vmatpush1.msra.mxu0 0.0
    %1649 = vmatprep.subr.mxu0 0.0
    %1650 = vmatpush1.msra.mxu0 0.0
    %1651 = vmatprep.subr.mxu0 0.0
    %1652 = vmatpush1.msra.mxu0 0.0
    %1653 = vmatprep.subr.mxu0 0.0
    %1654 = vmatpush1.msra.mxu0 0.0
    %1655 = vmatprep.subr.mxu0 0.0
    %1656 = vmatpush1.msra.mxu0 0.0
    %1657 = vmatprep.subr.mxu0 0.0
    %1658 = vmatpush1.msra.mxu0 0.0
    %1659 = vmatprep.subr.mxu0 0.0
    %1660 = vmatpush1.msra.mxu0 0.0
    %1661 = vmatprep.subr.mxu0 0.0
    %1662 = vmatpush1.msra.mxu0 0.0
    %1663 = vmatprep.subr.mxu0 0.0
    %1664 = vmatpush1.msra.mxu0 0.0
    %1665 = vmatprep.subr.mxu0 0.0
    %1666 = vmatpush1.msra.mxu0 0.0
    %1667 = vmatprep.subr.mxu0 0.0
    %1668 = vmatpush1.msra.mxu0 0.0
    %1669 = vmatprep.subr.mxu0 0.0
    %1670 = vmatpush1.msra.mxu0 0.0
    %1671 = vmatprep.subr.mxu0 0.0
    %1672 = vmatpush1.msra.mxu0 0.0
    %1673 = vmatprep.subr.mxu0 0.0
    %1674 = vmatpush1.msra.mxu0 0.0
    %1675 = vmatprep.subr.mxu0 0.0
    %1676 = vmatpush1.msra.mxu0 0.0
    %1677 = vmatprep.mubr.f32.mxu0 0.0
    %1678 = vmatmul.mubr.f32.gmra.mrb[0].mxu0 %v1602
    %v1679 = vpop.f32.mrb[0].mxu0
    %v1680 = vadd.f32 0.0, %v1679
    %v1681 = vpop.f32.mrb[0].mxu0
    %1682 = vmatprep.mubr.f32.mxu0 0.0
    %1683 = vmatmul.mubr.f32.gmra.mrb[0].mxu0 %v1605
    %v1684 = vpop.f32.mrb[0].mxu0
    %v1685 = vadd.f32 0.0, %v1684
    %v1686 = vpop.f32.mrb[0].mxu0
    %1687 = vmatprep.mubr.f32.mxu0 0.0
    %1688 = vmatmul.mubr.f32.gmra.mrb[0].mxu0 %v1608
    %v1689 = vpop.f32.mrb[0].mxu0
    %v1690 = vadd.f32 0.0, %v1689
    %v1691 = vpop.f32.mrb[0].mxu0
    %1692 = vmatprep.mubr.f32.mxu0 0.0
    %1693 = vmatmul.mubr.f32.gmra.mrb[0].mxu0 %v1611
    %v1694 = vpop.f32.mrb[0].mxu0
    %v1695 = vadd.f32 0.0, %v1694
    %v1696 = vpop.f32.mrb[0].mxu0
    %1697 = vdwg.mxu0
    %1698 = vxpose.xlu0.b32.start [1/16] %v153, 128
    %1699 = vxpose.xlu0.b32.cont [2/16] 0.0, 128
    %1700 = vxpose.xlu0.b32.cont [3/16] 0.0, 128
    %1701 = vxpose.xlu0.b32.cont [4/16] 0.0, 128
    %1702 = vxpose.xlu0.b32.cont [5/16] 0.0, 128
    %1703 = vxpose.xlu0.b32.cont [6/16] 0.0, 128
    %1704 = vxpose.xlu0.b32.cont [7/16] 0.0, 128
    %1705 = vxpose.xlu0.b32.cont [8/16] 0.0, 128
    %1706 = vxpose.xlu0.b32.cont [9/16] 0.0, 128
    %1707 = vxpose.xlu0.b32.cont [10/16] 0.0, 128
    %1708 = vxpose.xlu0.b32.cont [11/16] 0.0, 128
    %1709 = vxpose.xlu0.b32.cont [12/16] 0.0, 128
    %1710 = vxpose.xlu0.b32.cont [13/16] 0.0, 128
    %1711 = vxpose.xlu0.b32.cont [14/16] 0.0, 128
    %1712 = vxpose.xlu0.b32.cont [15/16] 0.0, 128
    %1713 = vxpose.xlu0.b32.end [16/16] 0.0, 128
    %v1714 = vpop.trf.xlu0
    %v1715 = vpop.trf.xlu0
    %v1716 = vpop.trf.xlu0
    %v1717 = vpop.trf.xlu0
    %v1718 = vpop.trf.xlu0
    %v1719 = vpop.trf.xlu0
    %v1720 = vpop.trf.xlu0
    %v1721 = vpop.trf.xlu0
    %v1722 = vpop.trf.xlu0
    %v1723 = vpop.trf.xlu0
    %v1724 = vpop.trf.xlu0
    %v1725 = vpop.trf.xlu0
    %v1726 = vpop.trf.xlu0
    %v1727 = vpop.trf.xlu0
    %v1728 = vpop.trf.xlu0
    %v1729 = vpop.trf.xlu0
    %v1731 = vsel %vm210, %v1714, 0
    %v1734 = vsel %vm210, %v1715, 0
    %v1737 = vsel %vm210, %v1716, 0
    %v1740 = vsel %vm210, %v1717, 0
    %1742 = vmatprep.subr.mxu0 0.0
    %1743 = vmatpush1.msra.mxu0 %v792
    %1744 = vmatprep.subr.mxu0 0.0
    %1745 = vmatpush1.msra.mxu0 0.0
    %1746 = vmatprep.subr.mxu0 0.0
    %1747 = vmatpush1.msra.mxu0 0.0
    %1748 = vmatprep.subr.mxu0 0.0
    %1749 = vmatpush1.msra.mxu0 0.0
    %1750 = vmatprep.subr.mxu0 0.0
    %1751 = vmatpush1.msra.mxu0 0.0
    %1752 = vmatprep.subr.mxu0 0.0
    %1753 = vmatpush1.msra.mxu0 0.0
    %1754 = vmatprep.subr.mxu0 0.0
    %1755 = vmatpush1.msra.mxu0 0.0
    %1756 = vmatprep.subr.mxu0 0.0
    %1757 = vmatpush1.msra.mxu0 0.0
    %1758 = vmatprep.subr.mxu0 0.0
    %1759 = vmatpush1.msra.mxu0 0.0
    %1760 = vmatprep.subr.mxu0 0.0
    %1761 = vmatpush1.msra.mxu0 0.0
    %1762 = vmatprep.subr.mxu0 0.0
    %1763 = vmatpush1.msra.mxu0 0.0
    %1764 = vmatprep.subr.mxu0 0.0
    %1765 = vmatpush1.msra.mxu0 0.0
    %1766 = vmatprep.subr.mxu0 0.0
    %1767 = vmatpush1.msra.mxu0 0.0
    %1768 = vmatprep.subr.mxu0 0.0
    %1769 = vmatpush1.msra.mxu0 0.0
    %1770 = vmatprep.subr.mxu0 0.0
    %1771 = vmatpush1.msra.mxu0 0.0
    %1772 = vmatprep.subr.mxu0 0.0
    %1773 = vmatpush1.msra.mxu0 0.0
    %1774 = vmatprep.subr.mxu0 0.0
    %1775 = vmatpush1.msra.mxu0 0.0
    %1776 = vmatprep.subr.mxu0 0.0
    %1777 = vmatpush1.msra.mxu0 0.0
    %1778 = vmatprep.subr.mxu0 0.0
    %1779 = vmatpush1.msra.mxu0 0.0
    %1780 = vmatprep.subr.mxu0 0.0
    %1781 = vmatpush1.msra.mxu0 0.0
    %1782 = vmatprep.subr.mxu0 0.0
    %1783 = vmatpush1.msra.mxu0 0.0
    %1784 = vmatprep.subr.mxu0 0.0
    %1785 = vmatpush1.msra.mxu0 0.0
    %1786 = vmatprep.subr.mxu0 0.0
    %1787 = vmatpush1.msra.mxu0 0.0
    %1788 = vmatprep.subr.mxu0 0.0
    %1789 = vmatpush1.msra.mxu0 0.0
    %1790 = vmatprep.subr.mxu0 0.0
    %1791 = vmatpush1.msra.mxu0 0.0
    %1792 = vmatprep.subr.mxu0 0.0
    %1793 = vmatpush1.msra.mxu0 0.0
    %1794 = vmatprep.subr.mxu0 0.0
    %1795 = vmatpush1.msra.mxu0 0.0
    %1796 = vmatprep.subr.mxu0 0.0
    %1797 = vmatpush1.msra.mxu0 0.0
    %1798 = vmatprep.subr.mxu0 0.0
    %1799 = vmatpush1.msra.mxu0 0.0
    %1800 = vmatprep.subr.mxu0 0.0
    %1801 = vmatpush1.msra.mxu0 0.0
    %1802 = vmatprep.subr.mxu0 0.0
    %1803 = vmatpush1.msra.mxu0 0.0
    %1804 = vmatprep.subr.mxu0 0.0
    %1805 = vmatpush1.msra.mxu0 0.0
    %1806 = vmatprep.mubr.f32.mxu0 0.0
    %1807 = vmatmul.mubr.f32.gmra.mrb[0].mxu0 %v1731
    %v1808 = vpop.f32.mrb[0].mxu0
    %v1809 = vadd.f32 0.0, %v1808
    %v1810 = vpop.f32.mrb[0].mxu0
    %1811 = vmatprep.mubr.f32.mxu0 0.0
    %1812 = vmatmul.mubr.f32.gmra.mrb[0].mxu0 %v1734
    %v1813 = vpop.f32.mrb[0].mxu0
    %v1814 = vadd.f32 0.0, %v1813
    %v1815 = vpop.f32.mrb[0].mxu0
    %1816 = vmatprep.mubr.f32.mxu0 0.0
    %1817 = vmatmul.mubr.f32.gmra.mrb[0].mxu0 %v1737
    %v1818 = vpop.f32.mrb[0].mxu0
    %v1819 = vadd.f32 0.0, %v1818
    %v1820 = vpop.f32.mrb[0].mxu0
    %1821 = vmatprep.mubr.f32.mxu0 0.0
    %1822 = vmatmul.mubr.f32.gmra.mrb[0].mxu0 %v1740
    %v1823 = vpop.f32.mrb[0].mxu0
    %v1824 = vadd.f32 0.0, %v1823
    %v1825 = vpop.f32.mrb[0].mxu0
    %1826 = vdwg.mxu0
    %v1835 = vrot.slane %v1035, 7
    %vm1836 = vcmask 1041409
    %v1837 = vsel %vm1836, %v1835, %v906
    %v1838 = vrot.slane %v1164, 6
    %vm1839 = vcmask 1042434
    %v1840 = vsel %vm1839, %v1838, %v1837
    %v1841 = vrot.slane %v1293, 5
    %vm1842 = vcmask 1043459
    %v1843 = vsel %vm1842, %v1841, %v1840
    %v1844 = vrot.slane %v1422, 4
    %vm1845 = vcmask 1044484
    %v1846 = vsel %vm1845, %v1844, %v1843
    %v1847 = vrot.slane %v1551, 3
    %vm1848 = vcmask 1045509
    %v1849 = vsel %vm1848, %v1847, %v1846
    %v1850 = vrot.slane %v1680, 2
    %vm1851 = vcmask 1046534
    %v1852 = vsel %vm1851, %v1850, %v1849
    %v1853 = vrot.slane %v1809, 1
    %vm1854 = vcmask 1047559
    %v1855 = vsel %vm1854, %v1853, %v1852
    %1857 = vst.msk [vmem:[#allocation2] sm:$0xff] %vm105, %v1855
    %v1858 = vrot.slane %v906, 1
    %v1859 = vsel %vm1836, %v1035, %v1858
    %v1860 = vrot.slane %v1164, 7
    %v1861 = vsel %vm1839, %v1860, %v1859
    %v1862 = vrot.slane %v1293, 6
    %v1863 = vsel %vm1842, %v1862, %v1861
    %v1864 = vrot.slane %v1422, 5
    %v1865 = vsel %vm1845, %v1864, %v1863
    %v1866 = vrot.slane %v1551, 4
    %v1867 = vsel %vm1848, %v1866, %v1865
    %v1868 = vrot.slane %v1680, 3
    %v1869 = vsel %vm1851, %v1868, %v1867
    %v1870 = vrot.slane %v1809, 2
    %v1871 = vsel %vm1854, %v1870, %v1869
    %1872 = vrot.lane.b32.xlu0 %v1871, 32
    %v1873 = vpop.permute.xlu0 %1872
    %vm1875 = vcmask 523520
    %1876 = vst.msk [vmem:[#allocation2] sm:$0xff] %vm1875, %v1873
    %v1877 = vrot.slane %v906, 2
    %v1878 = vrot.slane %v1035, 1
    %v1879 = vsel %vm1836, %v1878, %v1877
    %v1880 = vsel %vm1839, %v1164, %v1879
    %v1881 = vrot.slane %v1293, 7
    %v1882 = vsel %vm1842, %v1881, %v1880
    %v1883 = vrot.slane %v1422, 6
    %v1884 = vsel %vm1845, %v1883, %v1882
    %v1885 = vrot.slane %v1551, 5
    %v1886 = vsel %vm1848, %v1885, %v1884
    %v1887 = vrot.slane %v1680, 4
    %v1888 = vsel %vm1851, %v1887, %v1886
    %v1889 = vrot.slane %v1809, 3
    %v1890 = vsel %vm1854, %v1889, %v1888
    %1891 = vrot.lane.b32.xlu0 %v1890, 64
    %v1892 = vpop.permute.xlu0 %1891
    %vm1894 = vcmask 785920
    %1895 = vst.msk [vmem:[#allocation2] sm:$0xff] %vm1894, %v1892
    %v1896 = vrot.slane %v906, 3
    %v1897 = vrot.slane %v1035, 2
    %v1898 = vsel %vm1836, %v1897, %v1896
    %v1899 = vrot.slane %v1164, 1
    %v1900 = vsel %vm1839, %v1899, %v1898
    %v1901 = vsel %vm1842, %v1293, %v1900
    %v1902 = vrot.slane %v1422, 7
    %v1903 = vsel %vm1845, %v1902, %v1901
    %v1904 = vrot.slane %v1551, 6
    %v1905 = vsel %vm1848, %v1904, %v1903
    %v1906 = vrot.slane %v1680, 5
    %v1907 = vsel %vm1851, %v1906, %v1905
    %v1908 = vrot.slane %v1809, 4
    %v1909 = vsel %vm1854, %v1908, %v1907
    %1910 = vrot.lane.b32.xlu0 %v1909, 96
    %v1911 = vpop.permute.xlu0 %1910
    %vm1913 = vcmask 1048320
    %1914 = vst.msk [vmem:[#allocation2] sm:$0xff] %vm1913, %v1911
    %v1915 = vrot.slane %v906, 4
    %v1916 = vrot.slane %v1035, 3
    %v1917 = vsel %vm1836, %v1916, %v1915
    %v1918 = vrot.slane %v1164, 2
    %v1919 = vsel %vm1839, %v1918, %v1917
    %v1920 = vrot.slane %v1293, 1
    %v1921 = vsel %vm1842, %v1920, %v1919
    %v1922 = vsel %vm1845, %v1422, %v1921
    %v1923 = vrot.slane %v1551, 7
    %v1924 = vsel %vm1848, %v1923, %v1922
    %v1925 = vrot.slane %v1680, 6
    %v1926 = vsel %vm1851, %v1925, %v1924
    %v1927 = vrot.slane %v1809, 5
    %v1928 = vsel %vm1854, %v1927, %v1926
    %1930 = vst.msk [vmem:[#allocation2 + $0x8] sm:$0xff] %vm105, %v1928
    %v1931 = vrot.slane %v906, 5
    %v1932 = vrot.slane %v1035, 4
    %v1933 = vsel %vm1836, %v1932, %v1931
    %v1934 = vrot.slane %v1164, 3
    %v1935 = vsel %vm1839, %v1934, %v1933
    %v1936 = vrot.slane %v1293, 2
    %v1937 = vsel %vm1842, %v1936, %v1935
    %v1938 = vrot.slane %v1422, 1
    %v1939 = vsel %vm1845, %v1938, %v1937
    %v1940 = vsel %vm1848, %v1551, %v1939
    %v1941 = vrot.slane %v1680, 7
    %v1942 = vsel %vm1851, %v1941, %v1940
    %v1943 = vrot.slane %v1809, 6
    %v1944 = vsel %vm1854, %v1943, %v1942
    %1945 = vrot.lane.b32.xlu0 %v1944, 32
    %v1946 = vpop.permute.xlu0 %1945
    %1948 = vst.msk [vmem:[#allocation2 + $0x8] sm:$0xff] %vm1875, %v1946
    %v1949 = vrot.slane %v906, 6
    %v1950 = vrot.slane %v1035, 5
    %v1951 = vsel %vm1836, %v1950, %v1949
    %v1952 = vrot.slane %v1164, 4
    %v1953 = vsel %vm1839, %v1952, %v1951
    %v1954 = vrot.slane %v1293, 3
    %v1955 = vsel %vm1842, %v1954, %v1953
    %v1956 = vrot.slane %v1422, 2
    %v1957 = vsel %vm1845, %v1956, %v1955
    %v1958 = vrot.slane %v1551, 1
    %v1959 = vsel %vm1848, %v1958, %v1957
    %v1960 = vsel %vm1851, %v1680, %v1959
    %v1961 = vrot.slane %v1809, 7
    %v1962 = vsel %vm1854, %v1961, %v1960
    %1963 = vrot.lane.b32.xlu0 %v1962, 64
    %v1964 = vpop.permute.xlu0 %1963
    %1966 = vst.msk [vmem:[#allocation2 + $0x8] sm:$0xff] %vm1894, %v1964
    %v1967 = vrot.slane %v906, 7
    %v1968 = vrot.slane %v1035, 6
    %v1969 = vsel %vm1836, %v1968, %v1967
    %v1970 = vrot.slane %v1164, 5
    %v1971 = vsel %vm1839, %v1970, %v1969
    %v1972 = vrot.slane %v1293, 4
    %v1973 = vsel %vm1842, %v1972, %v1971
    %v1974 = vrot.slane %v1422, 3
    %v1975 = vsel %vm1845, %v1974, %v1973
    %v1976 = vrot.slane %v1551, 2
    %v1977 = vsel %vm1848, %v1976, %v1975
    %v1978 = vrot.slane %v1680, 1
    %v1979 = vsel %vm1851, %v1978, %v1977
    %v1980 = vsel %vm1854, %v1809, %v1979
    %1981 = vrot.lane.b32.xlu0 %v1980, 96
    %v1982 = vpop.permute.xlu0 %1981
    %1984 = vst.msk [vmem:[#allocation2 + $0x8] sm:$0xff] %vm1913, %v1982
    %v1993 = vrot.slane %v1040, 7
    %v1994 = vsel %vm1836, %v1993, %v911
    %v1995 = vrot.slane %v1169, 6
    %v1996 = vsel %vm1839, %v1995, %v1994
    %v1997 = vrot.slane %v1298, 5
    %v1998 = vsel %vm1842, %v1997, %v1996
    %v1999 = vrot.slane %v1427, 4
    %v2000 = vsel %vm1845, %v1999, %v1998
    %v2001 = vrot.slane %v1556, 3
    %v2002 = vsel %vm1848, %v2001, %v2000
    %v2003 = vrot.slane %v1685, 2
    %v2004 = vsel %vm1851, %v2003, %v2002
    %v2005 = vrot.slane %v1814, 1
    %v2006 = vsel %vm1854, %v2005, %v2004
    %2008 = vst.msk [vmem:[#allocation2 + $0x10] sm:$0xff] %vm105, %v2006
    %v2009 = vrot.slane %v911, 1
    %v2010 = vsel %vm1836, %v1040, %v2009
    %v2011 = vrot.slane %v1169, 7
    %v2012 = vsel %vm1839, %v2011, %v2010
    %v2013 = vrot.slane %v1298, 6
    %v2014 = vsel %vm1842, %v2013, %v2012
    %v2015 = vrot.slane %v1427, 5
    %v2016 = vsel %vm1845, %v2015, %v2014
    %v2017 = vrot.slane %v1556, 4
    %v2018 = vsel %vm1848, %v2017, %v2016
    %v2019 = vrot.slane %v1685, 3
    %v2020 = vsel %vm1851, %v2019, %v2018
    %v2021 = vrot.slane %v1814, 2
    %v2022 = vsel %vm1854, %v2021, %v2020
    %2023 = vrot.lane.b32.xlu0 %v2022, 32
    %v2024 = vpop.permute.xlu0 %2023
    %2026 = vst.msk [vmem:[#allocation2 + $0x10] sm:$0xff] %vm1875, %v2024
    %v2027 = vrot.slane %v911, 2
    %v2028 = vrot.slane %v1040, 1
    %v2029 = vsel %vm1836, %v2028, %v2027
    %v2030 = vsel %vm1839, %v1169, %v2029
    %v2031 = vrot.slane %v1298, 7
    %v2032 = vsel %vm1842, %v2031, %v2030
    %v2033 = vrot.slane %v1427, 6
    %v2034 = vsel %vm1845, %v2033, %v2032
    %v2035 = vrot.slane %v1556, 5
    %v2036 = vsel %vm1848, %v2035, %v2034
    %v2037 = vrot.slane %v1685, 4
    %v2038 = vsel %vm1851, %v2037, %v2036
    %v2039 = vrot.slane %v1814, 3
    %v2040 = vsel %vm1854, %v2039, %v2038
    %2041 = vrot.lane.b32.xlu0 %v2040, 64
    %v2042 = vpop.permute.xlu0 %2041
    %2044 = vst.msk [vmem:[#allocation2 + $0x10] sm:$0xff] %vm1894, %v2042
    %v2045 = vrot.slane %v911, 3
    %v2046 = vrot.slane %v1040, 2
    %v2047 = vsel %vm1836, %v2046, %v2045
    %v2048 = vrot.slane %v1169, 1
    %v2049 = vsel %vm1839, %v2048, %v2047
    %v2050 = vsel %vm1842, %v1298, %v2049
    %v2051 = vrot.slane %v1427, 7
    %v2052 = vsel %vm1845, %v2051, %v2050
    %v2053 = vrot.slane %v1556, 6
    %v2054 = vsel %vm1848, %v2053, %v2052
    %v2055 = vrot.slane %v1685, 5
    %v2056 = vsel %vm1851, %v2055, %v2054
    %v2057 = vrot.slane %v1814, 4
    %v2058 = vsel %vm1854, %v2057, %v2056
    %2059 = vrot.lane.b32.xlu0 %v2058, 96
    %v2060 = vpop.permute.xlu0 %2059
    %2062 = vst.msk [vmem:[#allocation2 + $0x10] sm:$0xff] %vm1913, %v2060
    %v2063 = vrot.slane %v911, 4
    %v2064 = vrot.slane %v1040, 3
    %v2065 = vsel %vm1836, %v2064, %v2063
    %v2066 = vrot.slane %v1169, 2
    %v2067 = vsel %vm1839, %v2066, %v2065
    %v2068 = vrot.slane %v1298, 1
    %v2069 = vsel %vm1842, %v2068, %v2067
    %v2070 = vsel %vm1845, %v1427, %v2069
    %v2071 = vrot.slane %v1556, 7
    %v2072 = vsel %vm1848, %v2071, %v2070
    %v2073 = vrot.slane %v1685, 6
    %v2074 = vsel %vm1851, %v2073, %v2072
    %v2075 = vrot.slane %v1814, 5
    %v2076 = vsel %vm1854, %v2075, %v2074
    %2078 = vst.msk [vmem:[#allocation2 + $0x18] sm:$0xff] %vm105, %v2076
    %v2079 = vrot.slane %v911, 5
    %v2080 = vrot.slane %v1040, 4
    %v2081 = vsel %vm1836, %v2080, %v2079
    %v2082 = vrot.slane %v1169, 3
    %v2083 = vsel %vm1839, %v2082, %v2081
    %v2084 = vrot.slane %v1298, 2
    %v2085 = vsel %vm1842, %v2084, %v2083
    %v2086 = vrot.slane %v1427, 1
    %v2087 = vsel %vm1845, %v2086, %v2085
    %v2088 = vsel %vm1848, %v1556, %v2087
    %v2089 = vrot.slane %v1685, 7
    %v2090 = vsel %vm1851, %v2089, %v2088
    %v2091 = vrot.slane %v1814, 6
    %v2092 = vsel %vm1854, %v2091, %v2090
    %2093 = vrot.lane.b32.xlu0 %v2092, 32
    %v2094 = vpop.permute.xlu0 %2093
    %2096 = vst.msk [vmem:[#allocation2 + $0x18] sm:$0xff] %vm1875, %v2094
    %v2097 = vrot.slane %v911, 6
    %v2098 = vrot.slane %v1040, 5
    %v2099 = vsel %vm1836, %v2098, %v2097
    %v2100 = vrot.slane %v1169, 4
    %v2101 = vsel %vm1839, %v2100, %v2099
    %v2102 = vrot.slane %v1298, 3
    %v2103 = vsel %vm1842, %v2102, %v2101
    %v2104 = vrot.slane %v1427, 2
    %v2105 = vsel %vm1845, %v2104, %v2103
    %v2106 = vrot.slane %v1556, 1
    %v2107 = vsel %vm1848, %v2106, %v2105
    %v2108 = vsel %vm1851, %v1685, %v2107
    %v2109 = vrot.slane %v1814, 7
    %v2110 = vsel %vm1854, %v2109, %v2108
    %2111 = vrot.lane.b32.xlu0 %v2110, 64
    %v2112 = vpop.permute.xlu0 %2111
    %2114 = vst.msk [vmem:[#allocation2 + $0x18] sm:$0xff] %vm1894, %v2112
    %v2115 = vrot.slane %v911, 7
    %v2116 = vrot.slane %v1040, 6
    %v2117 = vsel %vm1836, %v2116, %v2115
    %v2118 = vrot.slane %v1169, 5
    %v2119 = vsel %vm1839, %v2118, %v2117
    %v2120 = vrot.slane %v1298, 4
    %v2121 = vsel %vm1842, %v2120, %v2119
    %v2122 = vrot.slane %v1427, 3
    %v2123 = vsel %vm1845, %v2122, %v2121
    %v2124 = vrot.slane %v1556, 2
    %v2125 = vsel %vm1848, %v2124, %v2123
    %v2126 = vrot.slane %v1685, 1
    %v2127 = vsel %vm1851, %v2126, %v2125
    %v2128 = vsel %vm1854, %v1814, %v2127
    %2129 = vrot.lane.b32.xlu0 %v2128, 96
    %v2130 = vpop.permute.xlu0 %2129
    %2132 = vst.msk [vmem:[#allocation2 + $0x18] sm:$0xff] %vm1913, %v2130
    %v2141 = vrot.slane %v1045, 7
    %v2142 = vsel %vm1836, %v2141, %v916
    %v2143 = vrot.slane %v1174, 6
    %v2144 = vsel %vm1839, %v2143, %v2142
    %v2145 = vrot.slane %v1303, 5
    %v2146 = vsel %vm1842, %v2145, %v2144
    %v2147 = vrot.slane %v1432, 4
    %v2148 = vsel %vm1845, %v2147, %v2146
    %v2149 = vrot.slane %v1561, 3
    %v2150 = vsel %vm1848, %v2149, %v2148
    %v2151 = vrot.slane %v1690, 2
    %v2152 = vsel %vm1851, %v2151, %v2150
    %v2153 = vrot.slane %v1819, 1
    %v2154 = vsel %vm1854, %v2153, %v2152
    %2156 = vst.msk [vmem:[#allocation2 + $0x20] sm:$0xff] %vm105, %v2154
    %v2157 = vrot.slane %v916, 1
    %v2158 = vsel %vm1836, %v1045, %v2157
    %v2159 = vrot.slane %v1174, 7
    %v2160 = vsel %vm1839, %v2159, %v2158
    %v2161 = vrot.slane %v1303, 6
    %v2162 = vsel %vm1842, %v2161, %v2160
    %v2163 = vrot.slane %v1432, 5
    %v2164 = vsel %vm1845, %v2163, %v2162
    %v2165 = vrot.slane %v1561, 4
    %v2166 = vsel %vm1848, %v2165, %v2164
    %v2167 = vrot.slane %v1690, 3
    %v2168 = vsel %vm1851, %v2167, %v2166
    %v2169 = vrot.slane %v1819, 2
    %v2170 = vsel %vm1854, %v2169, %v2168
    %2171 = vrot.lane.b32.xlu0 %v2170, 32
    %v2172 = vpop.permute.xlu0 %2171
    %2174 = vst.msk [vmem:[#allocation2 + $0x20] sm:$0xff] %vm1875, %v2172
    %v2175 = vrot.slane %v916, 2
    %v2176 = vrot.slane %v1045, 1
    %v2177 = vsel %vm1836, %v2176, %v2175
    %v2178 = vsel %vm1839, %v1174, %v2177
    %v2179 = vrot.slane %v1303, 7
    %v2180 = vsel %vm1842, %v2179, %v2178
    %v2181 = vrot.slane %v1432, 6
    %v2182 = vsel %vm1845, %v2181, %v2180
    %v2183 = vrot.slane %v1561, 5
    %v2184 = vsel %vm1848, %v2183, %v2182
    %v2185 = vrot.slane %v1690, 4
    %v2186 = vsel %vm1851, %v2185, %v2184
    %v2187 = vrot.slane %v1819, 3
    %v2188 = vsel %vm1854, %v2187, %v2186
    %2189 = vrot.lane.b32.xlu0 %v2188, 64
    %v2190 = vpop.permute.xlu0 %2189
    %2192 = vst.msk [vmem:[#allocation2 + $0x20] sm:$0xff] %vm1894, %v2190
    %v2193 = vrot.slane %v916, 3
    %v2194 = vrot.slane %v1045, 2
    %v2195 = vsel %vm1836, %v2194, %v2193
    %v2196 = vrot.slane %v1174, 1
    %v2197 = vsel %vm1839, %v2196, %v2195
    %v2198 = vsel %vm1842, %v1303, %v2197
    %v2199 = vrot.slane %v1432, 7
    %v2200 = vsel %vm1845, %v2199, %v2198
    %v2201 = vrot.slane %v1561, 6
    %v2202 = vsel %vm1848, %v2201, %v2200
    %v2203 = vrot.slane %v1690, 5
    %v2204 = vsel %vm1851, %v2203, %v2202
    %v2205 = vrot.slane %v1819, 4
    %v2206 = vsel %vm1854, %v2205, %v2204
    %2207 = vrot.lane.b32.xlu0 %v2206, 96
    %v2208 = vpop.permute.xlu0 %2207
    %2210 = vst.msk [vmem:[#allocation2 + $0x20] sm:$0xff] %vm1913, %v2208
    %v2211 = vrot.slane %v916, 4
    %v2212 = vrot.slane %v1045, 3
    %v2213 = vsel %vm1836, %v2212, %v2211
    %v2214 = vrot.slane %v1174, 2
    %v2215 = vsel %vm1839, %v2214, %v2213
    %v2216 = vrot.slane %v1303, 1
    %v2217 = vsel %vm1842, %v2216, %v2215
    %v2218 = vsel %vm1845, %v1432, %v2217
    %v2219 = vrot.slane %v1561, 7
    %v2220 = vsel %vm1848, %v2219, %v2218
    %v2221 = vrot.slane %v1690, 6
    %v2222 = vsel %vm1851, %v2221, %v2220
    %v2223 = vrot.slane %v1819, 5
    %v2224 = vsel %vm1854, %v2223, %v2222
    %2226 = vst.msk [vmem:[#allocation2 + $0x28] sm:$0xff] %vm105, %v2224
    %v2227 = vrot.slane %v916, 5
    %v2228 = vrot.slane %v1045, 4
    %v2229 = vsel %vm1836, %v2228, %v2227
    %v2230 = vrot.slane %v1174, 3
    %v2231 = vsel %vm1839, %v2230, %v2229
    %v2232 = vrot.slane %v1303, 2
    %v2233 = vsel %vm1842, %v2232, %v2231
    %v2234 = vrot.slane %v1432, 1
    %v2235 = vsel %vm1845, %v2234, %v2233
    %v2236 = vsel %vm1848, %v1561, %v2235
    %v2237 = vrot.slane %v1690, 7
    %v2238 = vsel %vm1851, %v2237, %v2236
    %v2239 = vrot.slane %v1819, 6
    %v2240 = vsel %vm1854, %v2239, %v2238
    %2241 = vrot.lane.b32.xlu0 %v2240, 32
    %v2242 = vpop.permute.xlu0 %2241
    %2244 = vst.msk [vmem:[#allocation2 + $0x28] sm:$0xff] %vm1875, %v2242
    %v2245 = vrot.slane %v916, 6
    %v2246 = vrot.slane %v1045, 5
    %v2247 = vsel %vm1836, %v2246, %v2245
    %v2248 = vrot.slane %v1174, 4
    %v2249 = vsel %vm1839, %v2248, %v2247
    %v2250 = vrot.slane %v1303, 3
    %v2251 = vsel %vm1842, %v2250, %v2249
    %v2252 = vrot.slane %v1432, 2
    %v2253 = vsel %vm1845, %v2252, %v2251
    %v2254 = vrot.slane %v1561, 1
    %v2255 = vsel %vm1848, %v2254, %v2253
    %v2256 = vsel %vm1851, %v1690, %v2255
    %v2257 = vrot.slane %v1819, 7
    %v2258 = vsel %vm1854, %v2257, %v2256
    %2259 = vrot.lane.b32.xlu0 %v2258, 64
    %v2260 = vpop.permute.xlu0 %2259
    %2262 = vst.msk [vmem:[#allocation2 + $0x28] sm:$0xff] %vm1894, %v2260
    %v2263 = vrot.slane %v916, 7
    %v2264 = vrot.slane %v1045, 6
    %v2265 = vsel %vm1836, %v2264, %v2263
    %v2266 = vrot.slane %v1174, 5
    %v2267 = vsel %vm1839, %v2266, %v2265
    %v2268 = vrot.slane %v1303, 4
    %v2269 = vsel %vm1842, %v2268, %v2267
    %v2270 = vrot.slane %v1432, 3
    %v2271 = vsel %vm1845, %v2270, %v2269
    %v2272 = vrot.slane %v1561, 2
    %v2273 = vsel %vm1848, %v2272, %v2271
    %v2274 = vrot.slane %v1690, 1
    %v2275 = vsel %vm1851, %v2274, %v2273
    %v2276 = vsel %vm1854, %v1819, %v2275
    %2277 = vrot.lane.b32.xlu0 %v2276, 96
    %v2278 = vpop.permute.xlu0 %2277
    %2280 = vst.msk [vmem:[#allocation2 + $0x28] sm:$0xff] %vm1913, %v2278
    %v2289 = vrot.slane %v1050, 7
    %v2290 = vsel %vm1836, %v2289, %v921
    %v2291 = vrot.slane %v1179, 6
    %v2292 = vsel %vm1839, %v2291, %v2290
    %v2293 = vrot.slane %v1308, 5
    %v2294 = vsel %vm1842, %v2293, %v2292
    %v2295 = vrot.slane %v1437, 4
    %v2296 = vsel %vm1845, %v2295, %v2294
    %v2297 = vrot.slane %v1566, 3
    %v2298 = vsel %vm1848, %v2297, %v2296
    %v2299 = vrot.slane %v1695, 2
    %v2300 = vsel %vm1851, %v2299, %v2298
    %v2301 = vrot.slane %v1824, 1
    %v2302 = vsel %vm1854, %v2301, %v2300
    %2304 = vst.msk [vmem:[#allocation2 + $0x30] sm:$0xff] %vm105, %v2302
    %v2305 = vrot.slane %v921, 1
    %v2306 = vsel %vm1836, %v1050, %v2305
    %v2307 = vrot.slane %v1179, 7
    %v2308 = vsel %vm1839, %v2307, %v2306
    %v2309 = vrot.slane %v1308, 6
    %v2310 = vsel %vm1842, %v2309, %v2308
    %v2311 = vrot.slane %v1437, 5
    %v2312 = vsel %vm1845, %v2311, %v2310
    %v2313 = vrot.slane %v1566, 4
    %v2314 = vsel %vm1848, %v2313, %v2312
    %v2315 = vrot.slane %v1695, 3
    %v2316 = vsel %vm1851, %v2315, %v2314
    %v2317 = vrot.slane %v1824, 2
    %v2318 = vsel %vm1854, %v2317, %v2316
    %2319 = vrot.lane.b32.xlu0 %v2318, 32
    %v2320 = vpop.permute.xlu0 %2319
    %2322 = vst.msk [vmem:[#allocation2 + $0x30] sm:$0xff] %vm1875, %v2320
    %v2323 = vrot.slane %v921, 2
    %v2324 = vrot.slane %v1050, 1
    %v2325 = vsel %vm1836, %v2324, %v2323
    %v2326 = vsel %vm1839, %v1179, %v2325
    %v2327 = vrot.slane %v1308, 7
    %v2328 = vsel %vm1842, %v2327, %v2326
    %v2329 = vrot.slane %v1437, 6
    %v2330 = vsel %vm1845, %v2329, %v2328
    %v2331 = vrot.slane %v1566, 5
    %v2332 = vsel %vm1848, %v2331, %v2330
    %v2333 = vrot.slane %v1695, 4
    %v2334 = vsel %vm1851, %v2333, %v2332
    %v2335 = vrot.slane %v1824, 3
    %v2336 = vsel %vm1854, %v2335, %v2334
    %2337 = vrot.lane.b32.xlu0 %v2336, 64
    %v2338 = vpop.permute.xlu0 %2337
    %2340 = vst.msk [vmem:[#allocation2 + $0x30] sm:$0xff] %vm1894, %v2338
    %v2341 = vrot.slane %v921, 3
    %v2342 = vrot.slane %v1050, 2
    %v2343 = vsel %vm1836, %v2342, %v2341
    %v2344 = vrot.slane %v1179, 1
    %v2345 = vsel %vm1839, %v2344, %v2343
    %v2346 = vsel %vm1842, %v1308, %v2345
    %v2347 = vrot.slane %v1437, 7
    %v2348 = vsel %vm1845, %v2347, %v2346
    %v2349 = vrot.slane %v1566, 6
    %v2350 = vsel %vm1848, %v2349, %v2348
    %v2351 = vrot.slane %v1695, 5
    %v2352 = vsel %vm1851, %v2351, %v2350
    %v2353 = vrot.slane %v1824, 4
    %v2354 = vsel %vm1854, %v2353, %v2352
    %2355 = vrot.lane.b32.xlu0 %v2354, 96
    %v2356 = vpop.permute.xlu0 %2355
    %2358 = vst.msk [vmem:[#allocation2 + $0x30] sm:$0xff] %vm1913, %v2356
    %v2359 = vrot.slane %v921, 4
    %v2360 = vrot.slane %v1050, 3
    %v2361 = vsel %vm1836, %v2360, %v2359
    %v2362 = vrot.slane %v1179, 2
    %v2363 = vsel %vm1839, %v2362, %v2361
    %v2364 = vrot.slane %v1308, 1
    %v2365 = vsel %vm1842, %v2364, %v2363
    %v2366 = vsel %vm1845, %v1437, %v2365
    %v2367 = vrot.slane %v1566, 7
    %v2368 = vsel %vm1848, %v2367, %v2366
    %v2369 = vrot.slane %v1695, 6
    %v2370 = vsel %vm1851, %v2369, %v2368
    %v2371 = vrot.slane %v1824, 5
    %v2372 = vsel %vm1854, %v2371, %v2370
    %2374 = vst.msk [vmem:[#allocation2 + $0x38] sm:$0xff] %vm105, %v2372
    %v2375 = vrot.slane %v921, 5
    %v2376 = vrot.slane %v1050, 4
    %v2377 = vsel %vm1836, %v2376, %v2375
    %v2378 = vrot.slane %v1179, 3
    %v2379 = vsel %vm1839, %v2378, %v2377
    %v2380 = vrot.slane %v1308, 2
    %v2381 = vsel %vm1842, %v2380, %v2379
    %v2382 = vrot.slane %v1437, 1
    %v2383 = vsel %vm1845, %v2382, %v2381
    %v2384 = vsel %vm1848, %v1566, %v2383
    %v2385 = vrot.slane %v1695, 7
    %v2386 = vsel %vm1851, %v2385, %v2384
    %v2387 = vrot.slane %v1824, 6
    %v2388 = vsel %vm1854, %v2387, %v2386
    %2389 = vrot.lane.b32.xlu0 %v2388, 32
    %v2390 = vpop.permute.xlu0 %2389
    %2392 = vst.msk [vmem:[#allocation2 + $0x38] sm:$0xff] %vm1875, %v2390
    %v2393 = vrot.slane %v921, 6
    %v2394 = vrot.slane %v1050, 5
    %v2395 = vsel %vm1836, %v2394, %v2393
    %v2396 = vrot.slane %v1179, 4
    %v2397 = vsel %vm1839, %v2396, %v2395
    %v2398 = vrot.slane %v1308, 3
    %v2399 = vsel %vm1842, %v2398, %v2397
    %v2400 = vrot.slane %v1437, 2
    %v2401 = vsel %vm1845, %v2400, %v2399
    %v2402 = vrot.slane %v1566, 1
    %v2403 = vsel %vm1848, %v2402, %v2401
    %v2404 = vsel %vm1851, %v1695, %v2403
    %v2405 = vrot.slane %v1824, 7
    %v2406 = vsel %vm1854, %v2405, %v2404
    %2407 = vrot.lane.b32.xlu0 %v2406, 64
    %v2408 = vpop.permute.xlu0 %2407
    %2410 = vst.msk [vmem:[#allocation2 + $0x38] sm:$0xff] %vm1894, %v2408
    %v2411 = vrot.slane %v921, 7
    %v2412 = vrot.slane %v1050, 6
    %v2413 = vsel %vm1836, %v2412, %v2411
    %v2414 = vrot.slane %v1179, 5
    %v2415 = vsel %vm1839, %v2414, %v2413
    %v2416 = vrot.slane %v1308, 4
    %v2417 = vsel %vm1842, %v2416, %v2415
    %v2418 = vrot.slane %v1437, 3
    %v2419 = vsel %vm1845, %v2418, %v2417
    %v2420 = vrot.slane %v1566, 2
    %v2421 = vsel %vm1848, %v2420, %v2419
    %v2422 = vrot.slane %v1695, 1
    %v2423 = vsel %vm1851, %v2422, %v2421
    %v2424 = vsel %vm1854, %v1824, %v2423
    %2425 = vrot.lane.b32.xlu0 %v2424, 96
    %v2426 = vpop.permute.xlu0 %2425
    %2428 = vst.msk [vmem:[#allocation2 + $0x38] sm:$0xff] %vm1913, %v2426
    %v2429 = vld [vmem:[#allocation2] sm:$0xff]
    %v2430 = vld [vmem:[#allocation2 + $0x8] sm:$0xff]
    %v2431 = vld [vmem:[#allocation2 + $0x10] sm:$0xff]
    %v2432 = vld [vmem:[#allocation2 + $0x18] sm:$0xff]
    %v2433 = vld [vmem:[#allocation2 + $0x20] sm:$0xff]
    %v2434 = vld [vmem:[#allocation2 + $0x28] sm:$0xff]
    %v2435 = vld [vmem:[#allocation2 + $0x30] sm:$0xff]
    %v2436 = vld [vmem:[#allocation2 + $0x38] sm:$0xff]
    %v2437 = vld [vmem:[#allocation3] sm:$0xff]
    %v2438 = vld [vmem:[#allocation3 + $0x8] sm:$0xff]
    %v2439 = vld [vmem:[#allocation3 + $0x10] sm:$0xff]
    %v2440 = vld [vmem:[#allocation3 + $0x18] sm:$0xff]
    %v2441 = vld [vmem:[#allocation3 + $0x20] sm:$0xff]
    %v2442 = vld [vmem:[#allocation3 + $0x28] sm:$0xff]
    %v2443 = vld [vmem:[#allocation3 + $0x30] sm:$0xff]
    %v2444 = vld [vmem:[#allocation3 + $0x38] sm:$0xff]
    %v2445 = vld [vmem:[#allocation3 + $0x40] sm:$0xff]
    %v2446 = vld [vmem:[#allocation3 + $0x48] sm:$0xff]
    %v2447 = vld [vmem:[#allocation3 + $0x50] sm:$0xff]
    %v2448 = vld [vmem:[#allocation3 + $0x58] sm:$0xff]
    %v2449 = vld [vmem:[#allocation3 + $0x60] sm:$0xff]
    %v2450 = vld [vmem:[#allocation3 + $0x68] sm:$0xff]
    %v2451 = vld [vmem:[#allocation3 + $0x70] sm:$0xff]
    %v2452 = vld [vmem:[#allocation3 + $0x78] sm:$0xff]
    %v2453 = vld [vmem:[#allocation3 + $0x80] sm:$0xff]
    %v2454 = vld [vmem:[#allocation3 + $0x88] sm:$0xff]
    %v2455 = vld [vmem:[#allocation3 + $0x90] sm:$0xff]
    %v2456 = vld [vmem:[#allocation3 + $0x98] sm:$0xff]
    %v2457 = vld [vmem:[#allocation3 + $0xa0] sm:$0xff]
    %v2458 = vld [vmem:[#allocation3 + $0xa8] sm:$0xff]
    %v2459 = vld [vmem:[#allocation3 + $0xb0] sm:$0xff]
    %v2460 = vld [vmem:[#allocation3 + $0xb8] sm:$0xff]
    %v2461 = vld [vmem:[#allocation3 + $0xc0] sm:$0xff]
    %v2462 = vld [vmem:[#allocation3 + $0xc8] sm:$0xff]
    %v2463 = vld [vmem:[#allocation3 + $0xd0] sm:$0xff]
    %v2464 = vld [vmem:[#allocation3 + $0xd8] sm:$0xff]
    %v2465 = vld [vmem:[#allocation3 + $0xe0] sm:$0xff]
    %v2466 = vld [vmem:[#allocation3 + $0xe8] sm:$0xff]
    %v2467 = vld [vmem:[#allocation3 + $0xf0] sm:$0xff]
    %v2468 = vld [vmem:[#allocation3 + $0xf8] sm:$0xff]
    %v2469 = vld [vmem:[#allocation3 + $0x100] sm:$0xff]
    %v2470 = vld [vmem:[#allocation3 + $0x108] sm:$0xff]
    %v2471 = vld [vmem:[#allocation3 + $0x110] sm:$0xff]
    %v2472 = vld [vmem:[#allocation3 + $0x118] sm:$0xff]
    %v2473 = vld [vmem:[#allocation3 + $0x120] sm:$0xff]
    %v2474 = vld [vmem:[#allocation3 + $0x128] sm:$0xff]
    %v2475 = vld [vmem:[#allocation3 + $0x130] sm:$0xff]
    %v2476 = vld [vmem:[#allocation3 + $0x138] sm:$0xff]
    %v2477 = vld [vmem:[#allocation3 + $0x140] sm:$0xff]
    %v2478 = vld [vmem:[#allocation3 + $0x148] sm:$0xff]
    %v2479 = vld [vmem:[#allocation3 + $0x150] sm:$0xff]
    %v2480 = vld [vmem:[#allocation3 + $0x158] sm:$0xff]
    %v2481 = vld [vmem:[#allocation3 + $0x160] sm:$0xff]
    %v2482 = vld [vmem:[#allocation3 + $0x168] sm:$0xff]
    %v2483 = vld [vmem:[#allocation3 + $0x170] sm:$0xff]
    %v2484 = vld [vmem:[#allocation3 + $0x178] sm:$0xff]
    %v2485 = vld [vmem:[#allocation3 + $0x180] sm:$0xff]
    %v2486 = vld [vmem:[#allocation3 + $0x188] sm:$0xff]
    %v2487 = vld [vmem:[#allocation3 + $0x190] sm:$0xff]
    %v2488 = vld [vmem:[#allocation3 + $0x198] sm:$0xff]
    %v2489 = vld [vmem:[#allocation3 + $0x1a0] sm:$0xff]
    %v2490 = vld [vmem:[#allocation3 + $0x1a8] sm:$0xff]
    %v2491 = vld [vmem:[#allocation3 + $0x1b0] sm:$0xff]
    %v2492 = vld [vmem:[#allocation3 + $0x1b8] sm:$0xff]
    %v2493 = vld [vmem:[#allocation3 + $0x1c0] sm:$0xff]
    %v2494 = vld [vmem:[#allocation3 + $0x1c8] sm:$0xff]
    %v2495 = vld [vmem:[#allocation3 + $0x1d0] sm:$0xff]
    %v2496 = vld [vmem:[#allocation3 + $0x1d8] sm:$0xff]
    %v2497 = vld [vmem:[#allocation3 + $0x1e0] sm:$0xff]
    %v2498 = vld [vmem:[#allocation3 + $0x1e8] sm:$0xff]
    %v2499 = vld [vmem:[#allocation3 + $0x1f0] sm:$0xff]
    %v2500 = vld [vmem:[#allocation3 + $0x1f8] sm:$0xff]
    %v2501 = vld [vmem:[#allocation3 + $0x200] sm:$0xff]
    %v2502 = vld [vmem:[#allocation3 + $0x208] sm:$0xff]
    %v2503 = vld [vmem:[#allocation3 + $0x210] sm:$0xff]
    %v2504 = vld [vmem:[#allocation3 + $0x218] sm:$0xff]
    %v2505 = vld [vmem:[#allocation3 + $0x220] sm:$0xff]
    %v2506 = vld [vmem:[#allocation3 + $0x228] sm:$0xff]
    %v2507 = vld [vmem:[#allocation3 + $0x230] sm:$0xff]
    %v2508 = vld [vmem:[#allocation3 + $0x238] sm:$0xff]
    %v2509 = vld [vmem:[#allocation3 + $0x240] sm:$0xff]
    %v2510 = vld [vmem:[#allocation3 + $0x248] sm:$0xff]
    %v2511 = vld [vmem:[#allocation3 + $0x250] sm:$0xff]
    %v2512 = vld [vmem:[#allocation3 + $0x258] sm:$0xff]
    %v2513 = vld [vmem:[#allocation3 + $0x260] sm:$0xff]
    %v2514 = vld [vmem:[#allocation3 + $0x268] sm:$0xff]
    %v2515 = vld [vmem:[#allocation3 + $0x270] sm:$0xff]
    %v2516 = vld [vmem:[#allocation3 + $0x278] sm:$0xff]
    %v2517 = vld [vmem:[#allocation3 + $0x280] sm:$0xff]
    %v2518 = vld [vmem:[#allocation3 + $0x288] sm:$0xff]
    %v2519 = vld [vmem:[#allocation3 + $0x290] sm:$0xff]
    %v2520 = vld [vmem:[#allocation3 + $0x298] sm:$0xff]
    %v2521 = vld [vmem:[#allocation3 + $0x2a0] sm:$0xff]
    %v2522 = vld [vmem:[#allocation3 + $0x2a8] sm:$0xff]
    %v2523 = vld [vmem:[#allocation3 + $0x2b0] sm:$0xff]
    %v2524 = vld [vmem:[#allocation3 + $0x2b8] sm:$0xff]
    %v2525 = vld [vmem:[#allocation3 + $0x2c0] sm:$0xff]
    %v2526 = vld [vmem:[#allocation3 + $0x2c8] sm:$0xff]
    %v2527 = vld [vmem:[#allocation3 + $0x2d0] sm:$0xff]
    %v2528 = vld [vmem:[#allocation3 + $0x2d8] sm:$0xff]
    %v2529 = vld [vmem:[#allocation3 + $0x2e0] sm:$0xff]
    %v2530 = vld [vmem:[#allocation3 + $0x2e8] sm:$0xff]
    %v2531 = vld [vmem:[#allocation3 + $0x2f0] sm:$0xff]
    %v2532 = vld [vmem:[#allocation3 + $0x2f8] sm:$0xff]
    %v2533 = vld [vmem:[#allocation3 + $0x300] sm:$0xff]
    %v2534 = vld [vmem:[#allocation3 + $0x308] sm:$0xff]
    %v2535 = vld [vmem:[#allocation3 + $0x310] sm:$0xff]
    %v2536 = vld [vmem:[#allocation3 + $0x318] sm:$0xff]
    %v2537 = vld [vmem:[#allocation3 + $0x320] sm:$0xff]
    %v2538 = vld [vmem:[#allocation3 + $0x328] sm:$0xff]
    %v2539 = vld [vmem:[#allocation3 + $0x330] sm:$0xff]
    %v2540 = vld [vmem:[#allocation3 + $0x338] sm:$0xff]
    %v2541 = vld [vmem:[#allocation3 + $0x340] sm:$0xff]
    %v2542 = vld [vmem:[#allocation3 + $0x348] sm:$0xff]
    %v2543 = vld [vmem:[#allocation3 + $0x350] sm:$0xff]
    %v2544 = vld [vmem:[#allocation3 + $0x358] sm:$0xff]
    %v2545 = vld [vmem:[#allocation3 + $0x360] sm:$0xff]
    %v2546 = vld [vmem:[#allocation3 + $0x368] sm:$0xff]
    %v2547 = vld [vmem:[#allocation3 + $0x370] sm:$0xff]
    %v2548 = vld [vmem:[#allocation3 + $0x378] sm:$0xff]
    %v2549 = vld [vmem:[#allocation3 + $0x380] sm:$0xff]
    %v2550 = vld [vmem:[#allocation3 + $0x388] sm:$0xff]
    %v2551 = vld [vmem:[#allocation3 + $0x390] sm:$0xff]
    %v2552 = vld [vmem:[#allocation3 + $0x398] sm:$0xff]
    %v2553 = vld [vmem:[#allocation3 + $0x3a0] sm:$0xff]
    %v2554 = vld [vmem:[#allocation3 + $0x3a8] sm:$0xff]
    %v2555 = vld [vmem:[#allocation3 + $0x3b0] sm:$0xff]
    %v2556 = vld [vmem:[#allocation3 + $0x3b8] sm:$0xff]
    %v2557 = vld [vmem:[#allocation3 + $0x3c0] sm:$0xff]
    %v2558 = vld [vmem:[#allocation3 + $0x3c8] sm:$0xff]
    %v2559 = vld [vmem:[#allocation3 + $0x3d0] sm:$0xff]
    %v2560 = vld [vmem:[#allocation3 + $0x3d8] sm:$0xff]
    %v2561 = vld [vmem:[#allocation3 + $0x3e0] sm:$0xff]
    %v2562 = vld [vmem:[#allocation3 + $0x3e8] sm:$0xff]
    %v2563 = vld [vmem:[#allocation3 + $0x3f0] sm:$0xff]
    %v2564 = vld [vmem:[#allocation3 + $0x3f8] sm:$0xff]
    %2565 = vmatprep.subr.mxu0 0.0
    %2566 = vmatpush1.msra.mxu0 %v2437
    %2567 = vmatprep.subr.mxu0 0.0
    %2568 = vmatpush1.msra.mxu0 %v2438
    %2569 = vmatprep.subr.mxu0 0.0
    %2570 = vmatpush1.msra.mxu0 %v2439
    %2571 = vmatprep.subr.mxu0 0.0
    %2572 = vmatpush1.msra.mxu0 %v2440
    %2573 = vmatprep.subr.mxu0 0.0
    %2574 = vmatpush1.msra.mxu0 %v2441
    %2575 = vmatprep.subr.mxu0 0.0
    %2576 = vmatpush1.msra.mxu0 %v2442
    %2577 = vmatprep.subr.mxu0 0.0
    %2578 = vmatpush1.msra.mxu0 %v2443
    %2579 = vmatprep.subr.mxu0 0.0
    %2580 = vmatpush1.msra.mxu0 %v2444
    %2581 = vmatprep.subr.mxu0 0.0
    %2582 = vmatpush1.msra.mxu0 %v2445
    %2583 = vmatprep.subr.mxu0 0.0
    %2584 = vmatpush1.msra.mxu0 %v2446
    %2585 = vmatprep.subr.mxu0 0.0
    %2586 = vmatpush1.msra.mxu0 %v2447
    %2587 = vmatprep.subr.mxu0 0.0
    %2588 = vmatpush1.msra.mxu0 %v2448
    %2589 = vmatprep.subr.mxu0 0.0
    %2590 = vmatpush1.msra.mxu0 %v2449
    %2591 = vmatprep.subr.mxu0 0.0
    %2592 = vmatpush1.msra.mxu0 %v2450
    %2593 = vmatprep.subr.mxu0 0.0
    %2594 = vmatpush1.msra.mxu0 %v2451
    %2595 = vmatprep.subr.mxu0 0.0
    %2596 = vmatpush1.msra.mxu0 %v2452
    %2597 = vmatprep.subr.mxu0 0.0
    %2598 = vmatpush1.msra.mxu0 %v2453
    %2599 = vmatprep.subr.mxu0 0.0
    %2600 = vmatpush1.msra.mxu0 %v2454
    %2601 = vmatprep.subr.mxu0 0.0
    %2602 = vmatpush1.msra.mxu0 %v2455
    %2603 = vmatprep.subr.mxu0 0.0
    %2604 = vmatpush1.msra.mxu0 %v2456
    %2605 = vmatprep.subr.mxu0 0.0
    %2606 = vmatpush1.msra.mxu0 %v2457
    %2607 = vmatprep.subr.mxu0 0.0
    %2608 = vmatpush1.msra.mxu0 %v2458
    %2609 = vmatprep.subr.mxu0 0.0
    %2610 = vmatpush1.msra.mxu0 %v2459
    %2611 = vmatprep.subr.mxu0 0.0
    %2612 = vmatpush1.msra.mxu0 %v2460
    %2613 = vmatprep.subr.mxu0 0.0
    %2614 = vmatpush1.msra.mxu0 %v2461
    %2615 = vmatprep.subr.mxu0 0.0
    %2616 = vmatpush1.msra.mxu0 %v2462
    %2617 = vmatprep.subr.mxu0 0.0
    %2618 = vmatpush1.msra.mxu0 %v2463
    %2619 = vmatprep.subr.mxu0 0.0
    %2620 = vmatpush1.msra.mxu0 %v2464
    %2621 = vmatprep.subr.mxu0 0.0
    %2622 = vmatpush1.msra.mxu0 %v2465
    %2623 = vmatprep.subr.mxu0 0.0
    %2624 = vmatpush1.msra.mxu0 %v2466
    %2625 = vmatprep.subr.mxu0 0.0
    %2626 = vmatpush1.msra.mxu0 %v2467
    %2627 = vmatprep.subr.mxu0 0.0
    %2628 = vmatpush1.msra.mxu0 %v2468
    %2629 = vmatprep.mubr.f32.mxu0 %v2430
    %2630 = vmatmul.mubr.f32.gmra.mrb[0].mxu0 %v2429
    %v2631 = vpop.f32.mrb[0].mxu0
    %v2632 = vadd.f32 0.0, %v2631
    %v2633 = vpop.f32.mrb[0].mxu0
    %2634 = vdwg.mxu0
    %2635 = vmatprep.subr.mxu0 0.0
    %2636 = vmatpush1.msra.mxu0 %v2469
    %2637 = vmatprep.subr.mxu0 0.0
    %2638 = vmatpush1.msra.mxu0 %v2470
    %2639 = vmatprep.subr.mxu0 0.0
    %2640 = vmatpush1.msra.mxu0 %v2471
    %2641 = vmatprep.subr.mxu0 0.0
    %2642 = vmatpush1.msra.mxu0 %v2472
    %2643 = vmatprep.subr.mxu0 0.0
    %2644 = vmatpush1.msra.mxu0 %v2473
    %2645 = vmatprep.subr.mxu0 0.0
    %2646 = vmatpush1.msra.mxu0 %v2474
    %2647 = vmatprep.subr.mxu0 0.0
    %2648 = vmatpush1.msra.mxu0 %v2475
    %2649 = vmatprep.subr.mxu0 0.0
    %2650 = vmatpush1.msra.mxu0 %v2476
    %2651 = vmatprep.subr.mxu0 0.0
    %2652 = vmatpush1.msra.mxu0 %v2477
    %2653 = vmatprep.subr.mxu0 0.0
    %2654 = vmatpush1.msra.mxu0 %v2478
    %2655 = vmatprep.subr.mxu0 0.0
    %2656 = vmatpush1.msra.mxu0 %v2479
    %2657 = vmatprep.subr.mxu0 0.0
    %2658 = vmatpush1.msra.mxu0 %v2480
    %2659 = vmatprep.subr.mxu0 0.0
    %2660 = vmatpush1.msra.mxu0 %v2481
    %2661 = vmatprep.subr.mxu0 0.0
    %2662 = vmatpush1.msra.mxu0 %v2482
    %2663 = vmatprep.subr.mxu0 0.0
    %2664 = vmatpush1.msra.mxu0 %v2483
    %2665 = vmatprep.subr.mxu0 0.0
    %2666 = vmatpush1.msra.mxu0 %v2484
    %2667 = vmatprep.subr.mxu0 0.0
    %2668 = vmatpush1.msra.mxu0 %v2485
    %2669 = vmatprep.subr.mxu0 0.0
    %2670 = vmatpush1.msra.mxu0 %v2486
    %2671 = vmatprep.subr.mxu0 0.0
    %2672 = vmatpush1.msra.mxu0 %v2487
    %2673 = vmatprep.subr.mxu0 0.0
    %2674 = vmatpush1.msra.mxu0 %v2488
    %2675 = vmatprep.subr.mxu0 0.0
    %2676 = vmatpush1.msra.mxu0 %v2489
    %2677 = vmatprep.subr.mxu0 0.0
    %2678 = vmatpush1.msra.mxu0 %v2490
    %2679 = vmatprep.subr.mxu0 0.0
    %2680 = vmatpush1.msra.mxu0 %v2491
    %2681 = vmatprep.subr.mxu0 0.0
    %2682 = vmatpush1.msra.mxu0 %v2492
    %2683 = vmatprep.subr.mxu0 0.0
    %2684 = vmatpush1.msra.mxu0 %v2493
    %2685 = vmatprep.subr.mxu0 0.0
    %2686 = vmatpush1.msra.mxu0 %v2494
    %2687 = vmatprep.subr.mxu0 0.0
    %2688 = vmatpush1.msra.mxu0 %v2495
    %2689 = vmatprep.subr.mxu0 0.0
    %2690 = vmatpush1.msra.mxu0 %v2496
    %2691 = vmatprep.subr.mxu0 0.0
    %2692 = vmatpush1.msra.mxu0 %v2497
    %2693 = vmatprep.subr.mxu0 0.0
    %2694 = vmatpush1.msra.mxu0 %v2498
    %2695 = vmatprep.subr.mxu0 0.0
    %2696 = vmatpush1.msra.mxu0 %v2499
    %2697 = vmatprep.subr.mxu0 0.0
    %2698 = vmatpush1.msra.mxu0 %v2500
    %2699 = vmatprep.mubr.f32.mxu0 %v2432
    %2700 = vmatmul.mubr.f32.gmra.mrb[0].mxu0 %v2431
    %v2701 = vpop.f32.mrb[0].mxu0
    %v2702 = vadd.f32 %v2632, %v2701
    %v2703 = vpop.f32.mrb[0].mxu0
    %2704 = vdwg.mxu0
    %2705 = vmatprep.subr.mxu0 0.0
    %2706 = vmatpush1.msra.mxu0 %v2501
    %2707 = vmatprep.subr.mxu0 0.0
    %2708 = vmatpush1.msra.mxu0 %v2502
    %2709 = vmatprep.subr.mxu0 0.0
    %2710 = vmatpush1.msra.mxu0 %v2503
    %2711 = vmatprep.subr.mxu0 0.0
    %2712 = vmatpush1.msra.mxu0 %v2504
    %2713 = vmatprep.subr.mxu0 0.0
    %2714 = vmatpush1.msra.mxu0 %v2505
    %2715 = vmatprep.subr.mxu0 0.0
    %2716 = vmatpush1.msra.mxu0 %v2506
    %2717 = vmatprep.subr.mxu0 0.0
    %2718 = vmatpush1.msra.mxu0 %v2507
    %2719 = vmatprep.subr.mxu0 0.0
    %2720 = vmatpush1.msra.mxu0 %v2508
    %2721 = vmatprep.subr.mxu0 0.0
    %2722 = vmatpush1.msra.mxu0 %v2509
    %2723 = vmatprep.subr.mxu0 0.0
    %2724 = vmatpush1.msra.mxu0 %v2510
    %2725 = vmatprep.subr.mxu0 0.0
    %2726 = vmatpush1.msra.mxu0 %v2511
    %2727 = vmatprep.subr.mxu0 0.0
    %2728 = vmatpush1.msra.mxu0 %v2512
    %2729 = vmatprep.subr.mxu0 0.0
    %2730 = vmatpush1.msra.mxu0 %v2513
    %2731 = vmatprep.subr.mxu0 0.0
    %2732 = vmatpush1.msra.mxu0 %v2514
    %2733 = vmatprep.subr.mxu0 0.0
    %2734 = vmatpush1.msra.mxu0 %v2515
    %2735 = vmatprep.subr.mxu0 0.0
    %2736 = vmatpush1.msra.mxu0 %v2516
    %2737 = vmatprep.subr.mxu0 0.0
    %2738 = vmatpush1.msra.mxu0 %v2517
    %2739 = vmatprep.subr.mxu0 0.0
    %2740 = vmatpush1.msra.mxu0 %v2518
    %2741 = vmatprep.subr.mxu0 0.0
    %2742 = vmatpush1.msra.mxu0 %v2519
    %2743 = vmatprep.subr.mxu0 0.0
    %2744 = vmatpush1.msra.mxu0 %v2520
    %2745 = vmatprep.subr.mxu0 0.0
    %2746 = vmatpush1.msra.mxu0 %v2521
    %2747 = vmatprep.subr.mxu0 0.0
    %2748 = vmatpush1.msra.mxu0 %v2522
    %2749 = vmatprep.subr.mxu0 0.0
    %2750 = vmatpush1.msra.mxu0 %v2523
    %2751 = vmatprep.subr.mxu0 0.0
    %2752 = vmatpush1.msra.mxu0 %v2524
    %2753 = vmatprep.subr.mxu0 0.0
    %2754 = vmatpush1.msra.mxu0 %v2525
    %2755 = vmatprep.subr.mxu0 0.0
    %2756 = vmatpush1.msra.mxu0 %v2526
    %2757 = vmatprep.subr.mxu0 0.0
    %2758 = vmatpush1.msra.mxu0 %v2527
    %2759 = vmatprep.subr.mxu0 0.0
    %2760 = vmatpush1.msra.mxu0 %v2528
    %2761 = vmatprep.subr.mxu0 0.0
    %2762 = vmatpush1.msra.mxu0 %v2529
    %2763 = vmatprep.subr.mxu0 0.0
    %2764 = vmatpush1.msra.mxu0 %v2530
    %2765 = vmatprep.subr.mxu0 0.0
    %2766 = vmatpush1.msra.mxu0 %v2531
    %2767 = vmatprep.subr.mxu0 0.0
    %2768 = vmatpush1.msra.mxu0 %v2532
    %2769 = vmatprep.mubr.f32.mxu0 %v2434
    %2770 = vmatmul.mubr.f32.gmra.mrb[0].mxu0 %v2433
    %v2771 = vpop.f32.mrb[0].mxu0
    %v2772 = vadd.f32 %v2702, %v2771
    %v2773 = vpop.f32.mrb[0].mxu0
    %2774 = vdwg.mxu0
    %2775 = vmatprep.subr.mxu0 0.0
    %2776 = vmatpush1.msra.mxu0 %v2533
    %2777 = vmatprep.subr.mxu0 0.0
    %2778 = vmatpush1.msra.mxu0 %v2534
    %2779 = vmatprep.subr.mxu0 0.0
    %2780 = vmatpush1.msra.mxu0 %v2535
    %2781 = vmatprep.subr.mxu0 0.0
    %2782 = vmatpush1.msra.mxu0 %v2536
    %2783 = vmatprep.subr.mxu0 0.0
    %2784 = vmatpush1.msra.mxu0 %v2537
    %2785 = vmatprep.subr.mxu0 0.0
    %2786 = vmatpush1.msra.mxu0 %v2538
    %2787 = vmatprep.subr.mxu0 0.0
    %2788 = vmatpush1.msra.mxu0 %v2539
    %2789 = vmatprep.subr.mxu0 0.0
    %2790 = vmatpush1.msra.mxu0 %v2540
    %2791 = vmatprep.subr.mxu0 0.0
    %2792 = vmatpush1.msra.mxu0 %v2541
    %2793 = vmatprep.subr.mxu0 0.0
    %2794 = vmatpush1.msra.mxu0 %v2542
    %2795 = vmatprep.subr.mxu0 0.0
    %2796 = vmatpush1.msra.mxu0 %v2543
    %2797 = vmatprep.subr.mxu0 0.0
    %2798 = vmatpush1.msra.mxu0 %v2544
    %2799 = vmatprep.subr.mxu0 0.0
    %2800 = vmatpush1.msra.mxu0 %v2545
    %2801 = vmatprep.subr.mxu0 0.0
    %2802 = vmatpush1.msra.mxu0 %v2546
    %2803 = vmatprep.subr.mxu0 0.0
    %2804 = vmatpush1.msra.mxu0 %v2547
    %2805 = vmatprep.subr.mxu0 0.0
    %2806 = vmatpush1.msra.mxu0 %v2548
    %2807 = vmatprep.subr.mxu0 0.0
    %2808 = vmatpush1.msra.mxu0 %v2549
    %2809 = vmatprep.subr.mxu0 0.0
    %2810 = vmatpush1.msra.mxu0 %v2550
    %2811 = vmatprep.subr.mxu0 0.0
    %2812 = vmatpush1.msra.mxu0 %v2551
    %2813 = vmatprep.subr.mxu0 0.0
    %2814 = vmatpush1.msra.mxu0 %v2552
    %2815 = vmatprep.subr.mxu0 0.0
    %2816 = vmatpush1.msra.mxu0 %v2553
    %2817 = vmatprep.subr.mxu0 0.0
    %2818 = vmatpush1.msra.mxu0 %v2554
    %2819 = vmatprep.subr.mxu0 0.0
    %2820 = vmatpush1.msra.mxu0 %v2555
    %2821 = vmatprep.subr.mxu0 0.0
    %2822 = vmatpush1.msra.mxu0 %v2556
    %2823 = vmatprep.subr.mxu0 0.0
    %2824 = vmatpush1.msra.mxu0 %v2557
    %2825 = vmatprep.subr.mxu0 0.0
    %2826 = vmatpush1.msra.mxu0 %v2558
    %2827 = vmatprep.subr.mxu0 0.0
    %2828 = vmatpush1.msra.mxu0 %v2559
    %2829 = vmatprep.subr.mxu0 0.0
    %2830 = vmatpush1.msra.mxu0 %v2560
    %2831 = vmatprep.subr.mxu0 0.0
    %2832 = vmatpush1.msra.mxu0 %v2561
    %2833 = vmatprep.subr.mxu0 0.0
    %2834 = vmatpush1.msra.mxu0 %v2562
    %2835 = vmatprep.subr.mxu0 0.0
    %2836 = vmatpush1.msra.mxu0 %v2563
    %2837 = vmatprep.subr.mxu0 0.0
    %2838 = vmatpush1.msra.mxu0 %v2564
    %2839 = vmatprep.mubr.f32.mxu0 %v2436
    %2840 = vmatmul.mubr.f32.gmra.mrb[0].mxu0 %v2435
    %v2841 = vpop.f32.mrb[0].mxu0
    %v2842 = vadd.f32 %v2772, %v2841
    %v2843 = vpop.f32.mrb[0].mxu0
    %2844 = vdwg.mxu0
    %2845 = vst [vmem:[#allocation11] sm:$0xff] %v2842
    // Predicated region
    $region34: #{tpu_custom_call.1} parent=1 // pred_check
      _
    $region35: #{tpu_custom_call.1} parent=1 // pred_check_branch
      %2847 = sbr.rel (0) target = $region37
    $region36: #{tpu_custom_call.1} parent=1 // pred_region
      %s2849 = ssub.s32 128, 128
      %2850 = vsyncadd [#allocation5], %s2849
      %s2852 = sshll.u32 [#allocation11], 4
      %s2853 = int_to_ptr.vmem [resolvable:$true] %s2852
      %2855 = dma.vmem_to_hbm [thread:$0]  %s2853, 128, %s4, [#allocation5]
    $region37: #{tpu_custom_call.1} parent=1 // pred_fallthru
      _
    // Predicated region
    $region38: #{tpu_custom_call.1} parent=1 // pred_check
      _
    $region39: #{tpu_custom_call.1} parent=1 // pred_check_branch
      %2857 = sbr.rel (0) target = $region41
    $region40: #{tpu_custom_call.1} parent=1 // pred_region
      %2858 = dma.done [#allocation5], 128
    $region41: #{tpu_custom_call.1} parent=1 // pred_fallthru
      _
    %2859 = vsyncpa [#allocation4], 1
    %2860 = vsyncpa [#allocation7], 1
    %2861 = vsyncpa [#allocation10], 1
    %2862 = vsyncpa [#allocation5], 1

</llo_original>
